<compile_context>
chip_gen: v7x
topology: tpu7x:2x2x1
jax: 0.10.0
libtpu: 0.0.40
codegen_flags: <defaults>
</compile_context>

<pallas_src>
import functools

import jax
import jax.numpy as jnp
from jax.experimental import pallas as pl
from jax.experimental.pallas import tpu as pltpu


# ---------------------------------------------------------------------------
# Fused encoder kernel: conv3x3+ReLU -> conv3x3+ReLU -> mean pool -> fc_c
# One grid step per batch image; all weights stay resident in VMEM.
#
# Layout (channel-major): the zero-padded (H+2, Wp) spatial grid is flattened
# row-major to NP flat positions kept on the lane axis, channels on sublanes.
# A 3x3 tap (dy, dx) for every interior output position is the contiguous
# lane-slice of length NI = H*Wp starting at dy*Wp+dx, so im2col is formed in
# VMEM by copying 9 shifted slices into one (9*C, NI) operand and issuing ONE
# matmul per conv.  Flat positions on the padding ring are zeroed with a
# precomputed mask so the next conv / pooling see proper zero padding.
# ---------------------------------------------------------------------------
def _encoder_kernel(img_ref, mask_ref, w1_ref, b1_ref, w2_ref, b2_ref,
                    wc_ref, bc_ref, c_local_ref, c_global_ref,
                    h1_ref, cols1_ref, cols2_ref, *, H, W, Wp, NI, MARGIN):
    f32, bf16 = jnp.float32, jnp.bfloat16
    Cin = img_ref.shape[0]
    F1 = w1_ref.shape[0]
    NPs = h1_ref.shape[1]

    m_int = mask_ref[:, Wp + 1:Wp + 1 + NI]                       # (1, NI)

    # ---- conv1: single im2col matmul ----------------------------------------
    for t in range(9):
        s = (t // 3) * Wp + (t % 3)                               # static
        cols1_ref[t * Cin:(t + 1) * Cin, :] = img_ref[:, s:s + NI]
    h1 = jnp.dot(w1_ref[...], cols1_ref[...], preferred_element_type=f32)
    h1 = jnp.maximum(h1 + b1_ref[...], 0.0) * m_int               # (F1, NI)

    # Padded-flat conv1 activations with a lane-aligned margin: zero only the
    # ring margins, store the interior lane-aligned at MARGIN.
    h1_ref[:, 0:MARGIN] = jnp.zeros((F1, MARGIN), bf16)
    h1_ref[:, MARGIN + NI:NPs] = jnp.zeros((F1, NPs - MARGIN - NI), bf16)
    h1_ref[:, MARGIN:MARGIN + NI] = h1.astype(bf16)

    # ---- conv2: single im2col matmul ----------------------------------------
    for t in range(9):
        s = MARGIN + (t // 3 - 1) * Wp + (t % 3 - 1)              # static
        cols2_ref[t * F1:(t + 1) * F1, :] = h1_ref[:, s:s + NI]
    h2 = jnp.dot(w2_ref[...], cols2_ref[...], preferred_element_type=f32)
    h2 = jnp.maximum(h2 + b2_ref[...], 0.0) * m_int               # (F2, NI)
    c_local_ref[...] = h2.astype(c_local_ref.dtype)               # (F2, NI)

    # ---- global mean pool + fc_c -> c_global --------------------------------
    pooled = jnp.sum(h2, axis=1, keepdims=True) * (1.0 / (H * W))  # (F2, 1)
    cg = jnp.dot(wc_ref[...], pooled.astype(bf16), preferred_element_type=f32)
    c_global_ref[...] = cg + bc_ref[...]


def encoder_pallas(img_flat, mask, p, *, H, W, Wp, NI):
    B, Cin, NP = img_flat.shape
    F1 = p["conv1_w"].shape[0]
    F2 = p["conv2_w"].shape[0]
    c_dim = p["fc_c_w"].shape[0]
    MARGIN = ((Wp + 1 + 127) // 128) * 128
    NPs = MARGIN + NI + MARGIN

    enc_flops = int(2 * B * NI * (9 * Cin * F1 + 9 * F1 * F2)
                    + 2 * B * F2 * c_dim)
    enc_bytes = int(B * NP * Cin * 2 + NP * 4 + B * NI * F2 * 2
                    + B * c_dim * 4 + F1 * 9 * Cin * 2 + F2 * 9 * F1 * 2
                    + c_dim * F2 * 2)

    return pl.pallas_call(
        functools.partial(_encoder_kernel, H=H, W=W, Wp=Wp, NI=NI,
                          MARGIN=MARGIN),
        out_shape=(jax.ShapeDtypeStruct((B, F2, NI), jnp.bfloat16),
                   jax.ShapeDtypeStruct((B, c_dim, 1), jnp.float32)),
        grid=(B,),
        in_specs=[
            pl.BlockSpec((None, Cin, NP), lambda b: (b, 0, 0)),   # image (flat)
            pl.BlockSpec((1, NP), lambda b: (0, 0)),              # interior mask
            pl.BlockSpec((F1, 9 * Cin), lambda b: (0, 0)),        # conv1 W (im2col)
            pl.BlockSpec((F1, 1), lambda b: (0, 0)),
            pl.BlockSpec((F2, 9 * F1), lambda b: (0, 0)),         # conv2 W (im2col)
            pl.BlockSpec((F2, 1), lambda b: (0, 0)),
            pl.BlockSpec((c_dim, F2), lambda b: (0, 0)),          # fc_c
            pl.BlockSpec((c_dim, 1), lambda b: (0, 0)),
        ],
        out_specs=(
            pl.BlockSpec((None, F2, NI), lambda b: (b, 0, 0)),    # c_local (F2,NI)
            pl.BlockSpec((None, c_dim, 1), lambda b: (b, 0, 0)),  # c_global
        ),
        scratch_shapes=[pltpu.VMEM((F1, NPs), jnp.bfloat16),
                        pltpu.VMEM((9 * Cin, NI), jnp.bfloat16),
                        pltpu.VMEM((9 * F1, NI), jnp.bfloat16)],
        compiler_params=pltpu.CompilerParams(
            dimension_semantics=("parallel",),
            vmem_limit_bytes=48 * 1024 * 1024),
        cost_estimate=pl.CostEstimate(flops=enc_flops, transcendentals=0,
                                      bytes_accessed=enc_bytes),
    )(img_flat, mask, p["conv1_w"], p["conv1_b"], p["conv2_w"], p["conv2_b"],
      p["fc_c_w"], p["fc_c_b"])


# ---------------------------------------------------------------------------
# Fused decoder kernel: bilinear sampling of c_local (one-hot weight tile
# built in-kernel from compact corner data, sampled via one MXU dot) +
# 3-layer conditional MLP + sigmoid.  Points live on the lane axis, so the
# output is a lane-dense (1, TT) row; the input-feature concat is implicit
# (split-weight matmuls), and camera/c_global are folded into the bias.
# ---------------------------------------------------------------------------
def _decoder_kernel(pts_ref, idx_ref, wgt_ref, cl_ref, w1p_ref, w1cl_ref,
                    b1_ref, w2_ref, b2_ref, w3_ref, b3_ref, o_ref):
    f32, bf16 = jnp.float32, jnp.bfloat16
    NI = cl_ref.shape[1]
    TT = pts_ref.shape[1]

    # Build the (NI, TT) 4-tap bilinear weight tile in VMEM (VPU compares),
    # then sample c_local on the MXU: (F2, NI) @ (NI, TT) -> (F2, TT).
    rows = jax.lax.broadcasted_iota(jnp.int32, (NI, TT), 0)
    tile = jnp.zeros((NI, TT), f32)
    for c in range(4):
        tile = tile + jnp.where(rows == idx_ref[c:c + 1, :],
                                wgt_ref[c:c + 1, :], 0.0)
    cl_s = jnp.dot(cl_ref[...], tile.astype(bf16), preferred_element_type=f32)

    # Layer 1: implicit concat via split-weight matmuls; camera-origin and
    # c_global terms already folded into the per-batch bias b1_ref.
    h = jnp.dot(w1cl_ref[...], cl_s.astype(bf16), preferred_element_type=f32)
    h = h + jnp.dot(w1p_ref[...], pts_ref[...], preferred_element_type=f32)
    h = jnp.maximum(h + b1_ref[...], 0.0)
    h = jnp.dot(w2_ref[...], h.astype(bf16), preferred_element_type=f32)
    h = jnp.maximum(h + b2_ref[...], 0.0)
    logits = jnp.dot(w3_ref[...], h.astype(bf16), preferred_element_type=f32)
    logits = logits + b3_ref[...]
    # dist.Bernoulli(logits=logits) -> represented by its probabilities.
    o_ref[...] = jax.nn.sigmoid(logits)


def decoder_pallas(pts5, idx, wgt, c_local, b1p, p, *, TT):
    B, _, T = pts5.shape
    F2, NI = c_local.shape[1], c_local.shape[2]
    Hd = p["dec_w2"].shape[0]
    nt = T // TT
    w1p5 = jnp.concatenate([p["dec_w1_xy"], p["dec_w1_ray"]], axis=1)  # (Hd,5)

    d_in = 5 + F2
    dec_flops = int(2 * B * T * (NI * F2 + d_in * Hd + Hd * Hd + Hd))
    dec_bytes = int(B * T * (5 * 2 + 4 * 4 + 4 * 4 + 4)
                    + B * nt * F2 * NI * 2 + B * Hd * 4
                    + Hd * (d_in + F2 + Hd + 1) * 2)

    return pl.pallas_call(
        _decoder_kernel,
        out_shape=jax.ShapeDtypeStruct((B, 1, T), jnp.float32),
        grid=(B, nt),
        in_specs=[
            pl.BlockSpec((None, 5, TT), lambda b, j: (b, 0, j)),      # xy + ray
            pl.BlockSpec((None, 4, TT), lambda b, j: (b, 0, j)),      # corner idx
            pl.BlockSpec((None, 4, TT), lambda b, j: (b, 0, j)),      # corner wgt
            pl.BlockSpec((None, F2, NI), lambda b, j: (b, 0, 0)),     # c_local
            pl.BlockSpec((Hd, 5), lambda b, j: (0, 0)),               # W1[xy,ray]
            pl.BlockSpec((Hd, F2), lambda b, j: (0, 0)),              # W1[c_local]
            pl.BlockSpec((None, Hd, 1), lambda b, j: (b, 0, 0)),      # fused bias
            pl.BlockSpec((Hd, Hd), lambda b, j: (0, 0)),              # W2
            pl.BlockSpec((Hd, 1), lambda b, j: (0, 0)),               # b2
            pl.BlockSpec((1, Hd), lambda b, j: (0, 0)),               # W3
            pl.BlockSpec((1, 1), lambda b, j: (0, 0)),                # b3
        ],
        out_specs=pl.BlockSpec((None, 1, TT), lambda b, j: (b, 0, j)),
        compiler_params=pltpu.CompilerParams(
            dimension_semantics=("parallel", "parallel"),
            vmem_limit_bytes=48 * 1024 * 1024),
        cost_estimate=pl.CostEstimate(flops=dec_flops, transcendentals=B * T,
                                      bytes_accessed=dec_bytes),
    )(pts5, idx, wgt, c_local, w1p5, p["dec_w1_cl"], b1p,
      p["dec_w2"], p["dec_b2"], p["dec_w3"], p["dec_b3"])


# ---------------------------------------------------------------------------
# Glue in plain JAX (all tiny, O(B*T) / O(weights))
# ---------------------------------------------------------------------------
def bilinear_corners(points_xy, H, W, Wp):
    """Compact 4-tap bilinear sampling data (align_corners=True convention).

    c_local column index for pixel (py, px) is Wp*py + px (Wp = padded row
    stride used by the encoder's flat layout).
    """
    # TODO(synk): PyTorch F.grid_sample defaults to align_corners=False; match
    # the reference decoder's convention if it differs.
    x = (points_xy[..., 0] + 1.0) * 0.5 * (W - 1)
    y = (points_xy[..., 1] + 1.0) * 0.5 * (H - 1)
    x0 = jnp.floor(x)
    y0 = jnp.floor(y)
    wx = x - x0
    wy = y - y0
    x0i = jnp.clip(x0, 0, W - 1).astype(jnp.int32)
    x1i = jnp.clip(x0 + 1, 0, W - 1).astype(jnp.int32)
    y0i = jnp.clip(y0, 0, H - 1).astype(jnp.int32)
    y1i = jnp.clip(y0 + 1, 0, H - 1).astype(jnp.int32)
    idx = jnp.stack([Wp * y0i + x0i, Wp * y0i + x1i,
                     Wp * y1i + x0i, Wp * y1i + x1i], axis=1)         # (B,4,T)
    wgt = jnp.stack([(1.0 - wx) * (1.0 - wy), wx * (1.0 - wy),
                     (1.0 - wx) * wy, wx * wy], axis=1).astype(jnp.float32)
    return idx, wgt


def init_params(key, c_in=4, f1=32, f2=64, c_dim=64, hidden=128):
    ks = jax.random.split(key, 10)
    d_in = 3 + 2 + 3 + f2 + c_dim

    def w(k, shape, fan_in):
        return (jax.random.normal(k, shape, jnp.float32)
                * (2.0 / fan_in) ** 0.5).astype(jnp.bfloat16)

    return {
        # encoder: channel-major, im2col-ready layouts
        "conv1_w": w(ks[0], (f1, 9 * c_in), 9 * c_in),   # (F1, 9*Cin)
        "conv1_b": jnp.zeros((f1, 1), jnp.float32),
        "conv2_w": w(ks[1], (f2, 9 * f1), 9 * f1),       # (F2, 9*F1)
        "conv2_b": jnp.zeros((f2, 1), jnp.float32),
        "fc_c_w": w(ks[2], (c_dim, f2), f2),
        "fc_c_b": jnp.zeros((c_dim, 1), jnp.float32),
        # decoder layer 1, stored transposed (hidden, piece), split per input
        # piece so the concat happens implicitly in-kernel
        "dec_w1_cam": w(ks[3], (hidden, 3), d_in),
        "dec_w1_xy": w(ks[4], (hidden, 2), d_in),
        "dec_w1_ray": w(ks[5], (hidden, 3), d_in),
        "dec_w1_cl": w(ks[6], (hidden, f2), d_in),
        "dec_w1_cg": w(ks[7], (hidden, c_dim), d_in),
        "dec_b1": jnp.zeros((hidden, 1), jnp.float32),
        "dec_w2": w(ks[8], (hidden, hidden), hidden),
        "dec_b2": jnp.zeros((hidden, 1), jnp.float32),
        "dec_w3": w(ks[9], (1, hidden), hidden),
        "dec_b3": jnp.zeros((1, 1), jnp.float32),
    }


def occupancy_network_forward(params, camera_ori_world, points_xy, ray_dir, img):
    B, Cin, H, W = img.shape
    T = points_xy.shape[1]

    # Padded-flat spatial layout (channel-major): row stride padded to a
    # multiple of 8; flat length padded so every tap slice stays in bounds.
    Wp = ((W + 2 + 7) // 8) * 8
    NI = H * Wp                                        # interior-slice length
    NP = (((H + 2) * Wp + 2 + 127) // 128) * 128       # flat length (lane dim)

    # ---- encode_inputs(img) -> (c_global, c_local) --------------------------
    img_pad = jnp.pad(img.astype(jnp.bfloat16),
                      ((0, 0), (0, 0), (1, 1), (1, Wp - W - 1)))
    img_flat = img_pad.reshape(B, Cin, (H + 2) * Wp)
    img_flat = jnp.pad(img_flat, ((0, 0), (0, 0), (0, NP - (H + 2) * Wp)))

    ridx = jnp.arange(NP, dtype=jnp.int32)
    rx = ridx % Wp
    ry = ridx // Wp
    mask = ((rx >= 1) & (rx <= W) & (ry >= 1) & (ry <= H)
            ).astype(jnp.float32)[None, :]

    c_local, c_global = encoder_pallas(img_flat, mask, params, H=H, W=W,
                                       Wp=Wp, NI=NI)
    # c_local: (B, F2, NI) bf16 (feature-major) ; c_global: (B, c_dim, 1) f32

    # ---- decode(camera_ori_world, points_xy, ray_dir, c_global, c_local) ----
    TT = 512 if T > 256 else 128
    T_pad = ((T + TT - 1) // TT) * TT
    pad_t = T_pad - T
    pts = jnp.pad(points_xy, ((0, 0), (0, pad_t), (0, 0)))
    rays = jnp.pad(ray_dir, ((0, 0), (0, pad_t), (0, 0)))

    idx, wgt = bilinear_corners(pts, H, W, Wp)                   # (B,4,T_pad)
    pts5 = jnp.swapaxes(jnp.concatenate([pts, rays], axis=-1), 1, 2)
    pts5 = pts5.astype(jnp.bfloat16)                             # (B,5,T_pad)

    # Fold camera-origin and c_global into the first-layer bias (per batch).
    c_dim = c_global.shape[1]
    b1p = (params["dec_b1"][None, :, :]
           + jnp.einsum("hk,bk->bh",
                        params["dec_w1_cam"].astype(jnp.float32),
                        camera_ori_world.astype(jnp.float32))[:, :, None]
           + jnp.einsum("hk,bk->bh",
                        params["dec_w1_cg"].astype(jnp.float32),
                        c_global.reshape(B, c_dim))[:, :, None])  # (B, Hd, 1)

    probs = decoder_pallas(pts5, idx, wgt, c_local, b1p, params, TT=TT)
    # TODO(synk): torch.distributions.Bernoulli itself is not representable;
    # we return its probabilities (sigmoid of the decoder logits).
    return probs.reshape(B, T_pad)[:, :T]


if __name__ == "__main__":
    key = jax.random.PRNGKey(0)
    kp, k1, k2, k3, k4 = jax.random.split(key, 5)
    params = init_params(kp)

    B, C, H, W, T = 2, 4, 16, 16, 8
    img = jax.random.normal(k1, (B, C, H, W), jnp.float32)          # NCHW
    camera_ori_world = jax.random.normal(k2, (B, 3), jnp.float32)
    points_xy = jax.random.uniform(k3, (B, T, 2), jnp.float32, -1.0, 1.0)
    ray_dir = jax.random.normal(k4, (B, T, 3), jnp.float32)
    ray_dir = ray_dir / jnp.linalg.norm(ray_dir, axis=-1, keepdims=True)

    fwd = jax.jit(functools.partial(occupancy_network_forward, params))
    probs = fwd(camera_ori_world, points_xy, ray_dir, img)
    jax.block_until_ready(probs)

    assert probs.shape == (B, T), probs.shape
    assert bool(jnp.all((probs >= 0.0) & (probs <= 1.0)))
    assert bool(jnp.all(jnp.isfinite(probs)))
    print("KERNEL_OK")
</pallas_src>

<mosaic_0001>
module attributes {stable_mosaic.version = 11 : i64} {
  func.func @_decoder_kernel(%arg0: i32, %arg1: i32, %arg2: memref<1x5x128xbf16, #tpu.memory_space<vmem>>, %arg3: memref<1x4x128xi32, #tpu.memory_space<vmem>>, %arg4: memref<1x4x128xf32, #tpu.memory_space<vmem>>, %arg5: memref<1x64x384xbf16, #tpu.memory_space<vmem>>, %arg6: memref<128x5xbf16, #tpu.memory_space<vmem>>, %arg7: memref<128x64xbf16, #tpu.memory_space<vmem>>, %arg8: memref<1x128x1xf32, #tpu.memory_space<vmem>>, %arg9: memref<128x128xbf16, #tpu.memory_space<vmem>>, %arg10: memref<128x1xf32, #tpu.memory_space<vmem>>, %arg11: memref<1x128xbf16, #tpu.memory_space<vmem>>, %arg12: memref<1x1xf32, #tpu.memory_space<vmem>>, %arg13: memref<1x1x128xf32, #tpu.memory_space<vmem>>) attributes {dimension_semantics = [#tpu.dimension_semantics<parallel>, #tpu.dimension_semantics<parallel>], iteration_bounds = array<i64: 2, 1>, scalar_prefetch = 0 : i64, scratch_operands = 0 : i64, tpu.core_type = #tpu.core_type<tc>, window_params = [{transform_indices = @transform_0, window_bounds = array<i64: 1, 5, 128>}, {transform_indices = @transform_1, window_bounds = array<i64: 1, 4, 128>}, {transform_indices = @transform_2, window_bounds = array<i64: 1, 4, 128>}, {transform_indices = @transform_3, window_bounds = array<i64: 1, 64, 384>}, {pipeline_mode = #tpu.pipeline_mode<synchronous>, transform_indices = @transform_4, window_bounds = array<i64: 128, 5>}, {pipeline_mode = #tpu.pipeline_mode<synchronous>, transform_indices = @transform_5, window_bounds = array<i64: 128, 64>}, {transform_indices = @transform_6, window_bounds = array<i64: 1, 128, 1>}, {pipeline_mode = #tpu.pipeline_mode<synchronous>, transform_indices = @transform_7, window_bounds = array<i64: 128, 128>}, {pipeline_mode = #tpu.pipeline_mode<synchronous>, transform_indices = @transform_8, window_bounds = array<i64: 128, 1>}, {pipeline_mode = #tpu.pipeline_mode<synchronous>, transform_indices = @transform_9, window_bounds = array<i64: 1, 128>}, {pipeline_mode = #tpu.pipeline_mode<synchronous>, transform_indices = @transform_10, window_bounds = array<i64: 1, 1>}, {transform_indices = @transform_11, window_bounds = array<i64: 1, 1, 128>}]} {
    %0 = tpu.iota {dimensions = array<i32: 0>} : vector<384x128xi32>
    %cst = arith.constant 0.000000e+00 : f32
    %1 = vector.broadcast %cst : f32 to vector<384x128xf32>
    %c0 = arith.constant 0 : index
    %c0_0 = arith.constant 0 : index
    %c0_1 = arith.constant 0 : index
    %2 = vector.load %arg3[%c0, %c0_0, %c0_1] : memref<1x4x128xi32, #tpu.memory_space<vmem>>, vector<1x1x128xi32>
    %3 = vector.shape_cast %2 : vector<1x1x128xi32> to vector<1x128xi32>
    %4 = vector.broadcast %3 : vector<1x128xi32> to vector<384x128xi32>
    %5 = arith.cmpi eq, %0, %4 : vector<384x128xi32>
    %c0_2 = arith.constant 0 : index
    %c0_3 = arith.constant 0 : index
    %c0_4 = arith.constant 0 : index
    %6 = vector.load %arg4[%c0_2, %c0_3, %c0_4] : memref<1x4x128xf32, #tpu.memory_space<vmem>>, vector<1x1x128xf32>
    %7 = vector.shape_cast %6 : vector<1x1x128xf32> to vector<1x128xf32>
    %cst_5 = arith.constant 0.000000e+00 : f32
    %8 = vector.shape_cast %7 : vector<1x128xf32> to vector<1x128xf32>
    %9 = vector.broadcast %8 : vector<1x128xf32> to vector<384x128xf32>
    %10 = vector.broadcast %cst_5 : f32 to vector<384x128xf32>
    %11 = arith.select %5, %9, %10 : vector<384x128xi1>, vector<384x128xf32>
    %12 = arith.addf %1, %11 : vector<384x128xf32>
    %c0_6 = arith.constant 0 : index
    %c1 = arith.constant 1 : index
    %c0_7 = arith.constant 0 : index
    %13 = vector.load %arg3[%c0_6, %c1, %c0_7] : memref<1x4x128xi32, #tpu.memory_space<vmem>>, vector<1x1x128xi32>
    %14 = vector.shape_cast %13 : vector<1x1x128xi32> to vector<1x128xi32>
    %15 = vector.broadcast %14 : vector<1x128xi32> to vector<384x128xi32>
    %16 = arith.cmpi eq, %0, %15 : vector<384x128xi32>
    %c0_8 = arith.constant 0 : index
    %c1_9 = arith.constant 1 : index
    %c0_10 = arith.constant 0 : index
    %17 = vector.load %arg4[%c0_8, %c1_9, %c0_10] : memref<1x4x128xf32, #tpu.memory_space<vmem>>, vector<1x1x128xf32>
    %18 = vector.shape_cast %17 : vector<1x1x128xf32> to vector<1x128xf32>
    %cst_11 = arith.constant 0.000000e+00 : f32
    %19 = vector.shape_cast %18 : vector<1x128xf32> to vector<1x128xf32>
    %20 = vector.broadcast %19 : vector<1x128xf32> to vector<384x128xf32>
    %21 = vector.broadcast %cst_11 : f32 to vector<384x128xf32>
    %22 = arith.select %16, %20, %21 : vector<384x128xi1>, vector<384x128xf32>
    %23 = arith.addf %12, %22 : vector<384x128xf32>
    %c0_12 = arith.constant 0 : index
    %c2 = arith.constant 2 : index
    %c0_13 = arith.constant 0 : index
    %24 = vector.load %arg3[%c0_12, %c2, %c0_13] : memref<1x4x128xi32, #tpu.memory_space<vmem>>, vector<1x1x128xi32>
    %25 = vector.shape_cast %24 : vector<1x1x128xi32> to vector<1x128xi32>
    %26 = vector.broadcast %25 : vector<1x128xi32> to vector<384x128xi32>
    %27 = arith.cmpi eq, %0, %26 : vector<384x128xi32>
    %c0_14 = arith.constant 0 : index
    %c2_15 = arith.constant 2 : index
    %c0_16 = arith.constant 0 : index
    %28 = vector.load %arg4[%c0_14, %c2_15, %c0_16] : memref<1x4x128xf32, #tpu.memory_space<vmem>>, vector<1x1x128xf32>
    %29 = vector.shape_cast %28 : vector<1x1x128xf32> to vector<1x128xf32>
    %cst_17 = arith.constant 0.000000e+00 : f32
    %30 = vector.shape_cast %29 : vector<1x128xf32> to vector<1x128xf32>
    %31 = vector.broadcast %30 : vector<1x128xf32> to vector<384x128xf32>
    %32 = vector.broadcast %cst_17 : f32 to vector<384x128xf32>
    %33 = arith.select %27, %31, %32 : vector<384x128xi1>, vector<384x128xf32>
    %34 = arith.addf %23, %33 : vector<384x128xf32>
    %c0_18 = arith.constant 0 : index
    %c3 = arith.constant 3 : index
    %c0_19 = arith.constant 0 : index
    %35 = vector.load %arg3[%c0_18, %c3, %c0_19] : memref<1x4x128xi32, #tpu.memory_space<vmem>>, vector<1x1x128xi32>
    %36 = vector.shape_cast %35 : vector<1x1x128xi32> to vector<1x128xi32>
    %37 = vector.broadcast %36 : vector<1x128xi32> to vector<384x128xi32>
    %38 = arith.cmpi eq, %0, %37 : vector<384x128xi32>
    %c0_20 = arith.constant 0 : index
    %c3_21 = arith.constant 3 : index
    %c0_22 = arith.constant 0 : index
    %39 = vector.load %arg4[%c0_20, %c3_21, %c0_22] : memref<1x4x128xf32, #tpu.memory_space<vmem>>, vector<1x1x128xf32>
    %40 = vector.shape_cast %39 : vector<1x1x128xf32> to vector<1x128xf32>
    %cst_23 = arith.constant 0.000000e+00 : f32
    %41 = vector.shape_cast %40 : vector<1x128xf32> to vector<1x128xf32>
    %42 = vector.broadcast %41 : vector<1x128xf32> to vector<384x128xf32>
    %43 = vector.broadcast %cst_23 : f32 to vector<384x128xf32>
    %44 = arith.select %38, %42, %43 : vector<384x128xi1>, vector<384x128xf32>
    %45 = arith.addf %34, %44 : vector<384x128xf32>
    %c0_24 = arith.constant 0 : index
    %c0_25 = arith.constant 0 : index
    %c0_26 = arith.constant 0 : index
    %46 = vector.load %arg5[%c0_24, %c0_25, %c0_26] : memref<1x64x384xbf16, #tpu.memory_space<vmem>>, vector<1x64x384xbf16>
    %47 = vector.shape_cast %46 : vector<1x64x384xbf16> to vector<64x384xbf16>
    %48 = arith.truncf %45 : vector<384x128xf32> to vector<384x128xbf16>
    %cst_27 = arith.constant dense<0.000000e+00> : vector<64x128xf32>
    %49 = tpu.matmul %47, %48, %cst_27 {dimension_numbers = #tpu.dot_dimension_numbers<[1], [0], [0], [1], [0, 0, 1, 1], [], []>} : vector<64x384xbf16>, vector<384x128xbf16>, vector<64x128xf32> -> vector<64x128xf32>
    %c0_28 = arith.constant 0 : index
    %c0_29 = arith.constant 0 : index
    %50 = vector.load %arg7[%c0_28, %c0_29] : memref<128x64xbf16, #tpu.memory_space<vmem>>, vector<128x64xbf16>
    %51 = arith.truncf %49 : vector<64x128xf32> to vector<64x128xbf16>
    %cst_30 = arith.constant dense<0.000000e+00> : vector<128x128xf32>
    %52 = tpu.matmul %50, %51, %cst_30 {dimension_numbers = #tpu.dot_dimension_numbers<[1], [0], [0], [1], [0, 0, 1, 1], [], []>} : vector<128x64xbf16>, vector<64x128xbf16>, vector<128x128xf32> -> vector<128x128xf32>
    %c0_31 = arith.constant 0 : index
    %c0_32 = arith.constant 0 : index
    %53 = vector.load %arg6[%c0_31, %c0_32] : memref<128x5xbf16, #tpu.memory_space<vmem>>, vector<128x5xbf16>
    %c0_33 = arith.constant 0 : index
    %c0_34 = arith.constant 0 : index
    %c0_35 = arith.constant 0 : index
    %54 = vector.load %arg2[%c0_33, %c0_34, %c0_35] : memref<1x5x128xbf16, #tpu.memory_space<vmem>>, vector<1x5x128xbf16>
    %55 = vector.shape_cast %54 : vector<1x5x128xbf16> to vector<5x128xbf16>
    %cst_36 = arith.constant dense<0.000000e+00> : vector<128x128xf32>
    %56 = tpu.matmul %53, %55, %cst_36 {dimension_numbers = #tpu.dot_dimension_numbers<[1], [0], [0], [1], [0, 0, 1, 1], [], []>} : vector<128x5xbf16>, vector<5x128xbf16>, vector<128x128xf32> -> vector<128x128xf32>
    %57 = arith.addf %52, %56 : vector<128x128xf32>
    %c0_37 = arith.constant 0 : index
    %c0_38 = arith.constant 0 : index
    %c0_39 = arith.constant 0 : index
    %58 = vector.load %arg8[%c0_37, %c0_38, %c0_39] : memref<1x128x1xf32, #tpu.memory_space<vmem>>, vector<1x128x1xf32>
    %59 = vector.shape_cast %58 : vector<1x128x1xf32> to vector<128x1xf32>
    %60 = vector.broadcast %59 : vector<128x1xf32> to vector<128x128xf32>
    %61 = arith.addf %57, %60 : vector<128x128xf32>
    %cst_40 = arith.constant 0.000000e+00 : f32
    %62 = vector.broadcast %cst_40 : f32 to vector<128x128xf32>
    %63 = arith.maximumf %61, %62 : vector<128x128xf32>
    %c0_41 = arith.constant 0 : index
    %c0_42 = arith.constant 0 : index
    %64 = vector.load %arg9[%c0_41, %c0_42] : memref<128x128xbf16, #tpu.memory_space<vmem>>, vector<128x128xbf16>
    %65 = arith.truncf %63 : vector<128x128xf32> to vector<128x128xbf16>
    %cst_43 = arith.constant dense<0.000000e+00> : vector<128x128xf32>
    %66 = tpu.matmul %64, %65, %cst_43 {dimension_numbers = #tpu.dot_dimension_numbers<[1], [0], [0], [1], [0, 0, 1, 1], [], []>} : vector<128x128xbf16>, vector<128x128xbf16>, vector<128x128xf32> -> vector<128x128xf32>
    %c0_44 = arith.constant 0 : index
    %c0_45 = arith.constant 0 : index
    %67 = vector.load %arg10[%c0_44, %c0_45] : memref<128x1xf32, #tpu.memory_space<vmem>>, vector<128x1xf32>
    %68 = vector.broadcast %67 : vector<128x1xf32> to vector<128x128xf32>
    %69 = arith.addf %66, %68 : vector<128x128xf32>
    %cst_46 = arith.constant 0.000000e+00 : f32
    %70 = vector.broadcast %cst_46 : f32 to vector<128x128xf32>
    %71 = arith.maximumf %69, %70 : vector<128x128xf32>
    %c0_47 = arith.constant 0 : index
    %c0_48 = arith.constant 0 : index
    %72 = vector.load %arg11[%c0_47, %c0_48] : memref<1x128xbf16, #tpu.memory_space<vmem>>, vector<1x128xbf16>
    %73 = arith.truncf %71 : vector<128x128xf32> to vector<128x128xbf16>
    %cst_49 = arith.constant dense<0.000000e+00> : vector<1x128xf32>
    %74 = tpu.matmul %72, %73, %cst_49 {dimension_numbers = #tpu.dot_dimension_numbers<[1], [0], [0], [1], [0, 0, 1, 1], [], []>} : vector<1x128xbf16>, vector<128x128xbf16>, vector<1x128xf32> -> vector<1x128xf32>
    %c0_50 = arith.constant 0 : index
    %c0_51 = arith.constant 0 : index
    %75 = vector.load %arg12[%c0_50, %c0_51] : memref<1x1xf32, #tpu.memory_space<vmem>>, vector<1x1xf32>
    %76 = vector.broadcast %75 : vector<1x1xf32> to vector<1x128xf32>
    %77 = arith.addf %74, %76 : vector<1x128xf32>
    %78 = arith.negf %77 : vector<1x128xf32>
    %79 = math.exp %78 : vector<1x128xf32>
    %cst_52 = arith.constant 1.000000e+00 : f32
    %80 = vector.broadcast %cst_52 : f32 to vector<1x128xf32>
    %81 = arith.addf %80, %79 : vector<1x128xf32>
    %82 = arith.divf %80, %81 : vector<1x128xf32>
    %c0_53 = arith.constant 0 : index
    %c0_54 = arith.constant 0 : index
    %c0_55 = arith.constant 0 : index
    %83 = vector.load %arg13[%c0_53, %c0_54, %c0_55] : memref<1x1x128xf32, #tpu.memory_space<vmem>>, vector<1x1x128xf32>
    %84 = vector.shape_cast %83 : vector<1x1x128xf32> to vector<1x128xf32>
    %85 = vector.shape_cast %82 : vector<1x128xf32> to vector<1x1x128xf32>
    tpu.vector_store %arg13[%c0_53, %c0_54, %c0_55], %85 {strides = array<i32>} : memref<1x1x128xf32, #tpu.memory_space<vmem>>, vector<1x1x128xf32>,
    return
  }
  func.func @transform_0(%arg0: i32, %arg1: i32) -> (i32, i32, i32) {
    %c0_i32 = arith.constant 0 : i32
    %c0_i32_0 = arith.constant 0 : i32
    return %arg0, %c0_i32, %arg1 : i32, i32, i32
  }
  func.func @transform_1(%arg0: i32, %arg1: i32) -> (i32, i32, i32) {
    %c0_i32 = arith.constant 0 : i32
    %c0_i32_0 = arith.constant 0 : i32
    return %arg0, %c0_i32, %arg1 : i32, i32, i32
  }
  func.func @transform_2(%arg0: i32, %arg1: i32) -> (i32, i32, i32) {
    %c0_i32 = arith.constant 0 : i32
    %c0_i32_0 = arith.constant 0 : i32
    return %arg0, %c0_i32, %arg1 : i32, i32, i32
  }
  func.func @transform_3(%arg0: i32, %arg1: i32) -> (i32, i32, i32) {
    %c0_i32 = arith.constant 0 : i32
    %c0_i32_0 = arith.constant 0 : i32
    %c0_i32_1 = arith.constant 0 : i32
    return %arg0, %c0_i32, %c0_i32_0 : i32, i32, i32
  }
  func.func @transform_4(%arg0: i32, %arg1: i32) -> (i32, i32) {
    %c0_i32 = arith.constant 0 : i32
    %c0_i32_0 = arith.constant 0 : i32
    %c0_i32_1 = arith.constant 0 : i32
    return %c0_i32, %c0_i32_0 : i32, i32
  }
  func.func @transform_5(%arg0: i32, %arg1: i32) -> (i32, i32) {
    %c0_i32 = arith.constant 0 : i32
    %c0_i32_0 = arith.constant 0 : i32
    %c0_i32_1 = arith.constant 0 : i32
    return %c0_i32, %c0_i32_0 : i32, i32
  }
  func.func @transform_6(%arg0: i32, %arg1: i32) -> (i32, i32, i32) {
    %c0_i32 = arith.constant 0 : i32
    %c0_i32_0 = arith.constant 0 : i32
    %c0_i32_1 = arith.constant 0 : i32
    return %arg0, %c0_i32, %c0_i32_0 : i32, i32, i32
  }
  func.func @transform_7(%arg0: i32, %arg1: i32) -> (i32, i32) {
    %c0_i32 = arith.constant 0 : i32
    %c0_i32_0 = arith.constant 0 : i32
    %c0_i32_1 = arith.constant 0 : i32
    return %c0_i32, %c0_i32_0 : i32, i32
  }
  func.func @transform_8(%arg0: i32, %arg1: i32) -> (i32, i32) {
    %c0_i32 = arith.constant 0 : i32
    %c0_i32_0 = arith.constant 0 : i32
    %c0_i32_1 = arith.constant 0 : i32
    return %c0_i32, %c0_i32_0 : i32, i32
  }
  func.func @transform_9(%arg0: i32, %arg1: i32) -> (i32, i32) {
    %c0_i32 = arith.constant 0 : i32
    %c0_i32_0 = arith.constant 0 : i32
    %c0_i32_1 = arith.constant 0 : i32
    return %c0_i32, %c0_i32_0 : i32, i32
  }
  func.func @transform_10(%arg0: i32, %arg1: i32) -> (i32, i32) {
    %c0_i32 = arith.constant 0 : i32
    %c0_i32_0 = arith.constant 0 : i32
    %c0_i32_1 = arith.constant 0 : i32
    return %c0_i32, %c0_i32_0 : i32, i32
  }
  func.func @transform_11(%arg0: i32, %arg1: i32) -> (i32, i32, i32) {
    %c0_i32 = arith.constant 0 : i32
    %c0_i32_0 = arith.constant 0 : i32
    return %arg0, %c0_i32, %arg1 : i32, i32, i32
  }
}

module attributes {stable_mosaic.version = 11 : i64} {
  func.func @_encoder_kernel(%arg0: i32, %arg1: memref<1x4x512xbf16, #tpu.memory_space<vmem>>, %arg2: memref<1x512xf32, #tpu.memory_space<vmem>>, %arg3: memref<32x36xbf16, #tpu.memory_space<vmem>>, %arg4: memref<32x1xf32, #tpu.memory_space<vmem>>, %arg5: memref<64x288xbf16, #tpu.memory_space<vmem>>, %arg6: memref<64x1xf32, #tpu.memory_space<vmem>>, %arg7: memref<64x64xbf16, #tpu.memory_space<vmem>>, %arg8: memref<64x1xf32, #tpu.memory_space<vmem>>, %arg9: memref<1x64x384xbf16, #tpu.memory_space<vmem>>, %arg10: memref<1x64x1xf32, #tpu.memory_space<vmem>>, %arg11: memref<32x640xbf16, #tpu.memory_space<vmem>>, %arg12: memref<36x384xbf16, #tpu.memory_space<vmem>>, %arg13: memref<288x384xbf16, #tpu.memory_space<vmem>>) attributes {dimension_semantics = [#tpu.dimension_semantics<parallel>], iteration_bounds = array<i64: 2>, scalar_prefetch = 0 : i64, scratch_operands = 3 : i64, tpu.core_type = #tpu.core_type<tc>, window_params = [{transform_indices = @transform_0, window_bounds = array<i64: 1, 4, 512>}, {pipeline_mode = #tpu.pipeline_mode<synchronous>, transform_indices = @transform_1, window_bounds = array<i64: 1, 512>}, {pipeline_mode = #tpu.pipeline_mode<synchronous>, transform_indices = @transform_2, window_bounds = array<i64: 32, 36>}, {pipeline_mode = #tpu.pipeline_mode<synchronous>, transform_indices = @transform_3, window_bounds = array<i64: 32, 1>}, {pipeline_mode = #tpu.pipeline_mode<synchronous>, transform_indices = @transform_4, window_bounds = array<i64: 64, 288>}, {pipeline_mode = #tpu.pipeline_mode<synchronous>, transform_indices = @transform_5, window_bounds = array<i64: 64, 1>}, {pipeline_mode = #tpu.pipeline_mode<synchronous>, transform_indices = @transform_6, window_bounds = array<i64: 64, 64>}, {pipeline_mode = #tpu.pipeline_mode<synchronous>, transform_indices = @transform_7, window_bounds = array<i64: 64, 1>}, {transform_indices = @transform_8, window_bounds = array<i64: 1, 64, 384>}, {transform_indices = @transform_9, window_bounds = array<i64: 1, 64, 1>}]} {
    %c0 = arith.constant 0 : index
    %c25 = arith.constant 25 : index
    %0 = vector.load %arg2[%c0, %c25] : memref<1x512xf32, #tpu.memory_space<vmem>>, vector<1x384xf32>
    %c0_0 = arith.constant 0 : index
    %c0_1 = arith.constant 0 : index
    %c0_2 = arith.constant 0 : index
    %1 = vector.load %arg1[%c0_0, %c0_1, %c0_2] : memref<1x4x512xbf16, #tpu.memory_space<vmem>>, vector<1x4x384xbf16>
    %2 = vector.shape_cast %1 : vector<1x4x384xbf16> to vector<4x384xbf16>
    %c0_3 = arith.constant 0 : index
    %c0_4 = arith.constant 0 : index
    %3 = vector.load %arg12[%c0_3, %c0_4] : memref<36x384xbf16, #tpu.memory_space<vmem>>, vector<4x384xbf16>
    tpu.vector_store %arg12[%c0_3, %c0_4], %2 {strides = array<i32>} : memref<36x384xbf16, #tpu.memory_space<vmem>>, vector<4x384xbf16>,
    %c0_5 = arith.constant 0 : index
    %c0_6 = arith.constant 0 : index
    %c1 = arith.constant 1 : index
    %4 = vector.load %arg1[%c0_5, %c0_6, %c1] : memref<1x4x512xbf16, #tpu.memory_space<vmem>>, vector<1x4x384xbf16>
    %5 = vector.shape_cast %4 : vector<1x4x384xbf16> to vector<4x384xbf16>
    %c4 = arith.constant 4 : index
    %c0_7 = arith.constant 0 : index
    %6 = vector.load %arg12[%c4, %c0_7] : memref<36x384xbf16, #tpu.memory_space<vmem>>, vector<4x384xbf16>
    tpu.vector_store %arg12[%c4, %c0_7], %5 {strides = array<i32>} : memref<36x384xbf16, #tpu.memory_space<vmem>>, vector<4x384xbf16>,
    %c0_8 = arith.constant 0 : index
    %c0_9 = arith.constant 0 : index
    %c2 = arith.constant 2 : index
    %7 = vector.load %arg1[%c0_8, %c0_9, %c2] : memref<1x4x512xbf16, #tpu.memory_space<vmem>>, vector<1x4x384xbf16>
    %8 = vector.shape_cast %7 : vector<1x4x384xbf16> to vector<4x384xbf16>
    %c8 = arith.constant 8 : index
    %c0_10 = arith.constant 0 : index
    %9 = vector.load %arg12[%c8, %c0_10] : memref<36x384xbf16, #tpu.memory_space<vmem>>, vector<4x384xbf16>
    tpu.vector_store %arg12[%c8, %c0_10], %8 {strides = array<i32>} : memref<36x384xbf16, #tpu.memory_space<vmem>>, vector<4x384xbf16>,
    %c0_11 = arith.constant 0 : index
    %c0_12 = arith.constant 0 : index
    %c24 = arith.constant 24 : index
    %10 = vector.load %arg1[%c0_11, %c0_12, %c24] : memref<1x4x512xbf16, #tpu.memory_space<vmem>>, vector<1x4x384xbf16>
    %11 = vector.shape_cast %10 : vector<1x4x384xbf16> to vector<4x384xbf16>
    %c12 = arith.constant 12 : index
    %c0_13 = arith.constant 0 : index
    %12 = vector.load %arg12[%c12, %c0_13] : memref<36x384xbf16, #tpu.memory_space<vmem>>, vector<4x384xbf16>
    tpu.vector_store %arg12[%c12, %c0_13], %11 {strides = array<i32>} : memref<36x384xbf16, #tpu.memory_space<vmem>>, vector<4x384xbf16>,
    %c0_14 = arith.constant 0 : index
    %c0_15 = arith.constant 0 : index
    %c25_16 = arith.constant 25 : index
    %13 = vector.load %arg1[%c0_14, %c0_15, %c25_16] : memref<1x4x512xbf16, #tpu.memory_space<vmem>>, vector<1x4x384xbf16>
    %14 = vector.shape_cast %13 : vector<1x4x384xbf16> to vector<4x384xbf16>
    %c16 = arith.constant 16 : index
    %c0_17 = arith.constant 0 : index
    %15 = vector.load %arg12[%c16, %c0_17] : memref<36x384xbf16, #tpu.memory_space<vmem>>, vector<4x384xbf16>
    tpu.vector_store %arg12[%c16, %c0_17], %14 {strides = array<i32>} : memref<36x384xbf16, #tpu.memory_space<vmem>>, vector<4x384xbf16>,
    %c0_18 = arith.constant 0 : index
    %c0_19 = arith.constant 0 : index
    %c26 = arith.constant 26 : index
    %16 = vector.load %arg1[%c0_18, %c0_19, %c26] : memref<1x4x512xbf16, #tpu.memory_space<vmem>>, vector<1x4x384xbf16>
    %17 = vector.shape_cast %16 : vector<1x4x384xbf16> to vector<4x384xbf16>
    %c20 = arith.constant 20 : index
    %c0_20 = arith.constant 0 : index
    %18 = vector.load %arg12[%c20, %c0_20] : memref<36x384xbf16, #tpu.memory_space<vmem>>, vector<4x384xbf16>
    tpu.vector_store %arg12[%c20, %c0_20], %17 {strides = array<i32>} : memref<36x384xbf16, #tpu.memory_space<vmem>>, vector<4x384xbf16>,
    %c0_21 = arith.constant 0 : index
    %c0_22 = arith.constant 0 : index
    %c48 = arith.constant 48 : index
    %19 = vector.load %arg1[%c0_21, %c0_22, %c48] : memref<1x4x512xbf16, #tpu.memory_space<vmem>>, vector<1x4x384xbf16>
    %20 = vector.shape_cast %19 : vector<1x4x384xbf16> to vector<4x384xbf16>
    %c24_23 = arith.constant 24 : index
    %c0_24 = arith.constant 0 : index
    %21 = vector.load %arg12[%c24_23, %c0_24] : memref<36x384xbf16, #tpu.memory_space<vmem>>, vector<4x384xbf16>
    tpu.vector_store %arg12[%c24_23, %c0_24], %20 {strides = array<i32>} : memref<36x384xbf16, #tpu.memory_space<vmem>>, vector<4x384xbf16>,
    %c0_25 = arith.constant 0 : index
    %c0_26 = arith.constant 0 : index
    %c49 = arith.constant 49 : index
    %22 = vector.load %arg1[%c0_25, %c0_26, %c49] : memref<1x4x512xbf16, #tpu.memory_space<vmem>>, vector<1x4x384xbf16>
    %23 = vector.shape_cast %22 : vector<1x4x384xbf16> to vector<4x384xbf16>
    %c28 = arith.constant 28 : index
    %c0_27 = arith.constant 0 : index
    %24 = vector.load %arg12[%c28, %c0_27] : memref<36x384xbf16, #tpu.memory_space<vmem>>, vector<4x384xbf16>
    tpu.vector_store %arg12[%c28, %c0_27], %23 {strides = array<i32>} : memref<36x384xbf16, #tpu.memory_space<vmem>>, vector<4x384xbf16>,
    %c0_28 = arith.constant 0 : index
    %c0_29 = arith.constant 0 : index
    %c50 = arith.constant 50 : index
    %25 = vector.load %arg1[%c0_28, %c0_29, %c50] : memref<1x4x512xbf16, #tpu.memory_space<vmem>>, vector<1x4x384xbf16>
    %26 = vector.shape_cast %25 : vector<1x4x384xbf16> to vector<4x384xbf16>
    %c32 = arith.constant 32 : index
    %c0_30 = arith.constant 0 : index
    %27 = vector.load %arg12[%c32, %c0_30] : memref<36x384xbf16, #tpu.memory_space<vmem>>, vector<4x384xbf16>
    tpu.vector_store %arg12[%c32, %c0_30], %26 {strides = array<i32>} : memref<36x384xbf16, #tpu.memory_space<vmem>>, vector<4x384xbf16>,
    %c0_31 = arith.constant 0 : index
    %c0_32 = arith.constant 0 : index
    %28 = vector.load %arg3[%c0_31, %c0_32] : memref<32x36xbf16, #tpu.memory_space<vmem>>, vector<32x36xbf16>
    %c0_33 = arith.constant 0 : index
    %c0_34 = arith.constant 0 : index
    %29 = vector.load %arg12[%c0_33, %c0_34] : memref<36x384xbf16, #tpu.memory_space<vmem>>, vector<36x384xbf16>
    %cst = arith.constant dense<0.000000e+00> : vector<32x384xf32>
    %30 = tpu.matmul %28, %29, %cst {dimension_numbers = #tpu.dot_dimension_numbers<[1], [0], [0], [1], [0, 0, 1, 1], [], []>} : vector<32x36xbf16>, vector<36x384xbf16>, vector<32x384xf32> -> vector<32x384xf32>
    %c0_35 = arith.constant 0 : index
    %c0_36 = arith.constant 0 : index
    %31 = vector.load %arg4[%c0_35, %c0_36] : memref<32x1xf32, #tpu.memory_space<vmem>>, vector<32x1xf32>
    %32 = vector.broadcast %31 : vector<32x1xf32> to vector<32x384xf32>
    %33 = arith.addf %30, %32 : vector<32x384xf32>
    %cst_37 = arith.constant 0.000000e+00 : f32
    %34 = vector.broadcast %cst_37 : f32 to vector<32x384xf32>
    %35 = arith.maximumf %33, %34 : vector<32x384xf32>
    %36 = vector.broadcast %0 : vector<1x384xf32> to vector<32x384xf32>
    %37 = arith.mulf %35, %36 : vector<32x384xf32>
    %cst_38 = arith.constant 0.000000e+00 : bf16
    %38 = vector.broadcast %cst_38 : bf16 to vector<32x128xbf16>
    %c0_39 = arith.constant 0 : index
    %c0_40 = arith.constant 0 : index
    %39 = vector.load %arg11[%c0_39, %c0_40] : memref<32x640xbf16, #tpu.memory_space<vmem>>, vector<32x128xbf16>
    tpu.vector_store %arg11[%c0_39, %c0_40], %38 {strides = array<i32>} : memref<32x640xbf16, #tpu.memory_space<vmem>>, vector<32x128xbf16>,
    %cst_41 = arith.constant 0.000000e+00 : bf16
    %40 = vector.broadcast %cst_41 : bf16 to vector<32x128xbf16>
    %c0_42 = arith.constant 0 : index
    %c512 = arith.constant 512 : index
    %41 = vector.load %arg11[%c0_42, %c512] : memref<32x640xbf16, #tpu.memory_space<vmem>>, vector<32x128xbf16>
    tpu.vector_store %arg11[%c0_42, %c512], %40 {strides = array<i32>} : memref<32x640xbf16, #tpu.memory_space<vmem>>, vector<32x128xbf16>,
    %42 = arith.truncf %37 : vector<32x384xf32> to vector<32x384xbf16>
    %c0_43 = arith.constant 0 : index
    %c128 = arith.constant 128 : index
    %43 = vector.load %arg11[%c0_43, %c128] : memref<32x640xbf16, #tpu.memory_space<vmem>>, vector<32x384xbf16>
    tpu.vector_store %arg11[%c0_43, %c128], %42 {strides = array<i32>} : memref<32x640xbf16, #tpu.memory_space<vmem>>, vector<32x384xbf16>,
    %c0_44 = arith.constant 0 : index
    %c103 = arith.constant 103 : index
    %44 = vector.load %arg11[%c0_44, %c103] : memref<32x640xbf16, #tpu.memory_space<vmem>>, vector<32x384xbf16>
    %c0_45 = arith.constant 0 : index
    %c0_46 = arith.constant 0 : index
    %45 = vector.load %arg13[%c0_45, %c0_46] : memref<288x384xbf16, #tpu.memory_space<vmem>>, vector<32x384xbf16>
    tpu.vector_store %arg13[%c0_45, %c0_46], %44 {strides = array<i32>} : memref<288x384xbf16, #tpu.memory_space<vmem>>, vector<32x384xbf16>,
    %c0_47 = arith.constant 0 : index
    %c104 = arith.constant 104 : index
    %46 = vector.load %arg11[%c0_47, %c104] : memref<32x640xbf16, #tpu.memory_space<vmem>>, vector<32x384xbf16>
    %c32_48 = arith.constant 32 : index
    %c0_49 = arith.constant 0 : index
    %47 = vector.load %arg13[%c32_48, %c0_49] : memref<288x384xbf16, #tpu.memory_space<vmem>>, vector<32x384xbf16>
    tpu.vector_store %arg13[%c32_48, %c0_49], %46 {strides = array<i32>} : memref<288x384xbf16, #tpu.memory_space<vmem>>, vector<32x384xbf16>,
    %c0_50 = arith.constant 0 : index
    %c105 = arith.constant 105 : index
    %48 = vector.load %arg11[%c0_50, %c105] : memref<32x640xbf16, #tpu.memory_space<vmem>>, vector<32x384xbf16>
    %c64 = arith.constant 64 : index
    %c0_51 = arith.constant 0 : index
    %49 = vector.load %arg13[%c64, %c0_51] : memref<288x384xbf16, #tpu.memory_space<vmem>>, vector<32x384xbf16>
    tpu.vector_store %arg13[%c64, %c0_51], %48 {strides = array<i32>} : memref<288x384xbf16, #tpu.memory_space<vmem>>, vector<32x384xbf16>,
    %c0_52 = arith.constant 0 : index
    %c127 = arith.constant 127 : index
    %50 = vector.load %arg11[%c0_52, %c127] : memref<32x640xbf16, #tpu.memory_space<vmem>>, vector<32x384xbf16>
    %c96 = arith.constant 96 : index
    %c0_53 = arith.constant 0 : index
    %51 = vector.load %arg13[%c96, %c0_53] : memref<288x384xbf16, #tpu.memory_space<vmem>>, vector<32x384xbf16>
    tpu.vector_store %arg13[%c96, %c0_53], %50 {strides = array<i32>} : memref<288x384xbf16, #tpu.memory_space<vmem>>, vector<32x384xbf16>,
    %c0_54 = arith.constant 0 : index
    %c128_55 = arith.constant 128 : index
    %52 = vector.load %arg11[%c0_54, %c128_55] : memref<32x640xbf16, #tpu.memory_space<vmem>>, vector<32x384xbf16>
    %c128_56 = arith.constant 128 : index
    %c0_57 = arith.constant 0 : index
    %53 = vector.load %arg13[%c128_56, %c0_57] : memref<288x384xbf16, #tpu.memory_space<vmem>>, vector<32x384xbf16>
    tpu.vector_store %arg13[%c128_56, %c0_57], %52 {strides = array<i32>} : memref<288x384xbf16, #tpu.memory_space<vmem>>, vector<32x384xbf16>,
    %c0_58 = arith.constant 0 : index
    %c129 = arith.constant 129 : index
    %54 = vector.load %arg11[%c0_58, %c129] : memref<32x640xbf16, #tpu.memory_space<vmem>>, vector<32x384xbf16>
    %c160 = arith.constant 160 : index
    %c0_59 = arith.constant 0 : index
    %55 = vector.load %arg13[%c160, %c0_59] : memref<288x384xbf16, #tpu.memory_space<vmem>>, vector<32x384xbf16>
    tpu.vector_store %arg13[%c160, %c0_59], %54 {strides = array<i32>} : memref<288x384xbf16, #tpu.memory_space<vmem>>, vector<32x384xbf16>,
    %c0_60 = arith.constant 0 : index
    %c151 = arith.constant 151 : index
    %56 = vector.load %arg11[%c0_60, %c151] : memref<32x640xbf16, #tpu.memory_space<vmem>>, vector<32x384xbf16>
    %c192 = arith.constant 192 : index
    %c0_61 = arith.constant 0 : index
    %57 = vector.load %arg13[%c192, %c0_61] : memref<288x384xbf16, #tpu.memory_space<vmem>>, vector<32x384xbf16>
    tpu.vector_store %arg13[%c192, %c0_61], %56 {strides = array<i32>} : memref<288x384xbf16, #tpu.memory_space<vmem>>, vector<32x384xbf16>,
    %c0_62 = arith.constant 0 : index
    %c152 = arith.constant 152 : index
    %58 = vector.load %arg11[%c0_62, %c152] : memref<32x640xbf16, #tpu.memory_space<vmem>>, vector<32x384xbf16>
    %c224 = arith.constant 224 : index
    %c0_63 = arith.constant 0 : index
    %59 = vector.load %arg13[%c224, %c0_63] : memref<288x384xbf16, #tpu.memory_space<vmem>>, vector<32x384xbf16>
    tpu.vector_store %arg13[%c224, %c0_63], %58 {strides = array<i32>} : memref<288x384xbf16, #tpu.memory_space<vmem>>, vector<32x384xbf16>,
    %c0_64 = arith.constant 0 : index
    %c153 = arith.constant 153 : index
    %60 = vector.load %arg11[%c0_64, %c153] : memref<32x640xbf16, #tpu.memory_space<vmem>>, vector<32x384xbf16>
    %c256 = arith.constant 256 : index
    %c0_65 = arith.constant 0 : index
    %61 = vector.load %arg13[%c256, %c0_65] : memref<288x384xbf16, #tpu.memory_space<vmem>>, vector<32x384xbf16>
    tpu.vector_store %arg13[%c256, %c0_65], %60 {strides = array<i32>} : memref<288x384xbf16, #tpu.memory_space<vmem>>, vector<32x384xbf16>,
    %c0_66 = arith.constant 0 : index
    %c0_67 = arith.constant 0 : index
    %62 = vector.load %arg5[%c0_66, %c0_67] : memref<64x288xbf16, #tpu.memory_space<vmem>>, vector<64x288xbf16>
    %c0_68 = arith.constant 0 : index
    %c0_69 = arith.constant 0 : index
    %63 = vector.load %arg13[%c0_68, %c0_69] : memref<288x384xbf16, #tpu.memory_space<vmem>>, vector<288x384xbf16>
    %cst_70 = arith.constant dense<0.000000e+00> : vector<64x384xf32>
    %64 = tpu.matmul %62, %63, %cst_70 {dimension_numbers = #tpu.dot_dimension_numbers<[1], [0], [0], [1], [0, 0, 1, 1], [], []>} : vector<64x288xbf16>, vector<288x384xbf16>, vector<64x384xf32> -> vector<64x384xf32>
    %c0_71 = arith.constant 0 : index
    %c0_72 = arith.constant 0 : index
    %65 = vector.load %arg6[%c0_71, %c0_72] : memref<64x1xf32, #tpu.memory_space<vmem>>, vector<64x1xf32>
    %66 = vector.broadcast %65 : vector<64x1xf32> to vector<64x384xf32>
    %67 = arith.addf %64, %66 : vector<64x384xf32>
    %cst_73 = arith.constant 0.000000e+00 : f32
    %68 = vector.broadcast %cst_73 : f32 to vector<64x384xf32>
    %69 = arith.maximumf %67, %68 : vector<64x384xf32>
    %70 = vector.broadcast %0 : vector<1x384xf32> to vector<64x384xf32>
    %71 = arith.mulf %69, %70 : vector<64x384xf32>
    %72 = arith.truncf %71 : vector<64x384xf32> to vector<64x384xbf16>
    %c0_74 = arith.constant 0 : index
    %c0_75 = arith.constant 0 : index
    %c0_76 = arith.constant 0 : index
    %73 = vector.load %arg9[%c0_74, %c0_75, %c0_76] : memref<1x64x384xbf16, #tpu.memory_space<vmem>>, vector<1x64x384xbf16>
    %74 = vector.shape_cast %73 : vector<1x64x384xbf16> to vector<64x384xbf16>
    %75 = vector.shape_cast %72 : vector<64x384xbf16> to vector<1x64x384xbf16>
    tpu.vector_store %arg9[%c0_74, %c0_75, %c0_76], %75 {strides = array<i32>} : memref<1x64x384xbf16, #tpu.memory_space<vmem>>, vector<1x64x384xbf16>,
    %cst_77 = arith.constant dense<0.000000e+00> : vector<64xf32>
    %76 = vector.multi_reduction <add>, %71, %cst_77 [1] : vector<64x384xf32> to vector<64xf32>
    %77 = vector.shape_cast %76 : vector<64xf32> to vector<64x1xf32>
    %cst_78 = arith.constant 3.906250e-03 : f32
    %78 = vector.broadcast %cst_78 : f32 to vector<64x1xf32>
    %79 = arith.mulf %77, %78 : vector<64x1xf32>
    %c0_79 = arith.constant 0 : index
    %c0_80 = arith.constant 0 : index
    %80 = vector.load %arg7[%c0_79, %c0_80] : memref<64x64xbf16, #tpu.memory_space<vmem>>, vector<64x64xbf16>
    %81 = arith.truncf %79 : vector<64x1xf32> to vector<64x1xbf16>
    %cst_81 = arith.constant dense<0.000000e+00> : vector<64x1xf32>
    %82 = tpu.matmul %80, %81, %cst_81 {dimension_numbers = #tpu.dot_dimension_numbers<[1], [0], [0], [1], [0, 0, 1, 1], [], []>} : vector<64x64xbf16>, vector<64x1xbf16>, vector<64x1xf32> -> vector<64x1xf32>
    %c0_82 = arith.constant 0 : index
    %c0_83 = arith.constant 0 : index
    %83 = vector.load %arg8[%c0_82, %c0_83] : memref<64x1xf32, #tpu.memory_space<vmem>>, vector<64x1xf32>
    %84 = arith.addf %82, %83 : vector<64x1xf32>
    %c0_84 = arith.constant 0 : index
    %c0_85 = arith.constant 0 : index
    %c0_86 = arith.constant 0 : index
    %85 = vector.load %arg10[%c0_84, %c0_85, %c0_86] : memref<1x64x1xf32, #tpu.memory_space<vmem>>, vector<1x64x1xf32>
    %86 = vector.shape_cast %85 : vector<1x64x1xf32> to vector<64x1xf32>
    %87 = vector.shape_cast %84 : vector<64x1xf32> to vector<1x64x1xf32>
    tpu.vector_store %arg10[%c0_84, %c0_85, %c0_86], %87 {strides = array<i32>} : memref<1x64x1xf32, #tpu.memory_space<vmem>>, vector<1x64x1xf32>,
    return
  }
  func.func @transform_0(%arg0: i32) -> (i32, i32, i32) {
    %c0_i32 = arith.constant 0 : i32
    %c0_i32_0 = arith.constant 0 : i32
    %c0_i32_1 = arith.constant 0 : i32
    return %arg0, %c0_i32, %c0_i32_0 : i32, i32, i32
  }
  func.func @transform_1(%arg0: i32) -> (i32, i32) {
    %c0_i32 = arith.constant 0 : i32
    %c0_i32_0 = arith.constant 0 : i32
    %c0_i32_1 = arith.constant 0 : i32
    return %c0_i32, %c0_i32_0 : i32, i32
  }
  func.func @transform_2(%arg0: i32) -> (i32, i32) {
    %c0_i32 = arith.constant 0 : i32
    %c0_i32_0 = arith.constant 0 : i32
    %c0_i32_1 = arith.constant 0 : i32
    return %c0_i32, %c0_i32_0 : i32, i32
  }
  func.func @transform_3(%arg0: i32) -> (i32, i32) {
    %c0_i32 = arith.constant 0 : i32
    %c0_i32_0 = arith.constant 0 : i32
    %c0_i32_1 = arith.constant 0 : i32
    return %c0_i32, %c0_i32_0 : i32, i32
  }
  func.func @transform_4(%arg0: i32) -> (i32, i32) {
    %c0_i32 = arith.constant 0 : i32
    %c0_i32_0 = arith.constant 0 : i32
    %c0_i32_1 = arith.constant 0 : i32
    return %c0_i32, %c0_i32_0 : i32, i32
  }
  func.func @transform_5(%arg0: i32) -> (i32, i32) {
    %c0_i32 = arith.constant 0 : i32
    %c0_i32_0 = arith.constant 0 : i32
    %c0_i32_1 = arith.constant 0 : i32
    return %c0_i32, %c0_i32_0 : i32, i32
  }
  func.func @transform_6(%arg0: i32) -> (i32, i32) {
    %c0_i32 = arith.constant 0 : i32
    %c0_i32_0 = arith.constant 0 : i32
    %c0_i32_1 = arith.constant 0 : i32
    return %c0_i32, %c0_i32_0 : i32, i32
  }
  func.func @transform_7(%arg0: i32) -> (i32, i32) {
    %c0_i32 = arith.constant 0 : i32
    %c0_i32_0 = arith.constant 0 : i32
    %c0_i32_1 = arith.constant 0 : i32
    return %c0_i32, %c0_i32_0 : i32, i32
  }
  func.func @transform_8(%arg0: i32) -> (i32, i32, i32) {
    %c0_i32 = arith.constant 0 : i32
    %c0_i32_0 = arith.constant 0 : i32
    %c0_i32_1 = arith.constant 0 : i32
    return %arg0, %c0_i32, %c0_i32_0 : i32, i32, i32
  }
  func.func @transform_9(%arg0: i32) -> (i32, i32, i32) {
    %c0_i32 = arith.constant 0 : i32
    %c0_i32_0 = arith.constant 0 : i32
    %c0_i32_1 = arith.constant 0 : i32
    return %arg0, %c0_i32, %c0_i32_0 : i32, i32, i32
  }
}

</mosaic_0001>

<llo_original>
// kernel: occupancy_network_forward.3
$region0: #{occupancy_network_forward.3}
  #allocation0 [shape = 'u32[]', space=smem, size = 0x4, offset = 0x4, fixed_abs, tag = 'smem constant byte address 0x4 - core index']
  #allocation1 [shape = 'u32[144,128]{1,0:T(1,128)}', space=vmem, size = 0x12000, scoped, tag = 'internal scratch']
  #allocation2 [shape = 'f32[1,1]{1,0:T(1,128)S(1)}', space=vmem, size = 0x200, scoped, tag = 'scoped memory for occupancy_network_forward.3']
  %s0 = inlined_call_operand.vmem [shape: bf16[2,5,128], index: 0, kind: input, shape index: {}]
  %s1 = inlined_call_operand.vmem [shape: s32[2,4,128], index: 1, kind: input, shape index: {}]
  %s2 = inlined_call_operand.vmem [shape: f32[2,4,128], index: 2, kind: input, shape index: {}]
  %s3 = inlined_call_operand.vmem [shape: bf16[2,64,384], index: 3, kind: input, shape index: {}]
  %s4 = inlined_call_operand.vmem [shape: bf16[128,5], index: 4, kind: input, shape index: {}]
  %s5 = inlined_call_operand.vmem [shape: bf16[128,64], index: 5, kind: input, shape index: {}]
  %s6 = inlined_call_operand.vmem [shape: f32[2,128,1], index: 6, kind: input, shape index: {}]
  %s7 = inlined_call_operand.vmem [shape: bf16[128,128], index: 7, kind: input, shape index: {}]
  %s8 = inlined_call_operand.vmem [shape: f32[128,1], index: 8, kind: input, shape index: {}]
  %s9 = inlined_call_operand.vmem [shape: bf16[1,128], index: 9, kind: input, shape index: {}]
  %s10 = inlined_call_operand.<no memory space> [shape: f32[1,1], index: 10, kind: input, shape index: {}]
  %s11 = inlined_call_operand.hbm [shape: f32[2,1,128], index: 11, kind: output, shape index: {}]
  %s12 = sld [smem:[#allocation0]]
  $region77: #{occupancy_network_forward.3} parent=0
    _
  %s14 = ssub.s32 1, %s12
  %s15 = scalar_select 0, %s14, %s12
  %v16 = vstv %s10
  %17 = vst [vmem:[#allocation2] sm:$0x1] %v16
  $region1: #{occupancy_network_forward.3} parent=0
    #allocation3 [shape = 'u8[1024]{0}', space=vmem, size = 0x400, scoped, tag = 'output window, operand 0']
    #allocation4 [shape = 's32[2]{0}', space=sflag, size = 0x8, scoped, tag = 'scoped memory for occupancy_network_forward.3']
    %18 = vsyncpa [#allocation4], 0
    %s19 = scalar_lea.sflag [#allocation4], 1
    %20 = vsyncpa %s19, 0
    loop: start=0, step=1, limit=4
    $region2: #{occupancy_network_forward.3} parent=1 // loop_pre_header
      _
    $region3: #{occupancy_network_forward.3} parent=1 // loop_header
      %s22 = sphi 0, %s26
      %p23 = scmp.ge.s32.totalorder %s22, 4
      %s29 = sphi 0, %s41
      %s30 = sphi 0, %s37
      %s31 = sphi 0, %s29
      %s32 = sphi 0, %s30
      %s33 = sphi 0, %s31
      %s34 = sphi 0, %s32
      %s46 = sphi 0, %s48
      %s49 = sphi 0, %s46
      %s50 = sphi 0, %s49
      %s66 = sphi 0, %s50
      %s74 = sphi 0, %s76
      %s77 = sphi 0, %s74
      %s78 = sphi 0, %s77
      %s94 = sphi 0, %s78
      %s102 = sphi 0, %s104
      %s105 = sphi 0, %s102
      %s106 = sphi 0, %s105
      %s122 = sphi 0, %s106
      %s128 = sphi 0, %s130
      %s131 = sphi 0, %s128
      %s132 = sphi 0, %s131
      %s148 = sphi 0, %s132
      %s152 = sphi 0, %s152
      %s154 = sphi 0, %s152
      %s155 = sphi 0, %s154
      %s169 = sphi 0, %s155
      %s173 = sphi 0, %s173
      %s175 = sphi 0, %s173
      %s176 = sphi 0, %s175
      %s190 = sphi 0, %s176
      %s196 = sphi 0, %s198
      %s199 = sphi 0, %s196
      %s200 = sphi 0, %s199
      %s216 = sphi 0, %s200
      %s220 = sphi 0, %s220
      %s222 = sphi 0, %s220
      %s223 = sphi 0, %s222
      %s237 = sphi 0, %s223
      %s241 = sphi 0, %s241
      %s243 = sphi 0, %s241
      %s244 = sphi 0, %s243
      %s258 = sphi 0, %s244
      %s262 = sphi 0, %s262
      %s264 = sphi 0, %s262
      %s265 = sphi 0, %s264
      %s279 = sphi 0, %s265
      %s283 = sphi 0, %s283
      %s285 = sphi 0, %s283
      %s286 = sphi 0, %s285
      %s300 = sphi 0, %s286
      %s308 = sphi 0, %s310
      %s311 = sphi 0, %s308
      %s312 = sphi 0, %s311
      %s328 = sphi 0, %s312
    $region4: #{occupancy_network_forward.3} parent=1 // loop_header_branch
      %25 = sbr.rel (%p23) target = $region8
    $region5: #{occupancy_network_forward.3} parent=1 // loop_body
      %s27 = ssub.s32 %s22, 1
      %s28 = ssub.s32 %s22, 2
      %s35 = sadd.s32 1, %s30
      %p36 = scmp.ge.s32.totalorder %s35, 1
      %s37 = scalar_select %p36, 0, %s35
      %s38 = sadd.s32 1, %s29
      %s39 = scalar_select %p36, %s38, %s29
      %p40 = scmp.ge.s32.totalorder %s39, 2
      %s41 = scalar_select %p40, 0, %s39
      %s42 = ssub.s32 %s29, %s41
      %s43 = ssub.s32 %s30, %s37
      %s44 = sor.u32 %s42, %s43
      %p45 = scmp.eq.s32.totalorder %s44, 0
      %s47 = sadd.s32 %s46, 1
      %s48 = scalar_select %p45, %s46, %s47
      %p51 = pneg %p45
      %p52 = scmp.eq.s32.totalorder %s22, 1
      %p53 = por %p51, %p52
      %p54 = scmp.ne.s32.totalorder %s46, %s49
      %p55 = scmp.eq.s32.totalorder %s22, 0
      %p56 = por %p54, %p55
      %p57 = scmp.ne.s32.totalorder %s46, %s49
      %p58 = scmp.eq.s32.totalorder %s27, 1
      %p59 = por %p57, %p58
      %p60 = scmp.ne.s32.totalorder %s49, %s50
      %p61 = scmp.eq.s32.totalorder %s27, 0
      %p62 = por %p60, %p61
      %p63 = scmp.ne.s32.totalorder %s49, %s50
      %p64 = scmp.eq.s32.totalorder %s28, 1
      %p65 = por %p63, %p64
      %p67 = scmp.ne.s32.totalorder %s50, %s66
      %p68 = scmp.eq.s32.totalorder %s28, 0
      %p69 = por %p67, %p68
      %s70 = ssub.s32 %s29, %s41
      %s71 = ssub.s32 %s30, %s37
      %s72 = sor.u32 %s70, %s71
      %p73 = scmp.eq.s32.totalorder %s72, 0
      %s75 = sadd.s32 %s74, 1
      %s76 = scalar_select %p73, %s74, %s75
      %p79 = pneg %p73
      %p80 = scmp.eq.s32.totalorder %s22, 1
      %p81 = por %p79, %p80
      %p82 = scmp.ne.s32.totalorder %s74, %s77
      %p83 = scmp.eq.s32.totalorder %s22, 0
      %p84 = por %p82, %p83
      %p85 = scmp.ne.s32.totalorder %s74, %s77
      %p86 = scmp.eq.s32.totalorder %s27, 1
      %p87 = por %p85, %p86
      %p88 = scmp.ne.s32.totalorder %s77, %s78
      %p89 = scmp.eq.s32.totalorder %s27, 0
      %p90 = por %p88, %p89
      %p91 = scmp.ne.s32.totalorder %s77, %s78
      %p92 = scmp.eq.s32.totalorder %s28, 1
      %p93 = por %p91, %p92
      %p95 = scmp.ne.s32.totalorder %s78, %s94
      %p96 = scmp.eq.s32.totalorder %s28, 0
      %p97 = por %p95, %p96
      %s98 = ssub.s32 %s29, %s41
      %s99 = ssub.s32 %s30, %s37
      %s100 = sor.u32 %s98, %s99
      %p101 = scmp.eq.s32.totalorder %s100, 0
      %s103 = sadd.s32 %s102, 1
      %s104 = scalar_select %p101, %s102, %s103
      %p107 = pneg %p101
      %p108 = scmp.eq.s32.totalorder %s22, 1
      %p109 = por %p107, %p108
      %p110 = scmp.ne.s32.totalorder %s102, %s105
      %p111 = scmp.eq.s32.totalorder %s22, 0
      %p112 = por %p110, %p111
      %p113 = scmp.ne.s32.totalorder %s102, %s105
      %p114 = scmp.eq.s32.totalorder %s27, 1
      %p115 = por %p113, %p114
      %p116 = scmp.ne.s32.totalorder %s105, %s106
      %p117 = scmp.eq.s32.totalorder %s27, 0
      %p118 = por %p116, %p117
      %p119 = scmp.ne.s32.totalorder %s105, %s106
      %p120 = scmp.eq.s32.totalorder %s28, 1
      %p121 = por %p119, %p120
      %p123 = scmp.ne.s32.totalorder %s106, %s122
      %p124 = scmp.eq.s32.totalorder %s28, 0
      %p125 = por %p123, %p124
      %s126 = ssub.s32 %s29, %s41
      %p127 = scmp.eq.s32.totalorder %s126, 0
      %s129 = sadd.s32 %s128, 1
      %s130 = scalar_select %p127, %s128, %s129
      %p133 = pneg %p127
      %p134 = scmp.eq.s32.totalorder %s22, 1
      %p135 = por %p133, %p134
      %p136 = scmp.ne.s32.totalorder %s128, %s131
      %p137 = scmp.eq.s32.totalorder %s22, 0
      %p138 = por %p136, %p137
      %p139 = scmp.ne.s32.totalorder %s128, %s131
      %p140 = scmp.eq.s32.totalorder %s27, 1
      %p141 = por %p139, %p140
      %p142 = scmp.ne.s32.totalorder %s131, %s132
      %p143 = scmp.eq.s32.totalorder %s27, 0
      %p144 = por %p142, %p143
      %p145 = scmp.ne.s32.totalorder %s131, %s132
      %p146 = scmp.eq.s32.totalorder %s28, 1
      %p147 = por %p145, %p146
      %p149 = scmp.ne.s32.totalorder %s132, %s148
      %p150 = scmp.eq.s32.totalorder %s28, 0
      %p151 = por %p149, %p150
      %s153 = sadd.s32 %s152, 1
      %p156 = scmp.eq.s32.totalorder %s22, 1
      %p157 = scmp.ne.s32.totalorder %s152, %s154
      %p158 = scmp.eq.s32.totalorder %s22, 0
      %p159 = por %p157, %p158
      %p160 = scmp.ne.s32.totalorder %s152, %s154
      %p161 = scmp.eq.s32.totalorder %s27, 1
      %p162 = por %p160, %p161
      %p163 = scmp.ne.s32.totalorder %s154, %s155
      %p164 = scmp.eq.s32.totalorder %s27, 0
      %p165 = por %p163, %p164
      %p166 = scmp.ne.s32.totalorder %s154, %s155
      %p167 = scmp.eq.s32.totalorder %s28, 1
      %p168 = por %p166, %p167
      %p170 = scmp.ne.s32.totalorder %s155, %s169
      %p171 = scmp.eq.s32.totalorder %s28, 0
      %p172 = por %p170, %p171
      %s174 = sadd.s32 %s173, 1
      %p177 = scmp.eq.s32.totalorder %s22, 1
      %p178 = scmp.ne.s32.totalorder %s173, %s175
      %p179 = scmp.eq.s32.totalorder %s22, 0
      %p180 = por %p178, %p179
      %p181 = scmp.ne.s32.totalorder %s173, %s175
      %p182 = scmp.eq.s32.totalorder %s27, 1
      %p183 = por %p181, %p182
      %p184 = scmp.ne.s32.totalorder %s175, %s176
      %p185 = scmp.eq.s32.totalorder %s27, 0
      %p186 = por %p184, %p185
      %p187 = scmp.ne.s32.totalorder %s175, %s176
      %p188 = scmp.eq.s32.totalorder %s28, 1
      %p189 = por %p187, %p188
      %p191 = scmp.ne.s32.totalorder %s176, %s190
      %p192 = scmp.eq.s32.totalorder %s28, 0
      %p193 = por %p191, %p192
      %s194 = ssub.s32 %s29, %s41
      %p195 = scmp.eq.s32.totalorder %s194, 0
      %s197 = sadd.s32 %s196, 1
      %s198 = scalar_select %p195, %s196, %s197
      %p201 = pneg %p195
      %p202 = scmp.eq.s32.totalorder %s22, 1
      %p203 = por %p201, %p202
      %p204 = scmp.ne.s32.totalorder %s196, %s199
      %p205 = scmp.eq.s32.totalorder %s22, 0
      %p206 = por %p204, %p205
      %p207 = scmp.ne.s32.totalorder %s196, %s199
      %p208 = scmp.eq.s32.totalorder %s27, 1
      %p209 = por %p207, %p208
      %p210 = scmp.ne.s32.totalorder %s199, %s200
      %p211 = scmp.eq.s32.totalorder %s27, 0
      %p212 = por %p210, %p211
      %p213 = scmp.ne.s32.totalorder %s199, %s200
      %p214 = scmp.eq.s32.totalorder %s28, 1
      %p215 = por %p213, %p214
      %p217 = scmp.ne.s32.totalorder %s200, %s216
      %p218 = scmp.eq.s32.totalorder %s28, 0
      %p219 = por %p217, %p218
      %s221 = sadd.s32 %s220, 1
      %p224 = scmp.eq.s32.totalorder %s22, 1
      %p225 = scmp.ne.s32.totalorder %s220, %s222
      %p226 = scmp.eq.s32.totalorder %s22, 0
      %p227 = por %p225, %p226
      %p228 = scmp.ne.s32.totalorder %s220, %s222
      %p229 = scmp.eq.s32.totalorder %s27, 1
      %p230 = por %p228, %p229
      %p231 = scmp.ne.s32.totalorder %s222, %s223
      %p232 = scmp.eq.s32.totalorder %s27, 0
      %p233 = por %p231, %p232
      %p234 = scmp.ne.s32.totalorder %s222, %s223
      %p235 = scmp.eq.s32.totalorder %s28, 1
      %p236 = por %p234, %p235
      %p238 = scmp.ne.s32.totalorder %s223, %s237
      %p239 = scmp.eq.s32.totalorder %s28, 0
      %p240 = por %p238, %p239
      %s242 = sadd.s32 %s241, 1
      %p245 = scmp.eq.s32.totalorder %s22, 1
      %p246 = scmp.ne.s32.totalorder %s241, %s243
      %p247 = scmp.eq.s32.totalorder %s22, 0
      %p248 = por %p246, %p247
      %p249 = scmp.ne.s32.totalorder %s241, %s243
      %p250 = scmp.eq.s32.totalorder %s27, 1
      %p251 = por %p249, %p250
      %p252 = scmp.ne.s32.totalorder %s243, %s244
      %p253 = scmp.eq.s32.totalorder %s27, 0
      %p254 = por %p252, %p253
      %p255 = scmp.ne.s32.totalorder %s243, %s244
      %p256 = scmp.eq.s32.totalorder %s28, 1
      %p257 = por %p255, %p256
      %p259 = scmp.ne.s32.totalorder %s244, %s258
      %p260 = scmp.eq.s32.totalorder %s28, 0
      %p261 = por %p259, %p260
      %s263 = sadd.s32 %s262, 1
      %p266 = scmp.eq.s32.totalorder %s22, 1
      %p267 = scmp.ne.s32.totalorder %s262, %s264
      %p268 = scmp.eq.s32.totalorder %s22, 0
      %p269 = por %p267, %p268
      %p270 = scmp.ne.s32.totalorder %s262, %s264
      %p271 = scmp.eq.s32.totalorder %s27, 1
      %p272 = por %p270, %p271
      %p273 = scmp.ne.s32.totalorder %s264, %s265
      %p274 = scmp.eq.s32.totalorder %s27, 0
      %p275 = por %p273, %p274
      %p276 = scmp.ne.s32.totalorder %s264, %s265
      %p277 = scmp.eq.s32.totalorder %s28, 1
      %p278 = por %p276, %p277
      %p280 = scmp.ne.s32.totalorder %s265, %s279
      %p281 = scmp.eq.s32.totalorder %s28, 0
      %p282 = por %p280, %p281
      %s284 = sadd.s32 %s283, 1
      %p287 = scmp.eq.s32.totalorder %s22, 1
      %p288 = scmp.ne.s32.totalorder %s283, %s285
      %p289 = scmp.eq.s32.totalorder %s22, 0
      %p290 = por %p288, %p289
      %p291 = scmp.ne.s32.totalorder %s283, %s285
      %p292 = scmp.eq.s32.totalorder %s27, 1
      %p293 = por %p291, %p292
      %p294 = scmp.ne.s32.totalorder %s285, %s286
      %p295 = scmp.eq.s32.totalorder %s27, 0
      %p296 = por %p294, %p295
      %p297 = scmp.ne.s32.totalorder %s285, %s286
      %p298 = scmp.eq.s32.totalorder %s28, 1
      %p299 = por %p297, %p298
      %p301 = scmp.ne.s32.totalorder %s286, %s300
      %p302 = scmp.eq.s32.totalorder %s28, 0
      %p303 = por %p301, %p302
      %s304 = ssub.s32 %s29, %s41
      %s305 = ssub.s32 %s30, %s37
      %s306 = sor.u32 %s304, %s305
      %p307 = scmp.eq.s32.totalorder %s306, 0
      %s309 = sadd.s32 %s308, 1
      %s310 = scalar_select %p307, %s308, %s309
      %p313 = pneg %p307
      %p314 = scmp.eq.s32.totalorder %s22, 1
      %p315 = por %p313, %p314
      %p316 = scmp.ne.s32.totalorder %s308, %s311
      %p317 = scmp.eq.s32.totalorder %s22, 0
      %p318 = por %p316, %p317
      %p319 = scmp.ne.s32.totalorder %s308, %s311
      %p320 = scmp.eq.s32.totalorder %s27, 1
      %p321 = por %p319, %p320
      %p322 = scmp.ne.s32.totalorder %s311, %s312
      %p323 = scmp.eq.s32.totalorder %s27, 0
      %p324 = por %p322, %p323
      %p325 = scmp.ne.s32.totalorder %s311, %s312
      %p326 = scmp.eq.s32.totalorder %s28, 1
      %p327 = por %p325, %p326
      %p329 = scmp.ne.s32.totalorder %s312, %s328
      %p330 = scmp.eq.s32.totalorder %s28, 0
      %p331 = por %p329, %p330
      %p332 = scmp.le.s32.totalorder 1, %s22
      %p333 = scmp.lt.s32.totalorder %s22, 3
      %p334 = pnand %p332, %p333
      %p335 = pneg %p334
      // Predicated region
      $region9: #{occupancy_network_forward.3} parent=5 // pred_check
        _
      $region10: #{occupancy_network_forward.3} parent=5 // pred_check_branch
        %337 = sbr.rel (%p334) target = $region12
      $region11: #{occupancy_network_forward.3} parent=5 // pred_region
        %s338 = ssub.s32 %s22, 1
        // Predicated region
        $region13: #{occupancy_network_forward.3} parent=11 // pred_check
          %p339 = pneg %p165
        $region14: #{occupancy_network_forward.3} parent=11 // pred_check_branch
          %341 = sbr.rel (%p339) target = $region16
        $region15: #{occupancy_network_forward.3} parent=11 // pred_region
          _
        $region16: #{occupancy_network_forward.3} parent=11 // pred_fallthru
          _
        // Predicated region
        $region17: #{occupancy_network_forward.3} parent=11 // pred_check
          %p342 = pneg %p186
        $region18: #{occupancy_network_forward.3} parent=11 // pred_check_branch
          %344 = sbr.rel (%p342) target = $region20
        $region19: #{occupancy_network_forward.3} parent=11 // pred_region
          _
        $region20: #{occupancy_network_forward.3} parent=11 // pred_fallthru
          _
        // Predicated region
        $region21: #{occupancy_network_forward.3} parent=11 // pred_check
          %p345 = pneg %p233
        $region22: #{occupancy_network_forward.3} parent=11 // pred_check_branch
          %347 = sbr.rel (%p345) target = $region24
        $region23: #{occupancy_network_forward.3} parent=11 // pred_region
          _
        $region24: #{occupancy_network_forward.3} parent=11 // pred_fallthru
          _
        // Predicated region
        $region25: #{occupancy_network_forward.3} parent=11 // pred_check
          %p348 = pneg %p254
        $region26: #{occupancy_network_forward.3} parent=11 // pred_check_branch
          %350 = sbr.rel (%p348) target = $region28
        $region27: #{occupancy_network_forward.3} parent=11 // pred_region
          _
        $region28: #{occupancy_network_forward.3} parent=11 // pred_fallthru
          _
        // Predicated region
        $region29: #{occupancy_network_forward.3} parent=11 // pred_check
          %p351 = pneg %p275
        $region30: #{occupancy_network_forward.3} parent=11 // pred_check_branch
          %353 = sbr.rel (%p351) target = $region32
        $region31: #{occupancy_network_forward.3} parent=11 // pred_region
          _
        $region32: #{occupancy_network_forward.3} parent=11 // pred_fallthru
          _
        // Predicated region
        $region33: #{occupancy_network_forward.3} parent=11 // pred_check
          %p354 = pneg %p296
        $region34: #{occupancy_network_forward.3} parent=11 // pred_check_branch
          %356 = sbr.rel (%p354) target = $region36
        $region35: #{occupancy_network_forward.3} parent=11 // pred_region
          _
        $region36: #{occupancy_network_forward.3} parent=11 // pred_fallthru
          _
      $region12: #{occupancy_network_forward.3} parent=5 // pred_fallthru
        _
      %p357 = scmp.lt.s32.totalorder %s22, 2
      // Predicated region
      $region37: #{occupancy_network_forward.3} parent=5 // pred_check
        %p358 = pneg %p357
      $region38: #{occupancy_network_forward.3} parent=5 // pred_check_branch
        %360 = sbr.rel (%p358) target = $region40
      $region39: #{occupancy_network_forward.3} parent=5 // pred_region
        // Predicated region
        $region41: #{occupancy_network_forward.3} parent=39 // pred_check
          %p361 = pneg %p56
        $region42: #{occupancy_network_forward.3} parent=39 // pred_check_branch
          %363 = sbr.rel (%p361) target = $region44
        $region43: #{occupancy_network_forward.3} parent=39 // pred_region
          %p364 = scmp.lt.s32.totalorder %s29, 1
          %s365 = scalar_select %p364, %s29, 1
          %p366 = scmp.lt.s32.totalorder %s30, 0
          %s367 = scalar_select %p366, %s30, 0
          %s368 = sadd.s32 %s367, %s365
          %s369 = smul.addr %s368, 4
          %s370 = scalar_lea.vmem %s0, %s369
        $region44: #{occupancy_network_forward.3} parent=39 // pred_fallthru
          _
        // Predicated region
        $region45: #{occupancy_network_forward.3} parent=39 // pred_check
          %p371 = pneg %p84
        $region46: #{occupancy_network_forward.3} parent=39 // pred_check_branch
          %373 = sbr.rel (%p371) target = $region48
        $region47: #{occupancy_network_forward.3} parent=39 // pred_region
          %p374 = scmp.lt.s32.totalorder %s29, 1
          %s375 = scalar_select %p374, %s29, 1
          %p376 = scmp.lt.s32.totalorder %s30, 0
          %s377 = scalar_select %p376, %s30, 0
          %s378 = sadd.s32 %s377, %s375
          %s379 = smul.addr %s378, 4
          %s380 = scalar_lea.vmem %s1, %s379
        $region48: #{occupancy_network_forward.3} parent=39 // pred_fallthru
          _
        // Predicated region
        $region49: #{occupancy_network_forward.3} parent=39 // pred_check
          %p381 = pneg %p112
        $region50: #{occupancy_network_forward.3} parent=39 // pred_check_branch
          %383 = sbr.rel (%p381) target = $region52
        $region51: #{occupancy_network_forward.3} parent=39 // pred_region
          %p384 = scmp.lt.s32.totalorder %s29, 1
          %s385 = scalar_select %p384, %s29, 1
          %p386 = scmp.lt.s32.totalorder %s30, 0
          %s387 = scalar_select %p386, %s30, 0
          %s388 = sadd.s32 %s387, %s385
          %s389 = smul.addr %s388, 4
          %s390 = scalar_lea.vmem %s2, %s389
        $region52: #{occupancy_network_forward.3} parent=39 // pred_fallthru
          _
        // Predicated region
        $region53: #{occupancy_network_forward.3} parent=39 // pred_check
          %p391 = pneg %p138
        $region54: #{occupancy_network_forward.3} parent=39 // pred_check_branch
          %393 = sbr.rel (%p391) target = $region56
        $region55: #{occupancy_network_forward.3} parent=39 // pred_region
          %p394 = scmp.lt.s32.totalorder %s29, 1
          %s395 = scalar_select %p394, %s29, 1
          %s396 = smul.addr %s395, 24
          %s397 = smul.addr %s396, 4
          %s398 = scalar_lea.vmem %s3, %s397
        $region56: #{occupancy_network_forward.3} parent=39 // pred_fallthru
          _
        // Predicated region
        $region57: #{occupancy_network_forward.3} parent=39 // pred_check
          %p399 = pneg %p206
        $region58: #{occupancy_network_forward.3} parent=39 // pred_check_branch
          %401 = sbr.rel (%p399) target = $region60
        $region59: #{occupancy_network_forward.3} parent=39 // pred_region
          %p402 = scmp.lt.s32.totalorder %s29, 1
          %s403 = scalar_select %p402, %s29, 1
          %s404 = smul.addr %s403, 16
          %s405 = smul.addr %s404, 8
          %s406 = scalar_lea.vmem %s6, %s405
        $region60: #{occupancy_network_forward.3} parent=39 // pred_fallthru
          _
      $region40: #{occupancy_network_forward.3} parent=5 // pred_fallthru
        _
      %p407 = scmp.le.s32.totalorder 1, %s22
      %p408 = scmp.lt.s32.totalorder %s22, 3
      %p409 = pnand %p407, %p408
      %p410 = pneg %p409
      // Predicated region
      $region61: #{occupancy_network_forward.3} parent=5 // pred_check
        _
      $region62: #{occupancy_network_forward.3} parent=5 // pred_check_branch
        %412 = sbr.rel (%p409) target = $region64
      $region63: #{occupancy_network_forward.3} parent=5 // pred_region
        %s413 = ssub.s32 %s22, 1
        %p414 = scmp.lt.s32.totalorder %s31, 1
        %s415 = scalar_select %p414, %s31, 1
        %p416 = scmp.lt.s32.totalorder %s32, 0
        %s417 = scalar_select %p416, %s32, 0
        %s418 = sadd.s32 %s417, %s415
        %s419 = smul.addr %s418, 4
        %s420 = scalar_lea.vmem %s0, %s419
        %p421 = pneg %p62
        %p422 = pneg %p59
        %p423 = scmp.lt.s32.totalorder %s31, 1
        %s424 = scalar_select %p423, %s31, 1
        %p425 = scmp.lt.s32.totalorder %s32, 0
        %s426 = scalar_select %p425, %s32, 0
        %s427 = sadd.s32 %s426, %s424
        %s428 = smul.addr %s427, 4
        %s429 = scalar_lea.vmem %s1, %s428
        %p430 = pneg %p90
        %p431 = pneg %p87
        %p432 = scmp.lt.s32.totalorder %s31, 1
        %s433 = scalar_select %p432, %s31, 1
        %p434 = scmp.lt.s32.totalorder %s32, 0
        %s435 = scalar_select %p434, %s32, 0
        %s436 = sadd.s32 %s435, %s433
        %s437 = smul.addr %s436, 4
        %s438 = scalar_lea.vmem %s2, %s437
        %p439 = pneg %p118
        %p440 = pneg %p115
        %p441 = scmp.lt.s32.totalorder %s31, 1
        %s442 = scalar_select %p441, %s31, 1
        %s443 = smul.addr %s442, 24
        %s444 = smul.addr %s443, 4
        %s445 = scalar_lea.vmem %s3, %s444
        %p446 = pneg %p144
        %p447 = pneg %p141
        %p448 = pneg %p165
        %p449 = pneg %p162
        %p450 = pneg %p186
        %p451 = pneg %p183
        %p452 = scmp.lt.s32.totalorder %s31, 1
        %s453 = scalar_select %p452, %s31, 1
        %s454 = smul.addr %s453, 16
        %s455 = smul.addr %s454, 8
        %s456 = scalar_lea.vmem %s6, %s455
        %p457 = pneg %p212
        %p458 = pneg %p209
        %p459 = pneg %p233
        %p460 = pneg %p230
        %p461 = pneg %p254
        %p462 = pneg %p251
        %p463 = pneg %p275
        %p464 = pneg %p272
        %p465 = pneg %p296
        %p466 = pneg %p293
        %p467 = pneg %p324
        %p468 = pneg %p321
        %s469 = sand.u32 %s311, 1
        %s470 = scalar_lea.sflag [#allocation4], %s469
        %s471 = sand.u32 %s311, 1
        %s472 = scalar_lea.vmem [#allocation3], %s471
        %p473 = scmp.lt.s32.totalorder %s31, 1
        %s474 = scalar_select %p473, %s31, 1
        %p475 = scmp.lt.s32.totalorder %s32, 0
        %s476 = scalar_select %p475, %s32, 0
        %s477 = sadd.s32 %s476, %s474
        %s478 = smul.addr %s477, 4
        %s479 = scalar_lea.vmem %s0, %s478
        %p480 = scmp.lt.s32.totalorder %s31, 1
        %s481 = scalar_select %p480, %s31, 1
        %p482 = scmp.lt.s32.totalorder %s32, 0
        %s483 = scalar_select %p482, %s32, 0
        %s484 = sadd.s32 %s483, %s481
        %s485 = smul.addr %s484, 4
        %s486 = scalar_lea.vmem %s1, %s485
        %p487 = scmp.lt.s32.totalorder %s31, 1
        %s488 = scalar_select %p487, %s31, 1
        %p489 = scmp.lt.s32.totalorder %s32, 0
        %s490 = scalar_select %p489, %s32, 0
        %s491 = sadd.s32 %s490, %s488
        %s492 = smul.addr %s491, 4
        %s493 = scalar_lea.vmem %s2, %s492
        %p494 = scmp.lt.s32.totalorder %s31, 1
        %s495 = scalar_select %p494, %s31, 1
        %s496 = smul.addr %s495, 24
        %s497 = smul.addr %s496, 4
        %s498 = scalar_lea.vmem %s3, %s497
        %p499 = scmp.lt.s32.totalorder %s31, 1
        %s500 = scalar_select %p499, %s31, 1
        %s501 = smul.addr %s500, 16
        %s502 = smul.addr %s501, 8
        %s503 = scalar_lea.vmem %s6, %s502
        %v505 = vlaneseq
        %v506 = vshrl.u32 %v505, 7
        %v507 = vadd.s32 %v506, 8
        %v508 = vadd.s32 %v506, 16
        %v509 = vadd.s32 %v506, 24
        %v510 = vadd.s32 %v506, 32
        %v511 = vadd.s32 %v506, 40
        %v512 = vadd.s32 %v506, 48
        %v513 = vadd.s32 %v506, 56
        %v514 = vadd.s32 %v506, 64
        %v515 = vadd.s32 %v506, 72
        %v516 = vadd.s32 %v506, 80
        %v517 = vadd.s32 %v506, 88
        %v518 = vadd.s32 %v506, 96
        %v519 = vadd.s32 %v506, 104
        %v520 = vadd.s32 %v506, 112
        %v521 = vadd.s32 %v506, 120
        %v522 = vadd.s32 %v506, 128
        %v523 = vadd.s32 %v506, 136
        %v524 = vadd.s32 %v506, 144
        %v525 = vadd.s32 %v506, 152
        %v526 = vadd.s32 %v506, 160
        %v527 = vadd.s32 %v506, 168
        %v528 = vadd.s32 %v506, 176
        %v529 = vadd.s32 %v506, 184
        %v530 = vadd.s32 %v506, 192
        %v531 = vadd.s32 %v506, 200
        %v532 = vadd.s32 %v506, 208
        %v533 = vadd.s32 %v506, 216
        %v534 = vadd.s32 %v506, 224
        %v535 = vadd.s32 %v506, 232
        %v536 = vadd.s32 %v506, 240
        %v537 = vadd.s32 %v506, 248
        %v538 = vadd.s32 %v506, 256
        %v539 = vadd.s32 %v506, 264
        %v540 = vadd.s32 %v506, 272
        %v541 = vadd.s32 %v506, 280
        %v542 = vadd.s32 %v506, 288
        %v543 = vadd.s32 %v506, 296
        %v544 = vadd.s32 %v506, 304
        %v545 = vadd.s32 %v506, 312
        %v546 = vadd.s32 %v506, 320
        %v547 = vadd.s32 %v506, 328
        %v548 = vadd.s32 %v506, 336
        %v549 = vadd.s32 %v506, 344
        %v550 = vadd.s32 %v506, 352
        %v551 = vadd.s32 %v506, 360
        %v552 = vadd.s32 %v506, 368
        %v553 = vadd.s32 %v506, 376
        %v554 = vld [vmem:[%s486] sm:$0x1]
        %v555 = vlaneseq
        %v556 = vshrl.u32 %v555, 7
        %v557 = vsub.s32 0, %v556
        %v558 = vrot.slane %v554, %v557
        %vm559 = vcmp.eq.s32.totalorder %v506, %v558
        %vm560 = vcmp.eq.s32.totalorder %v507, %v558
        %vm561 = vcmp.eq.s32.totalorder %v508, %v558
        %vm562 = vcmp.eq.s32.totalorder %v509, %v558
        %vm563 = vcmp.eq.s32.totalorder %v510, %v558
        %vm564 = vcmp.eq.s32.totalorder %v511, %v558
        %vm565 = vcmp.eq.s32.totalorder %v512, %v558
        %vm566 = vcmp.eq.s32.totalorder %v513, %v558
        %vm567 = vcmp.eq.s32.totalorder %v514, %v558
        %vm568 = vcmp.eq.s32.totalorder %v515, %v558
        %vm569 = vcmp.eq.s32.totalorder %v516, %v558
        %vm570 = vcmp.eq.s32.totalorder %v517, %v558
        %vm571 = vcmp.eq.s32.totalorder %v518, %v558
        %vm572 = vcmp.eq.s32.totalorder %v519, %v558
        %vm573 = vcmp.eq.s32.totalorder %v520, %v558
        %vm574 = vcmp.eq.s32.totalorder %v521, %v558
        %vm575 = vcmp.eq.s32.totalorder %v522, %v558
        %vm576 = vcmp.eq.s32.totalorder %v523, %v558
        %vm577 = vcmp.eq.s32.totalorder %v524, %v558
        %vm578 = vcmp.eq.s32.totalorder %v525, %v558
        %vm579 = vcmp.eq.s32.totalorder %v526, %v558
        %vm580 = vcmp.eq.s32.totalorder %v527, %v558
        %vm581 = vcmp.eq.s32.totalorder %v528, %v558
        %vm582 = vcmp.eq.s32.totalorder %v529, %v558
        %vm583 = vcmp.eq.s32.totalorder %v530, %v558
        %vm584 = vcmp.eq.s32.totalorder %v531, %v558
        %vm585 = vcmp.eq.s32.totalorder %v532, %v558
        %vm586 = vcmp.eq.s32.totalorder %v533, %v558
        %vm587 = vcmp.eq.s32.totalorder %v534, %v558
        %vm588 = vcmp.eq.s32.totalorder %v535, %v558
        %vm589 = vcmp.eq.s32.totalorder %v536, %v558
        %vm590 = vcmp.eq.s32.totalorder %v537, %v558
        %vm591 = vcmp.eq.s32.totalorder %v538, %v558
        %vm592 = vcmp.eq.s32.totalorder %v539, %v558
        %vm593 = vcmp.eq.s32.totalorder %v540, %v558
        %vm594 = vcmp.eq.s32.totalorder %v541, %v558
        %vm595 = vcmp.eq.s32.totalorder %v542, %v558
        %vm596 = vcmp.eq.s32.totalorder %v543, %v558
        %vm597 = vcmp.eq.s32.totalorder %v544, %v558
        %vm598 = vcmp.eq.s32.totalorder %v545, %v558
        %vm599 = vcmp.eq.s32.totalorder %v546, %v558
        %vm600 = vcmp.eq.s32.totalorder %v547, %v558
        %vm601 = vcmp.eq.s32.totalorder %v548, %v558
        %vm602 = vcmp.eq.s32.totalorder %v549, %v558
        %vm603 = vcmp.eq.s32.totalorder %v550, %v558
        %vm604 = vcmp.eq.s32.totalorder %v551, %v558
        %vm605 = vcmp.eq.s32.totalorder %v552, %v558
        %vm606 = vcmp.eq.s32.totalorder %v553, %v558
        %v607 = vld [vmem:[%s493] sm:$0x1]
        %v608 = vlaneseq
        %v609 = vshrl.u32 %v608, 7
        %v610 = vsub.s32 0, %v609
        %v611 = vrot.slane %v607, %v610
        %v612 = vsel %vm559, %v611, 0.0
        %v613 = vsel %vm560, %v611, 0.0
        %v614 = vsel %vm561, %v611, 0.0
        %v615 = vsel %vm562, %v611, 0.0
        %v616 = vsel %vm563, %v611, 0.0
        %v617 = vsel %vm564, %v611, 0.0
        %v618 = vsel %vm565, %v611, 0.0
        %v619 = vsel %vm566, %v611, 0.0
        %v620 = vsel %vm567, %v611, 0.0
        %v621 = vsel %vm568, %v611, 0.0
        %v622 = vsel %vm569, %v611, 0.0
        %v623 = vsel %vm570, %v611, 0.0
        %v624 = vsel %vm571, %v611, 0.0
        %v625 = vsel %vm572, %v611, 0.0
        %v626 = vsel %vm573, %v611, 0.0
        %v627 = vsel %vm574, %v611, 0.0
        %v628 = vsel %vm575, %v611, 0.0
        %v629 = vsel %vm576, %v611, 0.0
        %v630 = vsel %vm577, %v611, 0.0
        %v631 = vsel %vm578, %v611, 0.0
        %v632 = vsel %vm579, %v611, 0.0
        %v633 = vsel %vm580, %v611, 0.0
        %v634 = vsel %vm581, %v611, 0.0
        %v635 = vsel %vm582, %v611, 0.0
        %v636 = vsel %vm583, %v611, 0.0
        %v637 = vsel %vm584, %v611, 0.0
        %v638 = vsel %vm585, %v611, 0.0
        %v639 = vsel %vm586, %v611, 0.0
        %v640 = vsel %vm587, %v611, 0.0
        %v641 = vsel %vm588, %v611, 0.0
        %v642 = vsel %vm589, %v611, 0.0
        %v643 = vsel %vm590, %v611, 0.0
        %v644 = vsel %vm591, %v611, 0.0
        %v645 = vsel %vm592, %v611, 0.0
        %v646 = vsel %vm593, %v611, 0.0
        %v647 = vsel %vm594, %v611, 0.0
        %v648 = vsel %vm595, %v611, 0.0
        %v649 = vsel %vm596, %v611, 0.0
        %v650 = vsel %vm597, %v611, 0.0
        %v651 = vsel %vm598, %v611, 0.0
        %v652 = vsel %vm599, %v611, 0.0
        %v653 = vsel %vm600, %v611, 0.0
        %v654 = vsel %vm601, %v611, 0.0
        %v655 = vsel %vm602, %v611, 0.0
        %v656 = vsel %vm603, %v611, 0.0
        %v657 = vsel %vm604, %v611, 0.0
        %v658 = vsel %vm605, %v611, 0.0
        %v659 = vsel %vm606, %v611, 0.0
        %v660 = vadd.f32 %v612, 0.0
        %v661 = vadd.f32 %v613, 0.0
        %v662 = vadd.f32 %v614, 0.0
        %v663 = vadd.f32 %v615, 0.0
        %v664 = vadd.f32 %v616, 0.0
        %v665 = vadd.f32 %v617, 0.0
        %v666 = vadd.f32 %v618, 0.0
        %v667 = vadd.f32 %v619, 0.0
        %v668 = vadd.f32 %v620, 0.0
        %v669 = vadd.f32 %v621, 0.0
        %v670 = vadd.f32 %v622, 0.0
        %v671 = vadd.f32 %v623, 0.0
        %v672 = vadd.f32 %v624, 0.0
        %v673 = vadd.f32 %v625, 0.0
        %v674 = vadd.f32 %v626, 0.0
        %v675 = vadd.f32 %v627, 0.0
        %v676 = vadd.f32 %v628, 0.0
        %v677 = vadd.f32 %v629, 0.0
        %v678 = vadd.f32 %v630, 0.0
        %v679 = vadd.f32 %v631, 0.0
        %v680 = vadd.f32 %v632, 0.0
        %v681 = vadd.f32 %v633, 0.0
        %v682 = vadd.f32 %v634, 0.0
        %v683 = vadd.f32 %v635, 0.0
        %v684 = vadd.f32 %v636, 0.0
        %v685 = vadd.f32 %v637, 0.0
        %v686 = vadd.f32 %v638, 0.0
        %v687 = vadd.f32 %v639, 0.0
        %v688 = vadd.f32 %v640, 0.0
        %v689 = vadd.f32 %v641, 0.0
        %v690 = vadd.f32 %v642, 0.0
        %v691 = vadd.f32 %v643, 0.0
        %v692 = vadd.f32 %v644, 0.0
        %v693 = vadd.f32 %v645, 0.0
        %v694 = vadd.f32 %v646, 0.0
        %v695 = vadd.f32 %v647, 0.0
        %v696 = vadd.f32 %v648, 0.0
        %v697 = vadd.f32 %v649, 0.0
        %v698 = vadd.f32 %v650, 0.0
        %v699 = vadd.f32 %v651, 0.0
        %v700 = vadd.f32 %v652, 0.0
        %v701 = vadd.f32 %v653, 0.0
        %v702 = vadd.f32 %v654, 0.0
        %v703 = vadd.f32 %v655, 0.0
        %v704 = vadd.f32 %v656, 0.0
        %v705 = vadd.f32 %v657, 0.0
        %v706 = vadd.f32 %v658, 0.0
        %v707 = vadd.f32 %v659, 0.0
        %v708 = vld [vmem:[%s486 + $0x1] sm:$0x1]
        %v709 = vlaneseq
        %v710 = vshrl.u32 %v709, 7
        %v711 = vsub.s32 0, %v710
        %v712 = vrot.slane %v708, %v711
        %vm713 = vcmp.eq.s32.totalorder %v506, %v712
        %vm714 = vcmp.eq.s32.totalorder %v507, %v712
        %vm715 = vcmp.eq.s32.totalorder %v508, %v712
        %vm716 = vcmp.eq.s32.totalorder %v509, %v712
        %vm717 = vcmp.eq.s32.totalorder %v510, %v712
        %vm718 = vcmp.eq.s32.totalorder %v511, %v712
        %vm719 = vcmp.eq.s32.totalorder %v512, %v712
        %vm720 = vcmp.eq.s32.totalorder %v513, %v712
        %vm721 = vcmp.eq.s32.totalorder %v514, %v712
        %vm722 = vcmp.eq.s32.totalorder %v515, %v712
        %vm723 = vcmp.eq.s32.totalorder %v516, %v712
        %vm724 = vcmp.eq.s32.totalorder %v517, %v712
        %vm725 = vcmp.eq.s32.totalorder %v518, %v712
        %vm726 = vcmp.eq.s32.totalorder %v519, %v712
        %vm727 = vcmp.eq.s32.totalorder %v520, %v712
        %vm728 = vcmp.eq.s32.totalorder %v521, %v712
        %vm729 = vcmp.eq.s32.totalorder %v522, %v712
        %vm730 = vcmp.eq.s32.totalorder %v523, %v712
        %vm731 = vcmp.eq.s32.totalorder %v524, %v712
        %vm732 = vcmp.eq.s32.totalorder %v525, %v712
        %vm733 = vcmp.eq.s32.totalorder %v526, %v712
        %vm734 = vcmp.eq.s32.totalorder %v527, %v712
        %vm735 = vcmp.eq.s32.totalorder %v528, %v712
        %vm736 = vcmp.eq.s32.totalorder %v529, %v712
        %vm737 = vcmp.eq.s32.totalorder %v530, %v712
        %vm738 = vcmp.eq.s32.totalorder %v531, %v712
        %vm739 = vcmp.eq.s32.totalorder %v532, %v712
        %vm740 = vcmp.eq.s32.totalorder %v533, %v712
        %vm741 = vcmp.eq.s32.totalorder %v534, %v712
        %vm742 = vcmp.eq.s32.totalorder %v535, %v712
        %vm743 = vcmp.eq.s32.totalorder %v536, %v712
        %vm744 = vcmp.eq.s32.totalorder %v537, %v712
        %vm745 = vcmp.eq.s32.totalorder %v538, %v712
        %vm746 = vcmp.eq.s32.totalorder %v539, %v712
        %vm747 = vcmp.eq.s32.totalorder %v540, %v712
        %vm748 = vcmp.eq.s32.totalorder %v541, %v712
        %vm749 = vcmp.eq.s32.totalorder %v542, %v712
        %vm750 = vcmp.eq.s32.totalorder %v543, %v712
        %vm751 = vcmp.eq.s32.totalorder %v544, %v712
        %vm752 = vcmp.eq.s32.totalorder %v545, %v712
        %vm753 = vcmp.eq.s32.totalorder %v546, %v712
        %vm754 = vcmp.eq.s32.totalorder %v547, %v712
        %vm755 = vcmp.eq.s32.totalorder %v548, %v712
        %vm756 = vcmp.eq.s32.totalorder %v549, %v712
        %vm757 = vcmp.eq.s32.totalorder %v550, %v712
        %vm758 = vcmp.eq.s32.totalorder %v551, %v712
        %vm759 = vcmp.eq.s32.totalorder %v552, %v712
        %vm760 = vcmp.eq.s32.totalorder %v553, %v712
        %v761 = vld [vmem:[%s493 + $0x1] sm:$0x1]
        %v762 = vlaneseq
        %v763 = vshrl.u32 %v762, 7
        %v764 = vsub.s32 0, %v763
        %v765 = vrot.slane %v761, %v764
        %v766 = vsel %vm713, %v765, 0.0
        %v767 = vsel %vm714, %v765, 0.0
        %v768 = vsel %vm715, %v765, 0.0
        %v769 = vsel %vm716, %v765, 0.0
        %v770 = vsel %vm717, %v765, 0.0
        %v771 = vsel %vm718, %v765, 0.0
        %v772 = vsel %vm719, %v765, 0.0
        %v773 = vsel %vm720, %v765, 0.0
        %v774 = vsel %vm721, %v765, 0.0
        %v775 = vsel %vm722, %v765, 0.0
        %v776 = vsel %vm723, %v765, 0.0
        %v777 = vsel %vm724, %v765, 0.0
        %v778 = vsel %vm725, %v765, 0.0
        %v779 = vsel %vm726, %v765, 0.0
        %v780 = vsel %vm727, %v765, 0.0
        %v781 = vsel %vm728, %v765, 0.0
        %v782 = vsel %vm729, %v765, 0.0
        %v783 = vsel %vm730, %v765, 0.0
        %v784 = vsel %vm731, %v765, 0.0
        %v785 = vsel %vm732, %v765, 0.0
        %v786 = vsel %vm733, %v765, 0.0
        %v787 = vsel %vm734, %v765, 0.0
        %v788 = vsel %vm735, %v765, 0.0
        %v789 = vsel %vm736, %v765, 0.0
        %v790 = vsel %vm737, %v765, 0.0
        %v791 = vsel %vm738, %v765, 0.0
        %v792 = vsel %vm739, %v765, 0.0
        %v793 = vsel %vm740, %v765, 0.0
        %v794 = vsel %vm741, %v765, 0.0
        %v795 = vsel %vm742, %v765, 0.0
        %v796 = vsel %vm743, %v765, 0.0
        %v797 = vsel %vm744, %v765, 0.0
        %v798 = vsel %vm745, %v765, 0.0
        %v799 = vsel %vm746, %v765, 0.0
        %v800 = vsel %vm747, %v765, 0.0
        %v801 = vsel %vm748, %v765, 0.0
        %v802 = vsel %vm749, %v765, 0.0
        %v803 = vsel %vm750, %v765, 0.0
        %v804 = vsel %vm751, %v765, 0.0
        %v805 = vsel %vm752, %v765, 0.0
        %v806 = vsel %vm753, %v765, 0.0
        %v807 = vsel %vm754, %v765, 0.0
        %v808 = vsel %vm755, %v765, 0.0
        %v809 = vsel %vm756, %v765, 0.0
        %v810 = vsel %vm757, %v765, 0.0
        %v811 = vsel %vm758, %v765, 0.0
        %v812 = vsel %vm759, %v765, 0.0
        %v813 = vsel %vm760, %v765, 0.0
        %v814 = vadd.f32 %v660, %v766
        %v815 = vadd.f32 %v661, %v767
        %v816 = vadd.f32 %v662, %v768
        %v817 = vadd.f32 %v663, %v769
        %v818 = vadd.f32 %v664, %v770
        %v819 = vadd.f32 %v665, %v771
        %v820 = vadd.f32 %v666, %v772
        %v821 = vadd.f32 %v667, %v773
        %v822 = vadd.f32 %v668, %v774
        %v823 = vadd.f32 %v669, %v775
        %v824 = vadd.f32 %v670, %v776
        %v825 = vadd.f32 %v671, %v777
        %v826 = vadd.f32 %v672, %v778
        %v827 = vadd.f32 %v673, %v779
        %v828 = vadd.f32 %v674, %v780
        %v829 = vadd.f32 %v675, %v781
        %v830 = vadd.f32 %v676, %v782
        %v831 = vadd.f32 %v677, %v783
        %v832 = vadd.f32 %v678, %v784
        %v833 = vadd.f32 %v679, %v785
        %v834 = vadd.f32 %v680, %v786
        %v835 = vadd.f32 %v681, %v787
        %v836 = vadd.f32 %v682, %v788
        %v837 = vadd.f32 %v683, %v789
        %v838 = vadd.f32 %v684, %v790
        %v839 = vadd.f32 %v685, %v791
        %v840 = vadd.f32 %v686, %v792
        %v841 = vadd.f32 %v687, %v793
        %v842 = vadd.f32 %v688, %v794
        %v843 = vadd.f32 %v689, %v795
        %v844 = vadd.f32 %v690, %v796
        %v845 = vadd.f32 %v691, %v797
        %v846 = vadd.f32 %v692, %v798
        %v847 = vadd.f32 %v693, %v799
        %v848 = vadd.f32 %v694, %v800
        %v849 = vadd.f32 %v695, %v801
        %v850 = vadd.f32 %v696, %v802
        %v851 = vadd.f32 %v697, %v803
        %v852 = vadd.f32 %v698, %v804
        %v853 = vadd.f32 %v699, %v805
        %v854 = vadd.f32 %v700, %v806
        %v855 = vadd.f32 %v701, %v807
        %v856 = vadd.f32 %v702, %v808
        %v857 = vadd.f32 %v703, %v809
        %v858 = vadd.f32 %v704, %v810
        %v859 = vadd.f32 %v705, %v811
        %v860 = vadd.f32 %v706, %v812
        %v861 = vadd.f32 %v707, %v813
        %v862 = vld [vmem:[%s486 + $0x2] sm:$0x1]
        %v863 = vlaneseq
        %v864 = vshrl.u32 %v863, 7
        %v865 = vsub.s32 0, %v864
        %v866 = vrot.slane %v862, %v865
        %vm867 = vcmp.eq.s32.totalorder %v506, %v866
        %vm868 = vcmp.eq.s32.totalorder %v507, %v866
        %vm869 = vcmp.eq.s32.totalorder %v508, %v866
        %vm870 = vcmp.eq.s32.totalorder %v509, %v866
        %vm871 = vcmp.eq.s32.totalorder %v510, %v866
        %vm872 = vcmp.eq.s32.totalorder %v511, %v866
        %vm873 = vcmp.eq.s32.totalorder %v512, %v866
        %vm874 = vcmp.eq.s32.totalorder %v513, %v866
        %vm875 = vcmp.eq.s32.totalorder %v514, %v866
        %vm876 = vcmp.eq.s32.totalorder %v515, %v866
        %vm877 = vcmp.eq.s32.totalorder %v516, %v866
        %vm878 = vcmp.eq.s32.totalorder %v517, %v866
        %vm879 = vcmp.eq.s32.totalorder %v518, %v866
        %vm880 = vcmp.eq.s32.totalorder %v519, %v866
        %vm881 = vcmp.eq.s32.totalorder %v520, %v866
        %vm882 = vcmp.eq.s32.totalorder %v521, %v866
        %vm883 = vcmp.eq.s32.totalorder %v522, %v866
        %vm884 = vcmp.eq.s32.totalorder %v523, %v866
        %vm885 = vcmp.eq.s32.totalorder %v524, %v866
        %vm886 = vcmp.eq.s32.totalorder %v525, %v866
        %vm887 = vcmp.eq.s32.totalorder %v526, %v866
        %vm888 = vcmp.eq.s32.totalorder %v527, %v866
        %vm889 = vcmp.eq.s32.totalorder %v528, %v866
        %vm890 = vcmp.eq.s32.totalorder %v529, %v866
        %vm891 = vcmp.eq.s32.totalorder %v530, %v866
        %vm892 = vcmp.eq.s32.totalorder %v531, %v866
        %vm893 = vcmp.eq.s32.totalorder %v532, %v866
        %vm894 = vcmp.eq.s32.totalorder %v533, %v866
        %vm895 = vcmp.eq.s32.totalorder %v534, %v866
        %vm896 = vcmp.eq.s32.totalorder %v535, %v866
        %vm897 = vcmp.eq.s32.totalorder %v536, %v866
        %vm898 = vcmp.eq.s32.totalorder %v537, %v866
        %vm899 = vcmp.eq.s32.totalorder %v538, %v866
        %vm900 = vcmp.eq.s32.totalorder %v539, %v866
        %vm901 = vcmp.eq.s32.totalorder %v540, %v866
        %vm902 = vcmp.eq.s32.totalorder %v541, %v866
        %vm903 = vcmp.eq.s32.totalorder %v542, %v866
        %vm904 = vcmp.eq.s32.totalorder %v543, %v866
        %vm905 = vcmp.eq.s32.totalorder %v544, %v866
        %vm906 = vcmp.eq.s32.totalorder %v545, %v866
        %vm907 = vcmp.eq.s32.totalorder %v546, %v866
        %vm908 = vcmp.eq.s32.totalorder %v547, %v866
        %vm909 = vcmp.eq.s32.totalorder %v548, %v866
        %vm910 = vcmp.eq.s32.totalorder %v549, %v866
        %vm911 = vcmp.eq.s32.totalorder %v550, %v866
        %vm912 = vcmp.eq.s32.totalorder %v551, %v866
        %vm913 = vcmp.eq.s32.totalorder %v552, %v866
        %vm914 = vcmp.eq.s32.totalorder %v553, %v866
        %v915 = vld [vmem:[%s493 + $0x2] sm:$0x1]
        %v916 = vlaneseq
        %v917 = vshrl.u32 %v916, 7
        %v918 = vsub.s32 0, %v917
        %v919 = vrot.slane %v915, %v918
        %v920 = vsel %vm867, %v919, 0.0
        %v921 = vsel %vm868, %v919, 0.0
        %v922 = vsel %vm869, %v919, 0.0
        %v923 = vsel %vm870, %v919, 0.0
        %v924 = vsel %vm871, %v919, 0.0
        %v925 = vsel %vm872, %v919, 0.0
        %v926 = vsel %vm873, %v919, 0.0
        %v927 = vsel %vm874, %v919, 0.0
        %v928 = vsel %vm875, %v919, 0.0
        %v929 = vsel %vm876, %v919, 0.0
        %v930 = vsel %vm877, %v919, 0.0
        %v931 = vsel %vm878, %v919, 0.0
        %v932 = vsel %vm879, %v919, 0.0
        %v933 = vsel %vm880, %v919, 0.0
        %v934 = vsel %vm881, %v919, 0.0
        %v935 = vsel %vm882, %v919, 0.0
        %v936 = vsel %vm883, %v919, 0.0
        %v937 = vsel %vm884, %v919, 0.0
        %v938 = vsel %vm885, %v919, 0.0
        %v939 = vsel %vm886, %v919, 0.0
        %v940 = vsel %vm887, %v919, 0.0
        %v941 = vsel %vm888, %v919, 0.0
        %v942 = vsel %vm889, %v919, 0.0
        %v943 = vsel %vm890, %v919, 0.0
        %v944 = vsel %vm891, %v919, 0.0
        %v945 = vsel %vm892, %v919, 0.0
        %v946 = vsel %vm893, %v919, 0.0
        %v947 = vsel %vm894, %v919, 0.0
        %v948 = vsel %vm895, %v919, 0.0
        %v949 = vsel %vm896, %v919, 0.0
        %v950 = vsel %vm897, %v919, 0.0
        %v951 = vsel %vm898, %v919, 0.0
        %v952 = vsel %vm899, %v919, 0.0
        %v953 = vsel %vm900, %v919, 0.0
        %v954 = vsel %vm901, %v919, 0.0
        %v955 = vsel %vm902, %v919, 0.0
        %v956 = vsel %vm903, %v919, 0.0
        %v957 = vsel %vm904, %v919, 0.0
        %v958 = vsel %vm905, %v919, 0.0
        %v959 = vsel %vm906, %v919, 0.0
        %v960 = vsel %vm907, %v919, 0.0
        %v961 = vsel %vm908, %v919, 0.0
        %v962 = vsel %vm909, %v919, 0.0
        %v963 = vsel %vm910, %v919, 0.0
        %v964 = vsel %vm911, %v919, 0.0
        %v965 = vsel %vm912, %v919, 0.0
        %v966 = vsel %vm913, %v919, 0.0
        %v967 = vsel %vm914, %v919, 0.0
        %v968 = vadd.f32 %v814, %v920
        %v969 = vadd.f32 %v815, %v921
        %v970 = vadd.f32 %v816, %v922
        %v971 = vadd.f32 %v817, %v923
        %v972 = vadd.f32 %v818, %v924
        %v973 = vadd.f32 %v819, %v925
        %v974 = vadd.f32 %v820, %v926
        %v975 = vadd.f32 %v821, %v927
        %v976 = vadd.f32 %v822, %v928
        %v977 = vadd.f32 %v823, %v929
        %v978 = vadd.f32 %v824, %v930
        %v979 = vadd.f32 %v825, %v931
        %v980 = vadd.f32 %v826, %v932
        %v981 = vadd.f32 %v827, %v933
        %v982 = vadd.f32 %v828, %v934
        %v983 = vadd.f32 %v829, %v935
        %v984 = vadd.f32 %v830, %v936
        %v985 = vadd.f32 %v831, %v937
        %v986 = vadd.f32 %v832, %v938
        %v987 = vadd.f32 %v833, %v939
        %v988 = vadd.f32 %v834, %v940
        %v989 = vadd.f32 %v835, %v941
        %v990 = vadd.f32 %v836, %v942
        %v991 = vadd.f32 %v837, %v943
        %v992 = vadd.f32 %v838, %v944
        %v993 = vadd.f32 %v839, %v945
        %v994 = vadd.f32 %v840, %v946
        %v995 = vadd.f32 %v841, %v947
        %v996 = vadd.f32 %v842, %v948
        %v997 = vadd.f32 %v843, %v949
        %v998 = vadd.f32 %v844, %v950
        %v999 = vadd.f32 %v845, %v951
        %v1000 = vadd.f32 %v846, %v952
        %v1001 = vadd.f32 %v847, %v953
        %v1002 = vadd.f32 %v848, %v954
        %v1003 = vadd.f32 %v849, %v955
        %v1004 = vadd.f32 %v850, %v956
        %v1005 = vadd.f32 %v851, %v957
        %v1006 = vadd.f32 %v852, %v958
        %v1007 = vadd.f32 %v853, %v959
        %v1008 = vadd.f32 %v854, %v960
        %v1009 = vadd.f32 %v855, %v961
        %v1010 = vadd.f32 %v856, %v962
        %v1011 = vadd.f32 %v857, %v963
        %v1012 = vadd.f32 %v858, %v964
        %v1013 = vadd.f32 %v859, %v965
        %v1014 = vadd.f32 %v860, %v966
        %v1015 = vadd.f32 %v861, %v967
        %v1016 = vld [vmem:[%s486 + $0x3] sm:$0x1]
        %v1017 = vlaneseq
        %v1018 = vshrl.u32 %v1017, 7
        %v1019 = vsub.s32 0, %v1018
        %v1020 = vrot.slane %v1016, %v1019
        %vm1021 = vcmp.eq.s32.totalorder %v506, %v1020
        %vm1022 = vcmp.eq.s32.totalorder %v507, %v1020
        %vm1023 = vcmp.eq.s32.totalorder %v508, %v1020
        %vm1024 = vcmp.eq.s32.totalorder %v509, %v1020
        %vm1025 = vcmp.eq.s32.totalorder %v510, %v1020
        %vm1026 = vcmp.eq.s32.totalorder %v511, %v1020
        %vm1027 = vcmp.eq.s32.totalorder %v512, %v1020
        %vm1028 = vcmp.eq.s32.totalorder %v513, %v1020
        %vm1029 = vcmp.eq.s32.totalorder %v514, %v1020
        %vm1030 = vcmp.eq.s32.totalorder %v515, %v1020
        %vm1031 = vcmp.eq.s32.totalorder %v516, %v1020
        %vm1032 = vcmp.eq.s32.totalorder %v517, %v1020
        %vm1033 = vcmp.eq.s32.totalorder %v518, %v1020
        %vm1034 = vcmp.eq.s32.totalorder %v519, %v1020
        %vm1035 = vcmp.eq.s32.totalorder %v520, %v1020
        %vm1036 = vcmp.eq.s32.totalorder %v521, %v1020
        %vm1037 = vcmp.eq.s32.totalorder %v522, %v1020
        %vm1038 = vcmp.eq.s32.totalorder %v523, %v1020
        %vm1039 = vcmp.eq.s32.totalorder %v524, %v1020
        %vm1040 = vcmp.eq.s32.totalorder %v525, %v1020
        %vm1041 = vcmp.eq.s32.totalorder %v526, %v1020
        %vm1042 = vcmp.eq.s32.totalorder %v527, %v1020
        %vm1043 = vcmp.eq.s32.totalorder %v528, %v1020
        %vm1044 = vcmp.eq.s32.totalorder %v529, %v1020
        %vm1045 = vcmp.eq.s32.totalorder %v530, %v1020
        %vm1046 = vcmp.eq.s32.totalorder %v531, %v1020
        %vm1047 = vcmp.eq.s32.totalorder %v532, %v1020
        %vm1048 = vcmp.eq.s32.totalorder %v533, %v1020
        %vm1049 = vcmp.eq.s32.totalorder %v534, %v1020
        %vm1050 = vcmp.eq.s32.totalorder %v535, %v1020
        %vm1051 = vcmp.eq.s32.totalorder %v536, %v1020
        %vm1052 = vcmp.eq.s32.totalorder %v537, %v1020
        %vm1053 = vcmp.eq.s32.totalorder %v538, %v1020
        %vm1054 = vcmp.eq.s32.totalorder %v539, %v1020
        %vm1055 = vcmp.eq.s32.totalorder %v540, %v1020
        %vm1056 = vcmp.eq.s32.totalorder %v541, %v1020
        %vm1057 = vcmp.eq.s32.totalorder %v542, %v1020
        %vm1058 = vcmp.eq.s32.totalorder %v543, %v1020
        %vm1059 = vcmp.eq.s32.totalorder %v544, %v1020
        %vm1060 = vcmp.eq.s32.totalorder %v545, %v1020
        %vm1061 = vcmp.eq.s32.totalorder %v546, %v1020
        %vm1062 = vcmp.eq.s32.totalorder %v547, %v1020
        %vm1063 = vcmp.eq.s32.totalorder %v548, %v1020
        %vm1064 = vcmp.eq.s32.totalorder %v549, %v1020
        %vm1065 = vcmp.eq.s32.totalorder %v550, %v1020
        %vm1066 = vcmp.eq.s32.totalorder %v551, %v1020
        %vm1067 = vcmp.eq.s32.totalorder %v552, %v1020
        %vm1068 = vcmp.eq.s32.totalorder %v553, %v1020
        %v1069 = vld [vmem:[%s493 + $0x3] sm:$0x1]
        %v1070 = vlaneseq
        %v1071 = vshrl.u32 %v1070, 7
        %v1072 = vsub.s32 0, %v1071
        %v1073 = vrot.slane %v1069, %v1072
        %v1074 = vsel %vm1021, %v1073, 0.0
        %v1075 = vsel %vm1022, %v1073, 0.0
        %v1076 = vsel %vm1023, %v1073, 0.0
        %v1077 = vsel %vm1024, %v1073, 0.0
        %v1078 = vsel %vm1025, %v1073, 0.0
        %v1079 = vsel %vm1026, %v1073, 0.0
        %v1080 = vsel %vm1027, %v1073, 0.0
        %v1081 = vsel %vm1028, %v1073, 0.0
        %v1082 = vsel %vm1029, %v1073, 0.0
        %v1083 = vsel %vm1030, %v1073, 0.0
        %v1084 = vsel %vm1031, %v1073, 0.0
        %v1085 = vsel %vm1032, %v1073, 0.0
        %v1086 = vsel %vm1033, %v1073, 0.0
        %v1087 = vsel %vm1034, %v1073, 0.0
        %v1088 = vsel %vm1035, %v1073, 0.0
        %v1089 = vsel %vm1036, %v1073, 0.0
        %v1090 = vsel %vm1037, %v1073, 0.0
        %v1091 = vsel %vm1038, %v1073, 0.0
        %v1092 = vsel %vm1039, %v1073, 0.0
        %v1093 = vsel %vm1040, %v1073, 0.0
        %v1094 = vsel %vm1041, %v1073, 0.0
        %v1095 = vsel %vm1042, %v1073, 0.0
        %v1096 = vsel %vm1043, %v1073, 0.0
        %v1097 = vsel %vm1044, %v1073, 0.0
        %v1098 = vsel %vm1045, %v1073, 0.0
        %v1099 = vsel %vm1046, %v1073, 0.0
        %v1100 = vsel %vm1047, %v1073, 0.0
        %v1101 = vsel %vm1048, %v1073, 0.0
        %v1102 = vsel %vm1049, %v1073, 0.0
        %v1103 = vsel %vm1050, %v1073, 0.0
        %v1104 = vsel %vm1051, %v1073, 0.0
        %v1105 = vsel %vm1052, %v1073, 0.0
        %v1106 = vsel %vm1053, %v1073, 0.0
        %v1107 = vsel %vm1054, %v1073, 0.0
        %v1108 = vsel %vm1055, %v1073, 0.0
        %v1109 = vsel %vm1056, %v1073, 0.0
        %v1110 = vsel %vm1057, %v1073, 0.0
        %v1111 = vsel %vm1058, %v1073, 0.0
        %v1112 = vsel %vm1059, %v1073, 0.0
        %v1113 = vsel %vm1060, %v1073, 0.0
        %v1114 = vsel %vm1061, %v1073, 0.0
        %v1115 = vsel %vm1062, %v1073, 0.0
        %v1116 = vsel %vm1063, %v1073, 0.0
        %v1117 = vsel %vm1064, %v1073, 0.0
        %v1118 = vsel %vm1065, %v1073, 0.0
        %v1119 = vsel %vm1066, %v1073, 0.0
        %v1120 = vsel %vm1067, %v1073, 0.0
        %v1121 = vsel %vm1068, %v1073, 0.0
        %v1122 = vadd.f32 %v968, %v1074
        %v1123 = vadd.f32 %v969, %v1075
        %v1124 = vadd.f32 %v970, %v1076
        %v1125 = vadd.f32 %v971, %v1077
        %v1126 = vadd.f32 %v972, %v1078
        %v1127 = vadd.f32 %v973, %v1079
        %v1128 = vadd.f32 %v974, %v1080
        %v1129 = vadd.f32 %v975, %v1081
        %v1130 = vadd.f32 %v976, %v1082
        %v1131 = vadd.f32 %v977, %v1083
        %v1132 = vadd.f32 %v978, %v1084
        %v1133 = vadd.f32 %v979, %v1085
        %v1134 = vadd.f32 %v980, %v1086
        %v1135 = vadd.f32 %v981, %v1087
        %v1136 = vadd.f32 %v982, %v1088
        %v1137 = vadd.f32 %v983, %v1089
        %v1138 = vadd.f32 %v984, %v1090
        %v1139 = vadd.f32 %v985, %v1091
        %v1140 = vadd.f32 %v986, %v1092
        %v1141 = vadd.f32 %v987, %v1093
        %v1142 = vadd.f32 %v988, %v1094
        %v1143 = vadd.f32 %v989, %v1095
        %v1144 = vadd.f32 %v990, %v1096
        %v1145 = vadd.f32 %v991, %v1097
        %v1146 = vadd.f32 %v992, %v1098
        %v1147 = vadd.f32 %v993, %v1099
        %v1148 = vadd.f32 %v994, %v1100
        %v1149 = vadd.f32 %v995, %v1101
        %v1150 = vadd.f32 %v996, %v1102
        %v1151 = vadd.f32 %v997, %v1103
        %v1152 = vadd.f32 %v998, %v1104
        %v1153 = vadd.f32 %v999, %v1105
        %v1154 = vadd.f32 %v1000, %v1106
        %v1155 = vadd.f32 %v1001, %v1107
        %v1156 = vadd.f32 %v1002, %v1108
        %v1157 = vadd.f32 %v1003, %v1109
        %v1158 = vadd.f32 %v1004, %v1110
        %v1159 = vadd.f32 %v1005, %v1111
        %v1160 = vadd.f32 %v1006, %v1112
        %v1161 = vadd.f32 %v1007, %v1113
        %v1162 = vadd.f32 %v1008, %v1114
        %v1163 = vadd.f32 %v1009, %v1115
        %v1164 = vadd.f32 %v1010, %v1116
        %v1165 = vadd.f32 %v1011, %v1117
        %v1166 = vadd.f32 %v1012, %v1118
        %v1167 = vadd.f32 %v1013, %v1119
        %v1168 = vadd.f32 %v1014, %v1120
        %v1169 = vadd.f32 %v1015, %v1121
        %v1170 = vld [vmem:[%s498] sm:$0xff]
        %v1171 = vld [vmem:[%s498 + $0x8] sm:$0xf]
        %v1172 = vld [vmem:[%s498 + $0xc] sm:$0xff]
        %v1173 = vld [vmem:[%s498 + $0x14] sm:$0xf]
        %v1174 = vld [vmem:[%s498 + $0x18] sm:$0xff]
        %v1175 = vld [vmem:[%s498 + $0x20] sm:$0xf]
        %v1176 = vld [vmem:[%s498 + $0x24] sm:$0xff]
        %v1177 = vld [vmem:[%s498 + $0x2c] sm:$0xf]
        %v1178 = vld [vmem:[%s498 + $0x30] sm:$0xff]
        %v1179 = vld [vmem:[%s498 + $0x38] sm:$0xf]
        %v1180 = vld [vmem:[%s498 + $0x3c] sm:$0xff]
        %v1181 = vld [vmem:[%s498 + $0x44] sm:$0xf]
        %v1182 = vld [vmem:[%s498 + $0x48] sm:$0xff]
        %v1183 = vld [vmem:[%s498 + $0x50] sm:$0xf]
        %v1184 = vld [vmem:[%s498 + $0x54] sm:$0xff]
        %v1185 = vld [vmem:[%s498 + $0x5c] sm:$0xf]
        %v1186 = vpack.c.bf16 %v1123, %v1122
        %v1187 = vpack.c.bf16 %v1125, %v1124
        %v1188 = vpack.c.bf16 %v1127, %v1126
        %v1189 = vpack.c.bf16 %v1129, %v1128
        %v1190 = vpack.c.bf16 %v1131, %v1130
        %v1191 = vpack.c.bf16 %v1133, %v1132
        %v1192 = vpack.c.bf16 %v1135, %v1134
        %v1193 = vpack.c.bf16 %v1137, %v1136
        %v1194 = vpack.c.bf16 %v1139, %v1138
        %v1195 = vpack.c.bf16 %v1141, %v1140
        %v1196 = vpack.c.bf16 %v1143, %v1142
        %v1197 = vpack.c.bf16 %v1145, %v1144
        %v1198 = vpack.c.bf16 %v1147, %v1146
        %v1199 = vpack.c.bf16 %v1149, %v1148
        %v1200 = vpack.c.bf16 %v1151, %v1150
        %v1201 = vpack.c.bf16 %v1153, %v1152
        %v1202 = vpack.c.bf16 %v1155, %v1154
        %v1203 = vpack.c.bf16 %v1157, %v1156
        %v1204 = vpack.c.bf16 %v1159, %v1158
        %v1205 = vpack.c.bf16 %v1161, %v1160
        %v1206 = vpack.c.bf16 %v1163, %v1162
        %v1207 = vpack.c.bf16 %v1165, %v1164
        %v1208 = vpack.c.bf16 %v1167, %v1166
        %v1209 = vpack.c.bf16 %v1169, %v1168
        %v1226 = vunpack.c.l.b16 %v1170
        %v1227 = vunpack.c.h.b16 %v1170
        %v1228 = vunpack.c.l.b16 %v1171
        %v1229 = vunpack.c.l.b16 %v1172
        %v1230 = vunpack.c.h.b16 %v1172
        %v1231 = vunpack.c.l.b16 %v1173
        %v1232 = vunpack.c.l.b16 %v1174
        %v1233 = vunpack.c.h.b16 %v1174
        %v1234 = vunpack.c.l.b16 %v1175
        %v1235 = vunpack.c.l.b16 %v1176
        %v1236 = vunpack.c.h.b16 %v1176
        %v1237 = vunpack.c.l.b16 %v1177
        %v1238 = vunpack.c.l.b16 %v1178
        %v1239 = vunpack.c.h.b16 %v1178
        %v1240 = vunpack.c.l.b16 %v1179
        %v1241 = vunpack.c.l.b16 %v1180
        %v1242 = vunpack.c.h.b16 %v1180
        %v1243 = vunpack.c.l.b16 %v1181
        %v1244 = vunpack.c.l.b16 %v1182
        %v1245 = vunpack.c.h.b16 %v1182
        %v1246 = vunpack.c.l.b16 %v1183
        %v1247 = vunpack.c.l.b16 %v1184
        %v1248 = vunpack.c.h.b16 %v1184
        %v1249 = vunpack.c.l.b16 %v1185
        %v1250 = vpack.c.b16 %v1229, %v1226
        %v1251 = vpack.c.b16 %v1230, %v1227
        %v1252 = vpack.c.b16 %v1231, %v1228
        %v1253 = vpack.c.b16 %v1235, %v1232
        %v1254 = vpack.c.b16 %v1236, %v1233
        %v1255 = vpack.c.b16 %v1237, %v1234
        %v1256 = vpack.c.b16 %v1241, %v1238
        %v1257 = vpack.c.b16 %v1242, %v1239
        %v1258 = vpack.c.b16 %v1243, %v1240
        %v1259 = vpack.c.b16 %v1247, %v1244
        %v1260 = vpack.c.b16 %v1248, %v1245
        %v1261 = vpack.c.b16 %v1249, %v1246
        %1274 = vmatprep.subr.bf16.mxu0 0
        %1275 = vmatpush1.bf16.msra.mxu0 %v1186
        %1276 = vmatprep.subr.bf16.mxu0 0
        %1277 = vmatpush1.bf16.msra.mxu0 %v1187
        %1278 = vmatprep.subr.bf16.mxu0 0
        %1279 = vmatpush1.bf16.msra.mxu0 %v1188
        %1280 = vmatprep.subr.bf16.mxu0 0
        %1281 = vmatpush1.bf16.msra.mxu0 %v1189
        %1282 = vmatprep.subr.bf16.mxu0 0
        %1283 = vmatpush1.bf16.msra.mxu0 %v1190
        %1284 = vmatprep.subr.bf16.mxu0 0
        %1285 = vmatpush1.bf16.msra.mxu0 %v1191
        %1286 = vmatprep.subr.bf16.mxu0 0
        %1287 = vmatpush1.bf16.msra.mxu0 %v1192
        %1288 = vmatprep.subr.bf16.mxu0 0
        %1289 = vmatpush1.bf16.msra.mxu0 %v1193
        %1290 = vmatprep.subr.bf16.mxu0 0
        %1291 = vmatpush1.bf16.msra.mxu0 %v1194
        %1292 = vmatprep.subr.bf16.mxu0 0
        %1293 = vmatpush1.bf16.msra.mxu0 %v1195
        %1294 = vmatprep.subr.bf16.mxu0 0
        %1295 = vmatpush1.bf16.msra.mxu0 %v1196
        %1296 = vmatprep.subr.bf16.mxu0 0
        %1297 = vmatpush1.bf16.msra.mxu0 %v1197
        %1298 = vmatprep.subr.bf16.mxu0 0
        %1299 = vmatpush1.bf16.msra.mxu0 %v1198
        %1300 = vmatprep.subr.bf16.mxu0 0
        %1301 = vmatpush1.bf16.msra.mxu0 %v1199
        %1302 = vmatprep.subr.bf16.mxu0 0
        %1303 = vmatpush1.bf16.msra.mxu0 %v1200
        %1304 = vmatprep.subr.bf16.mxu0 0
        %1305 = vmatpush1.bf16.msra.mxu0 %v1201
        %1306 = vmatprep.mubr.bf16.mxu0 %v1251
        %1307 = vmatmul.mubr.bf16.gmra.mrb[0].mxu0 %v1250
        %v1308 = vpop.f32.mrb[0].mxu0
        %v1309 = vadd.f32 0.0, %v1308
        %v1310 = vpop.f32.mrb[0].mxu0
        %v1311 = vpop.f32.mrb[0].mxu0
        %v1312 = vadd.f32 0.0, %v1311
        %v1313 = vpop.f32.mrb[0].mxu0
        %1314 = vmatprep.mubr.bf16.mxu0 %v1254
        %1315 = vmatmul.mubr.bf16.gmra.mrb[0].mxu0 %v1253
        %v1316 = vpop.f32.mrb[0].mxu0
        %v1317 = vadd.f32 0.0, %v1316
        %v1318 = vpop.f32.mrb[0].mxu0
        %v1319 = vpop.f32.mrb[0].mxu0
        %v1320 = vadd.f32 0.0, %v1319
        %v1321 = vpop.f32.mrb[0].mxu0
        %1322 = vmatprep.mubr.bf16.mxu0 %v1257
        %1323 = vmatmul.mubr.bf16.gmra.mrb[0].mxu0 %v1256
        %v1324 = vpop.f32.mrb[0].mxu0
        %v1325 = vadd.f32 0.0, %v1324
        %v1326 = vpop.f32.mrb[0].mxu0
        %v1327 = vpop.f32.mrb[0].mxu0
        %v1328 = vadd.f32 0.0, %v1327
        %v1329 = vpop.f32.mrb[0].mxu0
        %1330 = vmatprep.mubr.bf16.mxu0 %v1260
        %1331 = vmatmul.mubr.bf16.gmra.mrb[0].mxu0 %v1259
        %v1332 = vpop.f32.mrb[0].mxu0
        %v1333 = vadd.f32 0.0, %v1332
        %v1334 = vpop.f32.mrb[0].mxu0
        %v1335 = vpop.f32.mrb[0].mxu0
        %v1336 = vadd.f32 0.0, %v1335
        %v1337 = vpop.f32.mrb[0].mxu0
        %1338 = vdwg.mxu0
        %1339 = vmatprep.subr.bf16.mxu0 0
        %1340 = vmatpush1.bf16.msra.mxu0 %v1202
        %1341 = vmatprep.subr.bf16.mxu0 0
        %1342 = vmatpush1.bf16.msra.mxu0 %v1203
        %1343 = vmatprep.subr.bf16.mxu0 0
        %1344 = vmatpush1.bf16.msra.mxu0 %v1204
        %1345 = vmatprep.subr.bf16.mxu0 0
        %1346 = vmatpush1.bf16.msra.mxu0 %v1205
        %1347 = vmatprep.subr.bf16.mxu0 0
        %1348 = vmatpush1.bf16.msra.mxu0 %v1206
        %1349 = vmatprep.subr.bf16.mxu0 0
        %1350 = vmatpush1.bf16.msra.mxu0 %v1207
        %1351 = vmatprep.subr.bf16.mxu0 0
        %1352 = vmatpush1.bf16.msra.mxu0 %v1208
        %1353 = vmatprep.subr.bf16.mxu0 0
        %1354 = vmatpush1.bf16.msra.mxu0 %v1209
        %1355 = vmatprep.subr.bf16.mxu0 0
        %1356 = vmatpush1.bf16.msra.mxu0 0
        %1357 = vmatprep.subr.bf16.mxu0 0
        %1358 = vmatpush1.bf16.msra.mxu0 0
        %1359 = vmatprep.subr.bf16.mxu0 0
        %1360 = vmatpush1.bf16.msra.mxu0 0
        %1361 = vmatprep.subr.bf16.mxu0 0
        %1362 = vmatpush1.bf16.msra.mxu0 0
        %1363 = vmatprep.subr.bf16.mxu0 0
        %1364 = vmatpush1.bf16.msra.mxu0 0
        %1365 = vmatprep.subr.bf16.mxu0 0
        %1366 = vmatpush1.bf16.msra.mxu0 0
        %1367 = vmatprep.subr.bf16.mxu0 0
        %1368 = vmatpush1.bf16.msra.mxu0 0
        %1369 = vmatprep.subr.bf16.mxu0 0
        %1370 = vmatpush1.bf16.msra.mxu0 0
        %1371 = vmatprep.mubr.bf16.mxu0 0
        %1372 = vmatmul.mubr.bf16.gmra.mrb[0].mxu0 %v1252
        %v1373 = vpop.f32.mrb[0].mxu0
        %v1374 = vadd.f32 %v1309, %v1373
        %v1375 = vpop.f32.mrb[0].mxu0
        %v1376 = vpop.f32.mrb[0].mxu0
        %v1377 = vadd.f32 %v1312, %v1376
        %v1378 = vpop.f32.mrb[0].mxu0
        %1379 = vmatprep.mubr.bf16.mxu0 0
        %1380 = vmatmul.mubr.bf16.gmra.mrb[0].mxu0 %v1255
        %v1381 = vpop.f32.mrb[0].mxu0
        %v1382 = vadd.f32 %v1317, %v1381
        %v1383 = vpop.f32.mrb[0].mxu0
        %v1384 = vpop.f32.mrb[0].mxu0
        %v1385 = vadd.f32 %v1320, %v1384
        %v1386 = vpop.f32.mrb[0].mxu0
        %1387 = vmatprep.mubr.bf16.mxu0 0
        %1388 = vmatmul.mubr.bf16.gmra.mrb[0].mxu0 %v1258
        %v1389 = vpop.f32.mrb[0].mxu0
        %v1390 = vadd.f32 %v1325, %v1389
        %v1391 = vpop.f32.mrb[0].mxu0
        %v1392 = vpop.f32.mrb[0].mxu0
        %v1393 = vadd.f32 %v1328, %v1392
        %v1394 = vpop.f32.mrb[0].mxu0
        %1395 = vmatprep.mubr.bf16.mxu0 0
        %1396 = vmatmul.mubr.bf16.gmra.mrb[0].mxu0 %v1261
        %v1397 = vpop.f32.mrb[0].mxu0
        %v1398 = vadd.f32 %v1333, %v1397
        %v1399 = vpop.f32.mrb[0].mxu0
        %v1400 = vpop.f32.mrb[0].mxu0
        %v1401 = vadd.f32 %v1336, %v1400
        %v1402 = vpop.f32.mrb[0].mxu0
        %1403 = vdwg.mxu0
        %v1404 = vld [vmem:[%s5] sm:$0xf]
        %v1405 = vld [vmem:[%s5 + $0x4] sm:$0xf]
        %v1406 = vld [vmem:[%s5 + $0x8] sm:$0xf]
        %v1407 = vld [vmem:[%s5 + $0xc] sm:$0xf]
        %v1408 = vld [vmem:[%s5 + $0x10] sm:$0xf]
        %v1409 = vld [vmem:[%s5 + $0x14] sm:$0xf]
        %v1410 = vld [vmem:[%s5 + $0x18] sm:$0xf]
        %v1411 = vld [vmem:[%s5 + $0x1c] sm:$0xf]
        %v1412 = vld [vmem:[%s5 + $0x20] sm:$0xf]
        %v1413 = vld [vmem:[%s5 + $0x24] sm:$0xf]
        %v1414 = vld [vmem:[%s5 + $0x28] sm:$0xf]
        %v1415 = vld [vmem:[%s5 + $0x2c] sm:$0xf]
        %v1416 = vld [vmem:[%s5 + $0x30] sm:$0xf]
        %v1417 = vld [vmem:[%s5 + $0x34] sm:$0xf]
        %v1418 = vld [vmem:[%s5 + $0x38] sm:$0xf]
        %v1419 = vld [vmem:[%s5 + $0x3c] sm:$0xf]
        %v1420 = vpack.c.bf16 %v1377, %v1374
        %v1421 = vpack.c.bf16 %v1385, %v1382
        %v1422 = vpack.c.bf16 %v1393, %v1390
        %v1423 = vpack.c.bf16 %v1401, %v1398
        %v1424 = vld [vmem:[%s4] sm:$0xf]
        %v1425 = vld [vmem:[%s4 + $0x4] sm:$0xf]
        %v1426 = vld [vmem:[%s4 + $0x8] sm:$0xf]
        %v1427 = vld [vmem:[%s4 + $0xc] sm:$0xf]
        %v1428 = vld [vmem:[%s4 + $0x10] sm:$0xf]
        %v1429 = vld [vmem:[%s4 + $0x14] sm:$0xf]
        %v1430 = vld [vmem:[%s4 + $0x18] sm:$0xf]
        %v1431 = vld [vmem:[%s4 + $0x1c] sm:$0xf]
        %v1432 = vld [vmem:[%s4 + $0x20] sm:$0xf]
        %v1433 = vld [vmem:[%s4 + $0x24] sm:$0xf]
        %v1434 = vld [vmem:[%s4 + $0x28] sm:$0xf]
        %v1435 = vld [vmem:[%s4 + $0x2c] sm:$0xf]
        %v1436 = vld [vmem:[%s4 + $0x30] sm:$0xf]
        %v1437 = vld [vmem:[%s4 + $0x34] sm:$0xf]
        %v1438 = vld [vmem:[%s4 + $0x38] sm:$0xf]
        %v1439 = vld [vmem:[%s4 + $0x3c] sm:$0xf]
        %v1440 = vld [vmem:[%s479] sm:$0x7]
        %v1457 = vunpack.c.l.b16 %v1424
        %v1458 = vunpack.c.l.b16 %v1425
        %v1459 = vunpack.c.l.b16 %v1426
        %v1460 = vunpack.c.l.b16 %v1427
        %v1461 = vunpack.c.l.b16 %v1428
        %v1462 = vunpack.c.l.b16 %v1429
        %v1463 = vunpack.c.l.b16 %v1430
        %v1464 = vunpack.c.l.b16 %v1431
        %v1465 = vunpack.c.l.b16 %v1432
        %v1466 = vunpack.c.l.b16 %v1433
        %v1467 = vunpack.c.l.b16 %v1434
        %v1468 = vunpack.c.l.b16 %v1435
        %v1469 = vunpack.c.l.b16 %v1436
        %v1470 = vunpack.c.l.b16 %v1437
        %v1471 = vunpack.c.l.b16 %v1438
        %v1472 = vunpack.c.l.b16 %v1439
        %v1473 = vpack.c.b16 %v1458, %v1457
        %v1474 = vpack.c.b16 %v1460, %v1459
        %v1475 = vpack.c.b16 %v1462, %v1461
        %v1476 = vpack.c.b16 %v1464, %v1463
        %v1477 = vpack.c.b16 %v1466, %v1465
        %v1478 = vpack.c.b16 %v1468, %v1467
        %v1479 = vpack.c.b16 %v1470, %v1469
        %v1480 = vpack.c.b16 %v1472, %v1471
        %vm1481 = vcmask 39936
        %v1483 = vsel %vm1481, %v1473, 0
        %v1486 = vsel %vm1481, %v1474, 0
        %v1489 = vsel %vm1481, %v1475, 0
        %v1492 = vsel %vm1481, %v1476, 0
        %v1495 = vsel %vm1481, %v1477, 0
        %v1498 = vsel %vm1481, %v1478, 0
        %v1501 = vsel %vm1481, %v1479, 0
        %v1504 = vsel %vm1481, %v1480, 0
        %vm1506 = vcmask 1041408
        %vm1507 = vcmask 1042432
        %v1508 = vsel %vm1506, 4294967295, 65535
        %v1509 = vsel %vm1507, %v1508, 0
        %v1511 = vand.u32 %v1440, %v1509
        %1513 = vmatprep.subr.bf16.mxu0 0
        %1514 = vmatpush1.bf16.msra.mxu0 %v1511
        %1515 = vmatprep.subr.bf16.mxu0 0
        %1516 = vmatpush1.bf16.msra.mxu0 0
        %1517 = vmatprep.subr.bf16.mxu0 0
        %1518 = vmatpush1.bf16.msra.mxu0 0
        %1519 = vmatprep.subr.bf16.mxu0 0
        %1520 = vmatpush1.bf16.msra.mxu0 0
        %1521 = vmatprep.subr.bf16.mxu0 0
        %1522 = vmatpush1.bf16.msra.mxu0 0
        %1523 = vmatprep.subr.bf16.mxu0 0
        %1524 = vmatpush1.bf16.msra.mxu0 0
        %1525 = vmatprep.subr.bf16.mxu0 0
        %1526 = vmatpush1.bf16.msra.mxu0 0
        %1527 = vmatprep.subr.bf16.mxu0 0
        %1528 = vmatpush1.bf16.msra.mxu0 0
        %1529 = vmatprep.subr.bf16.mxu0 0
        %1530 = vmatpush1.bf16.msra.mxu0 0
        %1531 = vmatprep.subr.bf16.mxu0 0
        %1532 = vmatpush1.bf16.msra.mxu0 0
        %1533 = vmatprep.subr.bf16.mxu0 0
        %1534 = vmatpush1.bf16.msra.mxu0 0
        %1535 = vmatprep.subr.bf16.mxu0 0
        %1536 = vmatpush1.bf16.msra.mxu0 0
        %1537 = vmatprep.subr.bf16.mxu0 0
        %1538 = vmatpush1.bf16.msra.mxu0 0
        %1539 = vmatprep.subr.bf16.mxu0 0
        %1540 = vmatpush1.bf16.msra.mxu0 0
        %1541 = vmatprep.subr.bf16.mxu0 0
        %1542 = vmatpush1.bf16.msra.mxu0 0
        %1543 = vmatprep.subr.bf16.mxu0 0
        %1544 = vmatpush1.bf16.msra.mxu0 0
        %1545 = vmatprep.mubr.bf16.mxu0 0
        %1546 = vmatmul.mubr.bf16.gmra.mrb[0].mxu0 %v1483
        %v1547 = vpop.f32.mrb[0].mxu0
        %v1548 = vadd.f32 0.0, %v1547
        %v1549 = vpop.f32.mrb[0].mxu0
        %v1550 = vpop.f32.mrb[0].mxu0
        %v1551 = vadd.f32 0.0, %v1550
        %v1552 = vpop.f32.mrb[0].mxu0
        %1553 = vmatprep.mubr.bf16.mxu0 0
        %1554 = vmatmul.mubr.bf16.gmra.mrb[0].mxu0 %v1486
        %v1555 = vpop.f32.mrb[0].mxu0
        %v1556 = vadd.f32 0.0, %v1555
        %v1557 = vpop.f32.mrb[0].mxu0
        %v1558 = vpop.f32.mrb[0].mxu0
        %v1559 = vadd.f32 0.0, %v1558
        %v1560 = vpop.f32.mrb[0].mxu0
        %1561 = vmatprep.mubr.bf16.mxu0 0
        %1562 = vmatmul.mubr.bf16.gmra.mrb[0].mxu0 %v1489
        %v1563 = vpop.f32.mrb[0].mxu0
        %v1564 = vadd.f32 0.0, %v1563
        %v1565 = vpop.f32.mrb[0].mxu0
        %v1566 = vpop.f32.mrb[0].mxu0
        %v1567 = vadd.f32 0.0, %v1566
        %v1568 = vpop.f32.mrb[0].mxu0
        %1569 = vmatprep.mubr.bf16.mxu0 0
        %1570 = vmatmul.mubr.bf16.gmra.mrb[0].mxu0 %v1492
        %v1571 = vpop.f32.mrb[0].mxu0
        %v1572 = vadd.f32 0.0, %v1571
        %v1573 = vpop.f32.mrb[0].mxu0
        %v1574 = vpop.f32.mrb[0].mxu0
        %v1575 = vadd.f32 0.0, %v1574
        %v1576 = vpop.f32.mrb[0].mxu0
        %1577 = vmatprep.mubr.bf16.mxu0 0
        %1578 = vmatmul.mubr.bf16.gmra.mrb[0].mxu0 %v1495
        %v1579 = vpop.f32.mrb[0].mxu0
        %v1580 = vadd.f32 0.0, %v1579
        %v1581 = vpop.f32.mrb[0].mxu0
        %v1582 = vpop.f32.mrb[0].mxu0
        %v1583 = vadd.f32 0.0, %v1582
        %v1584 = vpop.f32.mrb[0].mxu0
        %1585 = vmatprep.mubr.bf16.mxu0 0
        %1586 = vmatmul.mubr.bf16.gmra.mrb[0].mxu0 %v1498
        %v1587 = vpop.f32.mrb[0].mxu0
        %v1588 = vadd.f32 0.0, %v1587
        %v1589 = vpop.f32.mrb[0].mxu0
        %v1590 = vpop.f32.mrb[0].mxu0
        %v1591 = vadd.f32 0.0, %v1590
        %v1592 = vpop.f32.mrb[0].mxu0
        %1593 = vmatprep.mubr.bf16.mxu0 0
        %1594 = vmatmul.mubr.bf16.gmra.mrb[0].mxu0 %v1501
        %v1595 = vpop.f32.mrb[0].mxu0
        %v1596 = vadd.f32 0.0, %v1595
        %v1597 = vpop.f32.mrb[0].mxu0
        %v1598 = vpop.f32.mrb[0].mxu0
        %v1599 = vadd.f32 0.0, %v1598
        %v1600 = vpop.f32.mrb[0].mxu0
        %1601 = vmatprep.mubr.bf16.mxu0 0
        %1602 = vmatmul.mubr.bf16.gmra.mrb[0].mxu0 %v1504
        %v1603 = vpop.f32.mrb[0].mxu0
        %v1604 = vadd.f32 0.0, %v1603
        %v1605 = vpop.f32.mrb[0].mxu0
        %v1606 = vpop.f32.mrb[0].mxu0
        %v1607 = vadd.f32 0.0, %v1606
        %v1608 = vpop.f32.mrb[0].mxu0
        %1609 = vdwg.mxu0
        %v1626 = vunpack.c.l.b16 %v1404
        %v1627 = vunpack.c.l.b16 %v1405
        %v1628 = vunpack.c.l.b16 %v1406
        %v1629 = vunpack.c.l.b16 %v1407
        %v1630 = vunpack.c.l.b16 %v1408
        %v1631 = vunpack.c.l.b16 %v1409
        %v1632 = vunpack.c.l.b16 %v1410
        %v1633 = vunpack.c.l.b16 %v1411
        %v1634 = vunpack.c.l.b16 %v1412
        %v1635 = vunpack.c.l.b16 %v1413
        %v1636 = vunpack.c.l.b16 %v1414
        %v1637 = vunpack.c.l.b16 %v1415
        %v1638 = vunpack.c.l.b16 %v1416
        %v1639 = vunpack.c.l.b16 %v1417
        %v1640 = vunpack.c.l.b16 %v1418
        %v1641 = vunpack.c.l.b16 %v1419
        %v1642 = vpack.c.b16 %v1627, %v1626
        %v1643 = vpack.c.b16 %v1629, %v1628
        %v1644 = vpack.c.b16 %v1631, %v1630
        %v1645 = vpack.c.b16 %v1633, %v1632
        %v1646 = vpack.c.b16 %v1635, %v1634
        %v1647 = vpack.c.b16 %v1637, %v1636
        %v1648 = vpack.c.b16 %v1639, %v1638
        %v1649 = vpack.c.b16 %v1641, %v1640
        %vm1650 = vcmask 523264
        %v1652 = vsel %vm1650, %v1642, 0
        %v1655 = vsel %vm1650, %v1643, 0
        %v1658 = vsel %vm1650, %v1644, 0
        %v1661 = vsel %vm1650, %v1645, 0
        %v1664 = vsel %vm1650, %v1646, 0
        %v1667 = vsel %vm1650, %v1647, 0
        %v1670 = vsel %vm1650, %v1648, 0
        %v1673 = vsel %vm1650, %v1649, 0
        %1675 = vmatprep.subr.bf16.mxu0 0
        %1676 = vmatpush1.bf16.msra.mxu0 %v1420
        %1677 = vmatprep.subr.bf16.mxu0 0
        %1678 = vmatpush1.bf16.msra.mxu0 %v1421
        %1679 = vmatprep.subr.bf16.mxu0 0
        %1680 = vmatpush1.bf16.msra.mxu0 %v1422
        %1681 = vmatprep.subr.bf16.mxu0 0
        %1682 = vmatpush1.bf16.msra.mxu0 %v1423
        %1683 = vmatprep.subr.bf16.mxu0 0
        %1684 = vmatpush1.bf16.msra.mxu0 0
        %1685 = vmatprep.subr.bf16.mxu0 0
        %1686 = vmatpush1.bf16.msra.mxu0 0
        %1687 = vmatprep.subr.bf16.mxu0 0
        %1688 = vmatpush1.bf16.msra.mxu0 0
        %1689 = vmatprep.subr.bf16.mxu0 0
        %1690 = vmatpush1.bf16.msra.mxu0 0
        %1691 = vmatprep.subr.bf16.mxu0 0
        %1692 = vmatpush1.bf16.msra.mxu0 0
        %1693 = vmatprep.subr.bf16.mxu0 0
        %1694 = vmatpush1.bf16.msra.mxu0 0
        %1695 = vmatprep.subr.bf16.mxu0 0
        %1696 = vmatpush1.bf16.msra.mxu0 0
        %1697 = vmatprep.subr.bf16.mxu0 0
        %1698 = vmatpush1.bf16.msra.mxu0 0
        %1699 = vmatprep.subr.bf16.mxu0 0
        %1700 = vmatpush1.bf16.msra.mxu0 0
        %1701 = vmatprep.subr.bf16.mxu0 0
        %1702 = vmatpush1.bf16.msra.mxu0 0
        %1703 = vmatprep.subr.bf16.mxu0 0
        %1704 = vmatpush1.bf16.msra.mxu0 0
        %1705 = vmatprep.subr.bf16.mxu0 0
        %1706 = vmatpush1.bf16.msra.mxu0 0
        %1707 = vmatprep.mubr.bf16.mxu0 0
        %1708 = vmatmul.mubr.bf16.gmra.mrb[0].mxu0 %v1652
        %v1709 = vpop.f32.mrb[0].mxu0
        %v1710 = vadd.f32 %v1548, %v1709
        %v1711 = vpop.f32.mrb[0].mxu0
        %v1712 = vpop.f32.mrb[0].mxu0
        %v1713 = vadd.f32 %v1551, %v1712
        %v1714 = vpop.f32.mrb[0].mxu0
        %1715 = vmatprep.mubr.bf16.mxu0 0
        %1716 = vmatmul.mubr.bf16.gmra.mrb[0].mxu0 %v1655
        %v1717 = vpop.f32.mrb[0].mxu0
        %v1718 = vadd.f32 %v1556, %v1717
        %v1719 = vpop.f32.mrb[0].mxu0
        %v1720 = vpop.f32.mrb[0].mxu0
        %v1721 = vadd.f32 %v1559, %v1720
        %v1722 = vpop.f32.mrb[0].mxu0
        %1723 = vmatprep.mubr.bf16.mxu0 0
        %1724 = vmatmul.mubr.bf16.gmra.mrb[0].mxu0 %v1658
        %v1725 = vpop.f32.mrb[0].mxu0
        %v1726 = vadd.f32 %v1564, %v1725
        %v1727 = vpop.f32.mrb[0].mxu0
        %v1728 = vpop.f32.mrb[0].mxu0
        %v1729 = vadd.f32 %v1567, %v1728
        %v1730 = vpop.f32.mrb[0].mxu0
        %1731 = vmatprep.mubr.bf16.mxu0 0
        %1732 = vmatmul.mubr.bf16.gmra.mrb[0].mxu0 %v1661
        %v1733 = vpop.f32.mrb[0].mxu0
        %v1734 = vadd.f32 %v1572, %v1733
        %v1735 = vpop.f32.mrb[0].mxu0
        %v1736 = vpop.f32.mrb[0].mxu0
        %v1737 = vadd.f32 %v1575, %v1736
        %v1738 = vpop.f32.mrb[0].mxu0
        %1739 = vmatprep.mubr.bf16.mxu0 0
        %1740 = vmatmul.mubr.bf16.gmra.mrb[0].mxu0 %v1664
        %v1741 = vpop.f32.mrb[0].mxu0
        %v1742 = vadd.f32 %v1580, %v1741
        %v1743 = vpop.f32.mrb[0].mxu0
        %v1744 = vpop.f32.mrb[0].mxu0
        %v1745 = vadd.f32 %v1583, %v1744
        %v1746 = vpop.f32.mrb[0].mxu0
        %1747 = vmatprep.mubr.bf16.mxu0 0
        %1748 = vmatmul.mubr.bf16.gmra.mrb[0].mxu0 %v1667
        %v1749 = vpop.f32.mrb[0].mxu0
        %v1750 = vadd.f32 %v1588, %v1749
        %v1751 = vpop.f32.mrb[0].mxu0
        %v1752 = vpop.f32.mrb[0].mxu0
        %v1753 = vadd.f32 %v1591, %v1752
        %v1754 = vpop.f32.mrb[0].mxu0
        %1755 = vmatprep.mubr.bf16.mxu0 0
        %1756 = vmatmul.mubr.bf16.gmra.mrb[0].mxu0 %v1670
        %v1757 = vpop.f32.mrb[0].mxu0
        %v1758 = vadd.f32 %v1596, %v1757
        %v1759 = vpop.f32.mrb[0].mxu0
        %v1760 = vpop.f32.mrb[0].mxu0
        %v1761 = vadd.f32 %v1599, %v1760
        %v1762 = vpop.f32.mrb[0].mxu0
        %1763 = vmatprep.mubr.bf16.mxu0 0
        %1764 = vmatmul.mubr.bf16.gmra.mrb[0].mxu0 %v1673
        %v1765 = vpop.f32.mrb[0].mxu0
        %v1766 = vadd.f32 %v1604, %v1765
        %v1767 = vpop.f32.mrb[0].mxu0
        %v1768 = vpop.f32.mrb[0].mxu0
        %v1769 = vadd.f32 %v1607, %v1768
        %v1770 = vpop.f32.mrb[0].mxu0
        %1771 = vdwg.mxu0
        %v1772 = vld [vmem:[%s503] sm:$0xff]
        %v1773 = vld [vmem:[%s503 + $0x8] sm:$0xff]
        %v1774 = vld [vmem:[%s503 + $0x10] sm:$0xff]
        %v1775 = vld [vmem:[%s503 + $0x18] sm:$0xff]
        %v1776 = vld [vmem:[%s503 + $0x20] sm:$0xff]
        %v1777 = vld [vmem:[%s503 + $0x28] sm:$0xff]
        %v1778 = vld [vmem:[%s503 + $0x30] sm:$0xff]
        %v1779 = vld [vmem:[%s503 + $0x38] sm:$0xff]
        %v1780 = vld [vmem:[%s503 + $0x40] sm:$0xff]
        %v1781 = vld [vmem:[%s503 + $0x48] sm:$0xff]
        %v1782 = vld [vmem:[%s503 + $0x50] sm:$0xff]
        %v1783 = vld [vmem:[%s503 + $0x58] sm:$0xff]
        %v1784 = vld [vmem:[%s503 + $0x60] sm:$0xff]
        %v1785 = vld [vmem:[%s503 + $0x68] sm:$0xff]
        %v1786 = vld [vmem:[%s503 + $0x70] sm:$0xff]
        %v1787 = vld [vmem:[%s503 + $0x78] sm:$0xff]
        %1789 = vset.pattern.permute.xlu0 0
        %1790 = vperm.xlu0 %1789, %v1772
        %v1791 = vpop.permute.xlu0 %1790
        %1794 = vset.pattern.permute.xlu0 0
        %1795 = vperm.xlu0 %1794, %v1773
        %v1796 = vpop.permute.xlu0 %1795
        %1799 = vset.pattern.permute.xlu0 0
        %1800 = vperm.xlu0 %1799, %v1774
        %v1801 = vpop.permute.xlu0 %1800
        %1804 = vset.pattern.permute.xlu0 0
        %1805 = vperm.xlu0 %1804, %v1775
        %v1806 = vpop.permute.xlu0 %1805
        %1809 = vset.pattern.permute.xlu0 0
        %1810 = vperm.xlu0 %1809, %v1776
        %v1811 = vpop.permute.xlu0 %1810
        %1814 = vset.pattern.permute.xlu0 0
        %1815 = vperm.xlu0 %1814, %v1777
        %v1816 = vpop.permute.xlu0 %1815
        %1819 = vset.pattern.permute.xlu0 0
        %1820 = vperm.xlu0 %1819, %v1778
        %v1821 = vpop.permute.xlu0 %1820
        %1824 = vset.pattern.permute.xlu0 0
        %1825 = vperm.xlu0 %1824, %v1779
        %v1826 = vpop.permute.xlu0 %1825
        %1829 = vset.pattern.permute.xlu0 0
        %1830 = vperm.xlu0 %1829, %v1780
        %v1831 = vpop.permute.xlu0 %1830
        %1834 = vset.pattern.permute.xlu0 0
        %1835 = vperm.xlu0 %1834, %v1781
        %v1836 = vpop.permute.xlu0 %1835
        %1839 = vset.pattern.permute.xlu0 0
        %1840 = vperm.xlu0 %1839, %v1782
        %v1841 = vpop.permute.xlu0 %1840
        %1844 = vset.pattern.permute.xlu0 0
        %1845 = vperm.xlu0 %1844, %v1783
        %v1846 = vpop.permute.xlu0 %1845
        %1849 = vset.pattern.permute.xlu0 0
        %1850 = vperm.xlu0 %1849, %v1784
        %v1851 = vpop.permute.xlu0 %1850
        %1854 = vset.pattern.permute.xlu0 0
        %1855 = vperm.xlu0 %1854, %v1785
        %v1856 = vpop.permute.xlu0 %1855
        %1859 = vset.pattern.permute.xlu0 0
        %1860 = vperm.xlu0 %1859, %v1786
        %v1861 = vpop.permute.xlu0 %1860
        %1864 = vset.pattern.permute.xlu0 0
        %1865 = vperm.xlu0 %1864, %v1787
        %v1866 = vpop.permute.xlu0 %1865
        %v1868 = vadd.f32 %v1710, %v1791
        %v1869 = vadd.f32 %v1713, %v1796
        %v1870 = vadd.f32 %v1718, %v1801
        %v1871 = vadd.f32 %v1721, %v1806
        %v1872 = vadd.f32 %v1726, %v1811
        %v1873 = vadd.f32 %v1729, %v1816
        %v1874 = vadd.f32 %v1734, %v1821
        %v1875 = vadd.f32 %v1737, %v1826
        %v1876 = vadd.f32 %v1742, %v1831
        %v1877 = vadd.f32 %v1745, %v1836
        %v1878 = vadd.f32 %v1750, %v1841
        %v1879 = vadd.f32 %v1753, %v1846
        %v1880 = vadd.f32 %v1758, %v1851
        %v1881 = vadd.f32 %v1761, %v1856
        %v1882 = vadd.f32 %v1766, %v1861
        %v1883 = vadd.f32 %v1769, %v1866
        %v1884 = vmax.f32 %v1868, 0.0
        %v1885 = vmax.f32 %v1869, 0.0
        %v1886 = vmax.f32 %v1870, 0.0
        %v1887 = vmax.f32 %v1871, 0.0
        %v1888 = vmax.f32 %v1872, 0.0
        %v1889 = vmax.f32 %v1873, 0.0
        %v1890 = vmax.f32 %v1874, 0.0
        %v1891 = vmax.f32 %v1875, 0.0
        %v1892 = vmax.f32 %v1876, 0.0
        %v1893 = vmax.f32 %v1877, 0.0
        %v1894 = vmax.f32 %v1878, 0.0
        %v1895 = vmax.f32 %v1879, 0.0
        %v1896 = vmax.f32 %v1880, 0.0
        %v1897 = vmax.f32 %v1881, 0.0
        %v1898 = vmax.f32 %v1882, 0.0
        %v1899 = vmax.f32 %v1883, 0.0
        %v1900 = vld [vmem:[%s7] sm:$0xf]
        %v1901 = vld [vmem:[%s7 + $0x4] sm:$0xf]
        %v1902 = vld [vmem:[%s7 + $0x8] sm:$0xf]
        %v1903 = vld [vmem:[%s7 + $0xc] sm:$0xf]
        %v1904 = vld [vmem:[%s7 + $0x10] sm:$0xf]
        %v1905 = vld [vmem:[%s7 + $0x14] sm:$0xf]
        %v1906 = vld [vmem:[%s7 + $0x18] sm:$0xf]
        %v1907 = vld [vmem:[%s7 + $0x1c] sm:$0xf]
        %v1908 = vld [vmem:[%s7 + $0x20] sm:$0xf]
        %v1909 = vld [vmem:[%s7 + $0x24] sm:$0xf]
        %v1910 = vld [vmem:[%s7 + $0x28] sm:$0xf]
        %v1911 = vld [vmem:[%s7 + $0x2c] sm:$0xf]
        %v1912 = vld [vmem:[%s7 + $0x30] sm:$0xf]
        %v1913 = vld [vmem:[%s7 + $0x34] sm:$0xf]
        %v1914 = vld [vmem:[%s7 + $0x38] sm:$0xf]
        %v1915 = vld [vmem:[%s7 + $0x3c] sm:$0xf]
        %v1916 = vpack.c.bf16 %v1885, %v1884
        %v1917 = vpack.c.bf16 %v1887, %v1886
        %v1918 = vpack.c.bf16 %v1889, %v1888
        %v1919 = vpack.c.bf16 %v1891, %v1890
        %v1920 = vpack.c.bf16 %v1893, %v1892
        %v1921 = vpack.c.bf16 %v1895, %v1894
        %v1922 = vpack.c.bf16 %v1897, %v1896
        %v1923 = vpack.c.bf16 %v1899, %v1898
        %v1924 = vld [vmem:[%s8] sm:$0xff]
        %v1925 = vld [vmem:[%s8 + $0x8] sm:$0xff]
        %v1926 = vld [vmem:[%s8 + $0x10] sm:$0xff]
        %v1927 = vld [vmem:[%s8 + $0x18] sm:$0xff]
        %v1928 = vld [vmem:[%s8 + $0x20] sm:$0xff]
        %v1929 = vld [vmem:[%s8 + $0x28] sm:$0xff]
        %v1930 = vld [vmem:[%s8 + $0x30] sm:$0xff]
        %v1931 = vld [vmem:[%s8 + $0x38] sm:$0xff]
        %v1932 = vld [vmem:[%s8 + $0x40] sm:$0xff]
        %v1933 = vld [vmem:[%s8 + $0x48] sm:$0xff]
        %v1934 = vld [vmem:[%s8 + $0x50] sm:$0xff]
        %v1935 = vld [vmem:[%s8 + $0x58] sm:$0xff]
        %v1936 = vld [vmem:[%s8 + $0x60] sm:$0xff]
        %v1937 = vld [vmem:[%s8 + $0x68] sm:$0xff]
        %v1938 = vld [vmem:[%s8 + $0x70] sm:$0xff]
        %v1939 = vld [vmem:[%s8 + $0x78] sm:$0xff]
        %1941 = vset.pattern.permute.xlu0 0
        %1942 = vperm.xlu0 %1941, %v1924
        %v1943 = vpop.permute.xlu0 %1942
        %1946 = vset.pattern.permute.xlu0 0
        %1947 = vperm.xlu0 %1946, %v1925
        %v1948 = vpop.permute.xlu0 %1947
        %1951 = vset.pattern.permute.xlu0 0
        %1952 = vperm.xlu0 %1951, %v1926
        %v1953 = vpop.permute.xlu0 %1952
        %1956 = vset.pattern.permute.xlu0 0
        %1957 = vperm.xlu0 %1956, %v1927
        %v1958 = vpop.permute.xlu0 %1957
        %1961 = vset.pattern.permute.xlu0 0
        %1962 = vperm.xlu0 %1961, %v1928
        %v1963 = vpop.permute.xlu0 %1962
        %1966 = vset.pattern.permute.xlu0 0
        %1967 = vperm.xlu0 %1966, %v1929
        %v1968 = vpop.permute.xlu0 %1967
        %1971 = vset.pattern.permute.xlu0 0
        %1972 = vperm.xlu0 %1971, %v1930
        %v1973 = vpop.permute.xlu0 %1972
        %1976 = vset.pattern.permute.xlu0 0
        %1977 = vperm.xlu0 %1976, %v1931
        %v1978 = vpop.permute.xlu0 %1977
        %1981 = vset.pattern.permute.xlu0 0
        %1982 = vperm.xlu0 %1981, %v1932
        %v1983 = vpop.permute.xlu0 %1982
        %1986 = vset.pattern.permute.xlu0 0
        %1987 = vperm.xlu0 %1986, %v1933
        %v1988 = vpop.permute.xlu0 %1987
        %1991 = vset.pattern.permute.xlu0 0
        %1992 = vperm.xlu0 %1991, %v1934
        %v1993 = vpop.permute.xlu0 %1992
        %1996 = vset.pattern.permute.xlu0 0
        %1997 = vperm.xlu0 %1996, %v1935
        %v1998 = vpop.permute.xlu0 %1997
        %2001 = vset.pattern.permute.xlu0 0
        %2002 = vperm.xlu0 %2001, %v1936
        %v2003 = vpop.permute.xlu0 %2002
        %2006 = vset.pattern.permute.xlu0 0
        %2007 = vperm.xlu0 %2006, %v1937
        %v2008 = vpop.permute.xlu0 %2007
        %2011 = vset.pattern.permute.xlu0 0
        %2012 = vperm.xlu0 %2011, %v1938
        %v2013 = vpop.permute.xlu0 %2012
        %2016 = vset.pattern.permute.xlu0 0
        %2017 = vperm.xlu0 %2016, %v1939
        %v2018 = vpop.permute.xlu0 %2017
        %v2036 = vunpack.c.l.b16 %v1900
        %v2037 = vunpack.c.l.b16 %v1901
        %v2038 = vunpack.c.l.b16 %v1902
        %v2039 = vunpack.c.l.b16 %v1903
        %v2040 = vunpack.c.l.b16 %v1904
        %v2041 = vunpack.c.l.b16 %v1905
        %v2042 = vunpack.c.l.b16 %v1906
        %v2043 = vunpack.c.l.b16 %v1907
        %v2044 = vunpack.c.l.b16 %v1908
        %v2045 = vunpack.c.l.b16 %v1909
        %v2046 = vunpack.c.l.b16 %v1910
        %v2047 = vunpack.c.l.b16 %v1911
        %v2048 = vunpack.c.l.b16 %v1912
        %v2049 = vunpack.c.l.b16 %v1913
        %v2050 = vunpack.c.l.b16 %v1914
        %v2051 = vunpack.c.l.b16 %v1915
        %v2052 = vpack.c.b16 %v2037, %v2036
        %v2053 = vpack.c.b16 %v2039, %v2038
        %v2054 = vpack.c.b16 %v2041, %v2040
        %v2055 = vpack.c.b16 %v2043, %v2042
        %v2056 = vpack.c.b16 %v2045, %v2044
        %v2057 = vpack.c.b16 %v2047, %v2046
        %v2058 = vpack.c.b16 %v2049, %v2048
        %v2059 = vpack.c.b16 %v2051, %v2050
        %2068 = vmatprep.subr.bf16.mxu0 0
        %2069 = vmatpush1.bf16.msra.mxu0 %v1916
        %2070 = vmatprep.subr.bf16.mxu0 0
        %2071 = vmatpush1.bf16.msra.mxu0 %v1917
        %2072 = vmatprep.subr.bf16.mxu0 0
        %2073 = vmatpush1.bf16.msra.mxu0 %v1918
        %2074 = vmatprep.subr.bf16.mxu0 0
        %2075 = vmatpush1.bf16.msra.mxu0 %v1919
        %2076 = vmatprep.subr.bf16.mxu0 0
        %2077 = vmatpush1.bf16.msra.mxu0 %v1920
        %2078 = vmatprep.subr.bf16.mxu0 0
        %2079 = vmatpush1.bf16.msra.mxu0 %v1921
        %2080 = vmatprep.subr.bf16.mxu0 0
        %2081 = vmatpush1.bf16.msra.mxu0 %v1922
        %2082 = vmatprep.subr.bf16.mxu0 0
        %2083 = vmatpush1.bf16.msra.mxu0 %v1923
        %2084 = vmatprep.subr.bf16.mxu0 0
        %2085 = vmatpush1.bf16.msra.mxu0 0
        %2086 = vmatprep.subr.bf16.mxu0 0
        %2087 = vmatpush1.bf16.msra.mxu0 0
        %2088 = vmatprep.subr.bf16.mxu0 0
        %2089 = vmatpush1.bf16.msra.mxu0 0
        %2090 = vmatprep.subr.bf16.mxu0 0
        %2091 = vmatpush1.bf16.msra.mxu0 0
        %2092 = vmatprep.subr.bf16.mxu0 0
        %2093 = vmatpush1.bf16.msra.mxu0 0
        %2094 = vmatprep.subr.bf16.mxu0 0
        %2095 = vmatpush1.bf16.msra.mxu0 0
        %2096 = vmatprep.subr.bf16.mxu0 0
        %2097 = vmatpush1.bf16.msra.mxu0 0
        %2098 = vmatprep.subr.bf16.mxu0 0
        %2099 = vmatpush1.bf16.msra.mxu0 0
        %2100 = vmatprep.mubr.bf16.mxu0 0
        %2101 = vmatmul.mubr.bf16.gmra.mrb[0].mxu0 %v2052
        %v2102 = vpop.f32.mrb[0].mxu0
        %v2103 = vadd.f32 %v1943, %v2102
        %v2104 = vpop.f32.mrb[0].mxu0
        %v2105 = vpop.f32.mrb[0].mxu0
        %v2106 = vadd.f32 %v1948, %v2105
        %v2107 = vpop.f32.mrb[0].mxu0
        %2108 = vmatprep.mubr.bf16.mxu0 0
        %2109 = vmatmul.mubr.bf16.gmra.mrb[0].mxu0 %v2053
        %v2110 = vpop.f32.mrb[0].mxu0
        %v2111 = vadd.f32 %v1953, %v2110
        %v2112 = vpop.f32.mrb[0].mxu0
        %v2113 = vpop.f32.mrb[0].mxu0
        %v2114 = vadd.f32 %v1958, %v2113
        %v2115 = vpop.f32.mrb[0].mxu0
        %2116 = vmatprep.mubr.bf16.mxu0 0
        %2117 = vmatmul.mubr.bf16.gmra.mrb[0].mxu0 %v2054
        %v2118 = vpop.f32.mrb[0].mxu0
        %v2119 = vadd.f32 %v1963, %v2118
        %v2120 = vpop.f32.mrb[0].mxu0
        %v2121 = vpop.f32.mrb[0].mxu0
        %v2122 = vadd.f32 %v1968, %v2121
        %v2123 = vpop.f32.mrb[0].mxu0
        %2124 = vmatprep.mubr.bf16.mxu0 0
        %2125 = vmatmul.mubr.bf16.gmra.mrb[0].mxu0 %v2055
        %v2126 = vpop.f32.mrb[0].mxu0
        %v2127 = vadd.f32 %v1973, %v2126
        %v2128 = vpop.f32.mrb[0].mxu0
        %v2129 = vpop.f32.mrb[0].mxu0
        %v2130 = vadd.f32 %v1978, %v2129
        %v2131 = vpop.f32.mrb[0].mxu0
        %2132 = vmatprep.mubr.bf16.mxu0 0
        %2133 = vmatmul.mubr.bf16.gmra.mrb[0].mxu0 %v2056
        %v2134 = vpop.f32.mrb[0].mxu0
        %v2135 = vadd.f32 %v1983, %v2134
        %v2136 = vpop.f32.mrb[0].mxu0
        %v2137 = vpop.f32.mrb[0].mxu0
        %v2138 = vadd.f32 %v1988, %v2137
        %v2139 = vpop.f32.mrb[0].mxu0
        %2140 = vmatprep.mubr.bf16.mxu0 0
        %2141 = vmatmul.mubr.bf16.gmra.mrb[0].mxu0 %v2057
        %v2142 = vpop.f32.mrb[0].mxu0
        %v2143 = vadd.f32 %v1993, %v2142
        %v2144 = vpop.f32.mrb[0].mxu0
        %v2145 = vpop.f32.mrb[0].mxu0
        %v2146 = vadd.f32 %v1998, %v2145
        %v2147 = vpop.f32.mrb[0].mxu0
        %2148 = vmatprep.mubr.bf16.mxu0 0
        %2149 = vmatmul.mubr.bf16.gmra.mrb[0].mxu0 %v2058
        %v2150 = vpop.f32.mrb[0].mxu0
        %v2151 = vadd.f32 %v2003, %v2150
        %v2152 = vpop.f32.mrb[0].mxu0
        %v2153 = vpop.f32.mrb[0].mxu0
        %v2154 = vadd.f32 %v2008, %v2153
        %v2155 = vpop.f32.mrb[0].mxu0
        %2156 = vmatprep.mubr.bf16.mxu0 0
        %2157 = vmatmul.mubr.bf16.gmra.mrb[0].mxu0 %v2059
        %v2158 = vpop.f32.mrb[0].mxu0
        %v2159 = vadd.f32 %v2013, %v2158
        %v2160 = vpop.f32.mrb[0].mxu0
        %v2161 = vpop.f32.mrb[0].mxu0
        %v2162 = vadd.f32 %v2018, %v2161
        %v2163 = vpop.f32.mrb[0].mxu0
        %2164 = vdwg.mxu0
        %v2165 = vmax.f32 %v2103, 0.0
        %v2166 = vmax.f32 %v2106, 0.0
        %v2167 = vmax.f32 %v2111, 0.0
        %v2168 = vmax.f32 %v2114, 0.0
        %v2169 = vmax.f32 %v2119, 0.0
        %v2170 = vmax.f32 %v2122, 0.0
        %v2171 = vmax.f32 %v2127, 0.0
        %v2172 = vmax.f32 %v2130, 0.0
        %v2173 = vmax.f32 %v2135, 0.0
        %v2174 = vmax.f32 %v2138, 0.0
        %v2175 = vmax.f32 %v2143, 0.0
        %v2176 = vmax.f32 %v2146, 0.0
        %v2177 = vmax.f32 %v2151, 0.0
        %v2178 = vmax.f32 %v2154, 0.0
        %v2179 = vmax.f32 %v2159, 0.0
        %v2180 = vmax.f32 %v2162, 0.0
        %v2181 = vld [vmem:[%s9] sm:$0x1]
        %v2182 = vpack.c.bf16 %v2166, %v2165
        %v2183 = vpack.c.bf16 %v2168, %v2167
        %v2184 = vpack.c.bf16 %v2170, %v2169
        %v2185 = vpack.c.bf16 %v2172, %v2171
        %v2186 = vpack.c.bf16 %v2174, %v2173
        %v2187 = vpack.c.bf16 %v2176, %v2175
        %v2188 = vpack.c.bf16 %v2178, %v2177
        %v2189 = vpack.c.bf16 %v2180, %v2179
        %v2190 = vld [vmem:[#allocation2] sm:$0x1]
        %2192 = vset.pattern.permute.xlu0 0
        %2193 = vperm.xlu0 %2192, %v2190
        %v2194 = vpop.permute.xlu0 %2193
        %v2196 = vlaneseq
        %v2197 = vshrl.u32 %v2196, 7
        %v2198 = vsub.s32 0, %v2197
        %v2199 = vrot.slane %v2194, %v2198
        %2200 = vmatprep.subr.bf16.mxu0 0
        %2201 = vmatpush1.bf16.msra.mxu0 %v2182
        %2202 = vmatprep.subr.bf16.mxu0 0
        %2203 = vmatpush1.bf16.msra.mxu0 %v2183
        %2204 = vmatprep.subr.bf16.mxu0 0
        %2205 = vmatpush1.bf16.msra.mxu0 %v2184
        %2206 = vmatprep.subr.bf16.mxu0 0
        %2207 = vmatpush1.bf16.msra.mxu0 %v2185
        %2208 = vmatprep.subr.bf16.mxu0 0
        %2209 = vmatpush1.bf16.msra.mxu0 %v2186
        %2210 = vmatprep.subr.bf16.mxu0 0
        %2211 = vmatpush1.bf16.msra.mxu0 %v2187
        %2212 = vmatprep.subr.bf16.mxu0 0
        %2213 = vmatpush1.bf16.msra.mxu0 %v2188
        %2214 = vmatprep.subr.bf16.mxu0 0
        %2215 = vmatpush1.bf16.msra.mxu0 %v2189
        %2216 = vmatprep.subr.bf16.mxu0 0
        %2217 = vmatpush1.bf16.msra.mxu0 0
        %2218 = vmatprep.subr.bf16.mxu0 0
        %2219 = vmatpush1.bf16.msra.mxu0 0
        %2220 = vmatprep.subr.bf16.mxu0 0
        %2221 = vmatpush1.bf16.msra.mxu0 0
        %2222 = vmatprep.subr.bf16.mxu0 0
        %2223 = vmatpush1.bf16.msra.mxu0 0
        %2224 = vmatprep.subr.bf16.mxu0 0
        %2225 = vmatpush1.bf16.msra.mxu0 0
        %2226 = vmatprep.subr.bf16.mxu0 0
        %2227 = vmatpush1.bf16.msra.mxu0 0
        %2228 = vmatprep.subr.bf16.mxu0 0
        %2229 = vmatpush1.bf16.msra.mxu0 0
        %2230 = vmatprep.subr.bf16.mxu0 0
        %2231 = vmatpush1.bf16.msra.mxu0 0
        %2232 = vmatprep.mubr.bf16.mxu0 0
        %2233 = vmatmul.mubr.bf16.gmra.mrb[0].mxu0 %v2181
        %v2234 = vpop.f32.mrb[0].mxu0
        %v2235 = vadd.f32 %v2199, %v2234
        %v2236 = vpop.f32.mrb[0].mxu0
        %v2237 = vpop.f32.mrb[0].mxu0
        %v2238 = vpop.f32.mrb[0].mxu0
        %2239 = vdwg.mxu0
        %v2240 = vxor.u32 %v2235, 2147483648
        %v2241 = vmul.f32 %v2240, 1.442695
        %v2242 = vpow.pop %v2241
        %v2243 = vadd.f32 %v2242, 1.0
        %v2244 = vrcp.pop %v2243
        %v2245 = vmul.f32 1.0, %v2244
        %2246 = vst [vmem:[%s472] sm:$0x1] %v2245
        %s2247 = sand.u32 %s311, 1
        %s2248 = scalar_lea.sflag [#allocation4], %s2247
        %s2249 = sand.u32 %s311, 1
        %s2250 = scalar_lea.vmem [#allocation3], %s2249
        // Predicated region
        $region65: #{occupancy_network_forward.3} parent=63 // pred_check
          %p2251 = pneg %p321
        $region66: #{occupancy_network_forward.3} parent=63 // pred_check_branch
          %2253 = sbr.rel (%p2251) target = $region68
        $region67: #{occupancy_network_forward.3} parent=63 // pred_region
          %s2255 = ssub.s32 16, 16
          %2256 = vsyncadd %s2248, %s2255
          %s2257 = sadd.s32 %s32, %s31
          %s2258 = smul.addr %s2257, 16
          %s2259 = scalar_lea.hbm %s11, %s2258
          %s2261 = sshll.u32 %s2250, 4
          %s2262 = int_to_ptr.vmem [resolvable:$true] %s2261
          %2264 = dma.vmem_to_hbm [thread:$0]  %s2262, 16, %s2259, %s2248
        $region68: #{occupancy_network_forward.3} parent=63 // pred_fallthru
          _
      $region64: #{occupancy_network_forward.3} parent=5 // pred_fallthru
        _
      %p2265 = scmp.le.s32.totalorder 2, %s22
      // Predicated region
      $region69: #{occupancy_network_forward.3} parent=5 // pred_check
        %p2266 = pneg %p2265
      $region70: #{occupancy_network_forward.3} parent=5 // pred_check_branch
        %2268 = sbr.rel (%p2266) target = $region72
      $region71: #{occupancy_network_forward.3} parent=5 // pred_region
        %s2269 = ssub.s32 %s22, 2
        // Predicated region
        $region73: #{occupancy_network_forward.3} parent=71 // pred_check
          %p2270 = pneg %p327
        $region74: #{occupancy_network_forward.3} parent=71 // pred_check_branch
          %2272 = sbr.rel (%p2270) target = $region76
        $region75: #{occupancy_network_forward.3} parent=71 // pred_region
          %s2273 = sand.u32 %s312, 1
          %s2274 = scalar_lea.sflag [#allocation4], %s2273
          %s2275 = sand.u32 %s312, 1
          %s2276 = scalar_lea.vmem [#allocation3], %s2275
          %2277 = dma.done %s2274, 16
        $region76: #{occupancy_network_forward.3} parent=71 // pred_fallthru
          _
      $region72: #{occupancy_network_forward.3} parent=5 // pred_fallthru
        _
    $region6: #{occupancy_network_forward.3} parent=1 // loop_footer
      %s26 = sadd.s32 1, %s22
    $region7: #{occupancy_network_forward.3} parent=1 // loop_footer_branch
      %21 = sbr.rel target = $region3
    $region8: #{occupancy_network_forward.3} parent=1 // loop_exit
      _
    %2278 = vsyncpa [#allocation4], 1
    %s2279 = scalar_lea.sflag [#allocation4], 1
    %2280 = vsyncpa %s2279, 1

// kernel: occupancy_network_forward.2
$region0: #{occupancy_network_forward.2}
  #allocation0 [shape = 'u32[]', space=smem, size = 0x4, offset = 0x4, fixed_abs, tag = 'smem constant byte address 0x4 - core index']
  #allocation1 [shape = 'u32[144,128]{1,0:T(1,128)}', space=vmem, size = 0x12000, scoped, tag = 'internal scratch']
  #allocation2 [shape = 'bf16[32,640]{1,0:T(16,128)(2,1)}', space=vmem, size = 0xa000, scoped, tag = 'scratch operand']
  #allocation3 [shape = 'bf16[36,384]{1,0:T(8,128)(2,1)}', space=vmem, size = 0x7800, scoped, tag = 'scratch operand']
  #allocation4 [shape = 'bf16[288,384]{1,0:T(16,128)(2,1)}', space=vmem, size = 0x36000, scoped, tag = 'scratch operand']
  %s0 = inlined_call_operand.vmem [shape: bf16[2,4,512], index: 0, kind: input, shape index: {}]
  %s1 = inlined_call_operand.vmem [shape: f32[1,512], index: 1, kind: input, shape index: {}]
  %s2 = inlined_call_operand.vmem [shape: bf16[32,36], index: 2, kind: input, shape index: {}]
  %s3 = inlined_call_operand.vmem [shape: f32[32,1], index: 3, kind: input, shape index: {}]
  %s4 = inlined_call_operand.vmem [shape: bf16[64,288], index: 4, kind: input, shape index: {}]
  %s5 = inlined_call_operand.vmem [shape: f32[64,1], index: 5, kind: input, shape index: {}, may-alias: {5,7}]
  %s6 = inlined_call_operand.vmem [shape: bf16[64,64], index: 6, kind: input, shape index: {}]
  %s7 = inlined_call_operand.vmem [shape: f32[64,1], index: 7, kind: input, shape index: {}, may-alias: {5,7}]
  %s8 = inlined_call_operand.vmem [shape: bf16[2,64,384], index: 8, kind: output, shape index: {0}]
  %s9 = inlined_call_operand.vmem [shape: f32[2,64,1], index: 9, kind: output, shape index: {1}]
  %10 = xla_tuple %s8, %s9
  %s11 = sld [smem:[#allocation0]]
  $region73: #{occupancy_network_forward.2} parent=0
    _
  %s13 = ssub.s32 1, %s11
  %s14 = scalar_select 0, %s13, %s11
  loop: start=0, step=1, limit=4
  $region2: #{occupancy_network_forward.2} parent=0 // loop_pre_header
    _
  $region3: #{occupancy_network_forward.2} parent=0 // loop_header
    %s16 = sphi 0, %s20
    %p17 = scmp.ge.s32.totalorder %s16, 4
    %s26 = sphi 0, %s28
    %s29 = sphi 0, %s26
    %s30 = sphi 0, %s29
    %s46 = sphi 0, %s30
    %s50 = sphi 0, %s50
    %s52 = sphi 0, %s50
    %s53 = sphi 0, %s52
    %s67 = sphi 0, %s53
    %s71 = sphi 0, %s71
    %s73 = sphi 0, %s71
    %s74 = sphi 0, %s73
    %s88 = sphi 0, %s74
    %s92 = sphi 0, %s92
    %s94 = sphi 0, %s92
    %s95 = sphi 0, %s94
    %s109 = sphi 0, %s95
    %s113 = sphi 0, %s113
    %s115 = sphi 0, %s113
    %s116 = sphi 0, %s115
    %s130 = sphi 0, %s116
    %s134 = sphi 0, %s134
    %s136 = sphi 0, %s134
    %s137 = sphi 0, %s136
    %s151 = sphi 0, %s137
    %s155 = sphi 0, %s155
    %s157 = sphi 0, %s155
    %s158 = sphi 0, %s157
    %s172 = sphi 0, %s158
    %s176 = sphi 0, %s176
    %s178 = sphi 0, %s176
    %s179 = sphi 0, %s178
    %s193 = sphi 0, %s179
    %s199 = sphi 0, %s201
    %s202 = sphi 0, %s199
    %s203 = sphi 0, %s202
    %s219 = sphi 0, %s203
    %s225 = sphi 0, %s227
    %s228 = sphi 0, %s225
    %s229 = sphi 0, %s228
    %s245 = sphi 0, %s229
  $region4: #{occupancy_network_forward.2} parent=0 // loop_header_branch
    %19 = sbr.rel (%p17) target = $region8
  $region5: #{occupancy_network_forward.2} parent=0 // loop_body
    %s21 = ssub.s32 %s16, 1
    %s22 = ssub.s32 %s16, 2
    %s23 = sadd.s32 %s16, 1
    %s24 = ssub.s32 %s16, %s23
    %p25 = scmp.eq.s32.totalorder %s24, 0
    %s27 = sadd.s32 %s26, 1
    %s28 = scalar_select %p25, %s26, %s27
    %p31 = pneg %p25
    %p32 = scmp.eq.s32.totalorder %s16, 1
    %p33 = por %p31, %p32
    %p34 = scmp.ne.s32.totalorder %s26, %s29
    %p35 = scmp.eq.s32.totalorder %s16, 0
    %p36 = por %p34, %p35
    %p37 = scmp.ne.s32.totalorder %s26, %s29
    %p38 = scmp.eq.s32.totalorder %s21, 1
    %p39 = por %p37, %p38
    %p40 = scmp.ne.s32.totalorder %s29, %s30
    %p41 = scmp.eq.s32.totalorder %s21, 0
    %p42 = por %p40, %p41
    %p43 = scmp.ne.s32.totalorder %s29, %s30
    %p44 = scmp.eq.s32.totalorder %s22, 1
    %p45 = por %p43, %p44
    %p47 = scmp.ne.s32.totalorder %s30, %s46
    %p48 = scmp.eq.s32.totalorder %s22, 0
    %p49 = por %p47, %p48
    %s51 = sadd.s32 %s50, 1
    %p54 = scmp.eq.s32.totalorder %s16, 1
    %p55 = scmp.ne.s32.totalorder %s50, %s52
    %p56 = scmp.eq.s32.totalorder %s16, 0
    %p57 = por %p55, %p56
    %p58 = scmp.ne.s32.totalorder %s50, %s52
    %p59 = scmp.eq.s32.totalorder %s21, 1
    %p60 = por %p58, %p59
    %p61 = scmp.ne.s32.totalorder %s52, %s53
    %p62 = scmp.eq.s32.totalorder %s21, 0
    %p63 = por %p61, %p62
    %p64 = scmp.ne.s32.totalorder %s52, %s53
    %p65 = scmp.eq.s32.totalorder %s22, 1
    %p66 = por %p64, %p65
    %p68 = scmp.ne.s32.totalorder %s53, %s67
    %p69 = scmp.eq.s32.totalorder %s22, 0
    %p70 = por %p68, %p69
    %s72 = sadd.s32 %s71, 1
    %p75 = scmp.eq.s32.totalorder %s16, 1
    %p76 = scmp.ne.s32.totalorder %s71, %s73
    %p77 = scmp.eq.s32.totalorder %s16, 0
    %p78 = por %p76, %p77
    %p79 = scmp.ne.s32.totalorder %s71, %s73
    %p80 = scmp.eq.s32.totalorder %s21, 1
    %p81 = por %p79, %p80
    %p82 = scmp.ne.s32.totalorder %s73, %s74
    %p83 = scmp.eq.s32.totalorder %s21, 0
    %p84 = por %p82, %p83
    %p85 = scmp.ne.s32.totalorder %s73, %s74
    %p86 = scmp.eq.s32.totalorder %s22, 1
    %p87 = por %p85, %p86
    %p89 = scmp.ne.s32.totalorder %s74, %s88
    %p90 = scmp.eq.s32.totalorder %s22, 0
    %p91 = por %p89, %p90
    %s93 = sadd.s32 %s92, 1
    %p96 = scmp.eq.s32.totalorder %s16, 1
    %p97 = scmp.ne.s32.totalorder %s92, %s94
    %p98 = scmp.eq.s32.totalorder %s16, 0
    %p99 = por %p97, %p98
    %p100 = scmp.ne.s32.totalorder %s92, %s94
    %p101 = scmp.eq.s32.totalorder %s21, 1
    %p102 = por %p100, %p101
    %p103 = scmp.ne.s32.totalorder %s94, %s95
    %p104 = scmp.eq.s32.totalorder %s21, 0
    %p105 = por %p103, %p104
    %p106 = scmp.ne.s32.totalorder %s94, %s95
    %p107 = scmp.eq.s32.totalorder %s22, 1
    %p108 = por %p106, %p107
    %p110 = scmp.ne.s32.totalorder %s95, %s109
    %p111 = scmp.eq.s32.totalorder %s22, 0
    %p112 = por %p110, %p111
    %s114 = sadd.s32 %s113, 1
    %p117 = scmp.eq.s32.totalorder %s16, 1
    %p118 = scmp.ne.s32.totalorder %s113, %s115
    %p119 = scmp.eq.s32.totalorder %s16, 0
    %p120 = por %p118, %p119
    %p121 = scmp.ne.s32.totalorder %s113, %s115
    %p122 = scmp.eq.s32.totalorder %s21, 1
    %p123 = por %p121, %p122
    %p124 = scmp.ne.s32.totalorder %s115, %s116
    %p125 = scmp.eq.s32.totalorder %s21, 0
    %p126 = por %p124, %p125
    %p127 = scmp.ne.s32.totalorder %s115, %s116
    %p128 = scmp.eq.s32.totalorder %s22, 1
    %p129 = por %p127, %p128
    %p131 = scmp.ne.s32.totalorder %s116, %s130
    %p132 = scmp.eq.s32.totalorder %s22, 0
    %p133 = por %p131, %p132
    %s135 = sadd.s32 %s134, 1
    %p138 = scmp.eq.s32.totalorder %s16, 1
    %p139 = scmp.ne.s32.totalorder %s134, %s136
    %p140 = scmp.eq.s32.totalorder %s16, 0
    %p141 = por %p139, %p140
    %p142 = scmp.ne.s32.totalorder %s134, %s136
    %p143 = scmp.eq.s32.totalorder %s21, 1
    %p144 = por %p142, %p143
    %p145 = scmp.ne.s32.totalorder %s136, %s137
    %p146 = scmp.eq.s32.totalorder %s21, 0
    %p147 = por %p145, %p146
    %p148 = scmp.ne.s32.totalorder %s136, %s137
    %p149 = scmp.eq.s32.totalorder %s22, 1
    %p150 = por %p148, %p149
    %p152 = scmp.ne.s32.totalorder %s137, %s151
    %p153 = scmp.eq.s32.totalorder %s22, 0
    %p154 = por %p152, %p153
    %s156 = sadd.s32 %s155, 1
    %p159 = scmp.eq.s32.totalorder %s16, 1
    %p160 = scmp.ne.s32.totalorder %s155, %s157
    %p161 = scmp.eq.s32.totalorder %s16, 0
    %p162 = por %p160, %p161
    %p163 = scmp.ne.s32.totalorder %s155, %s157
    %p164 = scmp.eq.s32.totalorder %s21, 1
    %p165 = por %p163, %p164
    %p166 = scmp.ne.s32.totalorder %s157, %s158
    %p167 = scmp.eq.s32.totalorder %s21, 0
    %p168 = por %p166, %p167
    %p169 = scmp.ne.s32.totalorder %s157, %s158
    %p170 = scmp.eq.s32.totalorder %s22, 1
    %p171 = por %p169, %p170
    %p173 = scmp.ne.s32.totalorder %s158, %s172
    %p174 = scmp.eq.s32.totalorder %s22, 0
    %p175 = por %p173, %p174
    %s177 = sadd.s32 %s176, 1
    %p180 = scmp.eq.s32.totalorder %s16, 1
    %p181 = scmp.ne.s32.totalorder %s176, %s178
    %p182 = scmp.eq.s32.totalorder %s16, 0
    %p183 = por %p181, %p182
    %p184 = scmp.ne.s32.totalorder %s176, %s178
    %p185 = scmp.eq.s32.totalorder %s21, 1
    %p186 = por %p184, %p185
    %p187 = scmp.ne.s32.totalorder %s178, %s179
    %p188 = scmp.eq.s32.totalorder %s21, 0
    %p189 = por %p187, %p188
    %p190 = scmp.ne.s32.totalorder %s178, %s179
    %p191 = scmp.eq.s32.totalorder %s22, 1
    %p192 = por %p190, %p191
    %p194 = scmp.ne.s32.totalorder %s179, %s193
    %p195 = scmp.eq.s32.totalorder %s22, 0
    %p196 = por %p194, %p195
    %s197 = ssub.s32 %s16, %s23
    %p198 = scmp.eq.s32.totalorder %s197, 0
    %s200 = sadd.s32 %s199, 1
    %s201 = scalar_select %p198, %s199, %s200
    %p204 = pneg %p198
    %p205 = scmp.eq.s32.totalorder %s16, 1
    %p206 = por %p204, %p205
    %p207 = scmp.ne.s32.totalorder %s199, %s202
    %p208 = scmp.eq.s32.totalorder %s16, 0
    %p209 = por %p207, %p208
    %p210 = scmp.ne.s32.totalorder %s199, %s202
    %p211 = scmp.eq.s32.totalorder %s21, 1
    %p212 = por %p210, %p211
    %p213 = scmp.ne.s32.totalorder %s202, %s203
    %p214 = scmp.eq.s32.totalorder %s21, 0
    %p215 = por %p213, %p214
    %p216 = scmp.ne.s32.totalorder %s202, %s203
    %p217 = scmp.eq.s32.totalorder %s22, 1
    %p218 = por %p216, %p217
    %p220 = scmp.ne.s32.totalorder %s203, %s219
    %p221 = scmp.eq.s32.totalorder %s22, 0
    %p222 = por %p220, %p221
    %s223 = ssub.s32 %s16, %s23
    %p224 = scmp.eq.s32.totalorder %s223, 0
    %s226 = sadd.s32 %s225, 1
    %s227 = scalar_select %p224, %s225, %s226
    %p230 = pneg %p224
    %p231 = scmp.eq.s32.totalorder %s16, 1
    %p232 = por %p230, %p231
    %p233 = scmp.ne.s32.totalorder %s225, %s228
    %p234 = scmp.eq.s32.totalorder %s16, 0
    %p235 = por %p233, %p234
    %p236 = scmp.ne.s32.totalorder %s225, %s228
    %p237 = scmp.eq.s32.totalorder %s21, 1
    %p238 = por %p236, %p237
    %p239 = scmp.ne.s32.totalorder %s228, %s229
    %p240 = scmp.eq.s32.totalorder %s21, 0
    %p241 = por %p239, %p240
    %p242 = scmp.ne.s32.totalorder %s228, %s229
    %p243 = scmp.eq.s32.totalorder %s22, 1
    %p244 = por %p242, %p243
    %p246 = scmp.ne.s32.totalorder %s229, %s245
    %p247 = scmp.eq.s32.totalorder %s22, 0
    %p248 = por %p246, %p247
    %p249 = scmp.le.s32.totalorder 1, %s16
    %p250 = scmp.lt.s32.totalorder %s16, 3
    %p251 = pnand %p249, %p250
    %p252 = pneg %p251
    // Predicated region
    $region9: #{occupancy_network_forward.2} parent=5 // pred_check
      _
    $region10: #{occupancy_network_forward.2} parent=5 // pred_check_branch
      %254 = sbr.rel (%p251) target = $region12
    $region11: #{occupancy_network_forward.2} parent=5 // pred_region
      %s255 = ssub.s32 %s16, 1
      // Predicated region
      $region13: #{occupancy_network_forward.2} parent=11 // pred_check
        %p256 = pneg %p63
      $region14: #{occupancy_network_forward.2} parent=11 // pred_check_branch
        %258 = sbr.rel (%p256) target = $region16
      $region15: #{occupancy_network_forward.2} parent=11 // pred_region
        _
      $region16: #{occupancy_network_forward.2} parent=11 // pred_fallthru
        _
      // Predicated region
      $region17: #{occupancy_network_forward.2} parent=11 // pred_check
        %p259 = pneg %p84
      $region18: #{occupancy_network_forward.2} parent=11 // pred_check_branch
        %261 = sbr.rel (%p259) target = $region20
      $region19: #{occupancy_network_forward.2} parent=11 // pred_region
        _
      $region20: #{occupancy_network_forward.2} parent=11 // pred_fallthru
        _
      // Predicated region
      $region21: #{occupancy_network_forward.2} parent=11 // pred_check
        %p262 = pneg %p105
      $region22: #{occupancy_network_forward.2} parent=11 // pred_check_branch
        %264 = sbr.rel (%p262) target = $region24
      $region23: #{occupancy_network_forward.2} parent=11 // pred_region
        _
      $region24: #{occupancy_network_forward.2} parent=11 // pred_fallthru
        _
      // Predicated region
      $region25: #{occupancy_network_forward.2} parent=11 // pred_check
        %p265 = pneg %p126
      $region26: #{occupancy_network_forward.2} parent=11 // pred_check_branch
        %267 = sbr.rel (%p265) target = $region28
      $region27: #{occupancy_network_forward.2} parent=11 // pred_region
        _
      $region28: #{occupancy_network_forward.2} parent=11 // pred_fallthru
        _
      // Predicated region
      $region29: #{occupancy_network_forward.2} parent=11 // pred_check
        %p268 = pneg %p147
      $region30: #{occupancy_network_forward.2} parent=11 // pred_check_branch
        %270 = sbr.rel (%p268) target = $region32
      $region31: #{occupancy_network_forward.2} parent=11 // pred_region
        _
      $region32: #{occupancy_network_forward.2} parent=11 // pred_fallthru
        _
      // Predicated region
      $region33: #{occupancy_network_forward.2} parent=11 // pred_check
        %p271 = pneg %p168
      $region34: #{occupancy_network_forward.2} parent=11 // pred_check_branch
        %273 = sbr.rel (%p271) target = $region36
      $region35: #{occupancy_network_forward.2} parent=11 // pred_region
        _
      $region36: #{occupancy_network_forward.2} parent=11 // pred_fallthru
        _
      // Predicated region
      $region37: #{occupancy_network_forward.2} parent=11 // pred_check
        %p274 = pneg %p189
      $region38: #{occupancy_network_forward.2} parent=11 // pred_check_branch
        %276 = sbr.rel (%p274) target = $region40
      $region39: #{occupancy_network_forward.2} parent=11 // pred_region
        _
      $region40: #{occupancy_network_forward.2} parent=11 // pred_fallthru
        _
    $region12: #{occupancy_network_forward.2} parent=5 // pred_fallthru
      _
    %p277 = scmp.lt.s32.totalorder %s16, 2
    // Predicated region
    $region41: #{occupancy_network_forward.2} parent=5 // pred_check
      %p278 = pneg %p277
    $region42: #{occupancy_network_forward.2} parent=5 // pred_check_branch
      %280 = sbr.rel (%p278) target = $region44
    $region43: #{occupancy_network_forward.2} parent=5 // pred_region
      // Predicated region
      $region45: #{occupancy_network_forward.2} parent=43 // pred_check
        %p281 = pneg %p36
      $region46: #{occupancy_network_forward.2} parent=43 // pred_check_branch
        %283 = sbr.rel (%p281) target = $region48
      $region47: #{occupancy_network_forward.2} parent=43 // pred_region
        %p284 = scmp.lt.s32.totalorder %s16, 1
        %s285 = scalar_select %p284, %s16, 1
        %s286 = smul.addr %s285, 4
        %s287 = smul.addr %s286, 2
        %s288 = scalar_lea.vmem %s0, %s287
      $region48: #{occupancy_network_forward.2} parent=43 // pred_fallthru
        _
    $region44: #{occupancy_network_forward.2} parent=5 // pred_fallthru
      _
    %p289 = scmp.le.s32.totalorder 1, %s16
    %p290 = scmp.lt.s32.totalorder %s16, 3
    %p291 = pnand %p289, %p290
    %p292 = pneg %p291
    // Predicated region
    $region49: #{occupancy_network_forward.2} parent=5 // pred_check
      _
    $region50: #{occupancy_network_forward.2} parent=5 // pred_check_branch
      %294 = sbr.rel (%p291) target = $region52
    $region51: #{occupancy_network_forward.2} parent=5 // pred_region
      %s295 = ssub.s32 %s16, 1
      %p296 = scmp.lt.s32.totalorder %s21, 1
      %s297 = scalar_select %p296, %s21, 1
      %s298 = smul.addr %s297, 4
      %s299 = smul.addr %s298, 2
      %s300 = scalar_lea.vmem %s0, %s299
      %p301 = pneg %p42
      %p302 = pneg %p39
      %p303 = pneg %p63
      %p304 = pneg %p60
      %p305 = pneg %p84
      %p306 = pneg %p81
      %p307 = pneg %p105
      %p308 = pneg %p102
      %p309 = pneg %p126
      %p310 = pneg %p123
      %p311 = pneg %p147
      %p312 = pneg %p144
      %p313 = pneg %p168
      %p314 = pneg %p165
      %p315 = pneg %p189
      %p316 = pneg %p186
      %p317 = pneg %p215
      %p318 = pneg %p212
      %p319 = scmp.lt.s32.totalorder %s21, 1
      %s320 = scalar_select %p319, %s21, 1
      %s321 = smul.addr %s320, 24
      %s322 = smul.addr %s321, 4
      %s323 = scalar_lea.vmem %s8, %s322
      %p324 = pneg %p241
      %p325 = pneg %p238
      %p326 = scmp.lt.s32.totalorder %s21, 1
      %s327 = scalar_select %p326, %s21, 1
      %s328 = smul.addr %s327, 8
      %s329 = smul.addr %s328, 8
      %s330 = scalar_lea.vmem %s9, %s329
      %p331 = scmp.lt.s32.totalorder %s21, 1
      %s332 = scalar_select %p331, %s21, 1
      %s333 = smul.addr %s332, 4
      %s334 = smul.addr %s333, 2
      %s335 = scalar_lea.vmem %s0, %s334
      %p336 = scmp.lt.s32.totalorder %s21, 1
      %s337 = scalar_select %p336, %s21, 1
      %s338 = smul.addr %s337, 24
      %s339 = smul.addr %s338, 4
      %s340 = scalar_lea.vmem %s8, %s339
      %p341 = scmp.lt.s32.totalorder %s21, 1
      %s342 = scalar_select %p341, %s21, 1
      %s343 = smul.addr %s342, 8
      %s344 = smul.addr %s343, 8
      %s345 = scalar_lea.vmem %s9, %s344
      %v347 = vld [vmem:[%s1] sm:$0xf]
      %v348 = vld [vmem:[%s335] sm:$0x3f]
      %v350 = vcombine.high %v348, %v348
      %v352 = vunpack.c.l.s4 1983009808
      %v353 = vunpack.c.0.s8 %v352
      %v354 = vlaneseq
      %v355 = vshrl.u32 %v354, 7
      %v356 = vsub.s32 %v353, %v355
      %v357 = vrot.slane %v348, %v356
      %v359 = vunpack.c.l.s4 1983009808
      %v360 = vunpack.c.0.s8 %v359
      %v361 = vlaneseq
      %v362 = vshrl.u32 %v361, 7
      %v363 = vsub.s32 %v360, %v362
      %v364 = vrot.slane %v350, %v363
      %367 = vst [vmem:[#allocation3] sm:$0x33] %v357
      %368 = vst [vmem:[#allocation3 + $0x8] sm:$0x3] %v364
      %v369 = vld [vmem:[%s335] sm:$0xff]
      %v371 = vcombine.low %v369, %v369
      %v373 = vunpack.c.l.s4 1983009808
      %v374 = vunpack.c.0.s8 %v373
      %v375 = vlaneseq
      %v376 = vshrl.u32 %v375, 7
      %v377 = vsub.s32 %v374, %v376
      %v378 = vrot.slane %v371, %v377
      %v380 = vunpack.c.l.s4 1983009808
      %v381 = vunpack.c.0.s8 %v380
      %v382 = vlaneseq
      %v383 = vshrl.u32 %v382, 7
      %v384 = vsub.s32 %v381, %v383
      %v385 = vrot.slane %v369, %v384
      %386 = vrot.lane.b32.xlu0 %v378, 127
      %v387 = vpop.permute.xlu0 %386
      %388 = vrot.lane.b32.xlu0 %v385, 127
      %v389 = vpop.permute.xlu0 %388
      %v390 = vrot.slane %v387, 4
      %v391 = vrot.slane %v389, 4
      %vm392 = vcmask 1043456
      %v393 = vsel %vm392, %v390, %v391
      %vm394 = vcmask 1039360
      %v395 = vsel %vm394, %v387, %v393
      %v396 = vsel %vm394, %v389, %v391
      %399 = vst [vmem:[#allocation3] sm:$0xcc] %v395
      %400 = vst [vmem:[#allocation3 + $0x8] sm:$0xc] %v396
      %v401 = vld [vmem:[%s335] sm:$0xff]
      %v403 = vcombine.high %v401, %v401
      %v405 = vunpack.c.l.s4 1983009808
      %v406 = vunpack.c.0.s8 %v405
      %v407 = vlaneseq
      %v408 = vshrl.u32 %v407, 7
      %v409 = vsub.s32 %v406, %v408
      %v410 = vrot.slane %v401, %v409
      %v412 = vunpack.c.l.s4 1983009808
      %v413 = vunpack.c.0.s8 %v412
      %v414 = vlaneseq
      %v415 = vshrl.u32 %v414, 7
      %v416 = vsub.s32 %v413, %v415
      %v417 = vrot.slane %v403, %v416
      %418 = vrot.lane.b32.xlu0 %v410, 126
      %v419 = vpop.permute.xlu0 %418
      %420 = vrot.lane.b32.xlu0 %v417, 126
      %v421 = vpop.permute.xlu0 %420
      %v422 = vrot.slane %v419, 4
      %v423 = vrot.slane %v421, 4
      %v424 = vsel %vm392, %v422, %v423
      %vm425 = vcmask 1031168
      %v426 = vsel %vm425, %v419, %v424
      %v427 = vsel %vm425, %v421, %v423
      %430 = vst [vmem:[#allocation3 + $0xc] sm:$0x33] %v426
      %431 = vst [vmem:[#allocation3 + $0x14] sm:$0x3] %v427
      %v432 = vld [vmem:[%s335] sm:$0xff]
      %v434 = vcombine.low %v432, %v432
      %v436 = vunpack.c.l.s4 1983009808
      %v437 = vunpack.c.0.s8 %v436
      %v438 = vlaneseq
      %v439 = vshrl.u32 %v438, 7
      %v440 = vsub.s32 %v437, %v439
      %v441 = vrot.slane %v434, %v440
      %v443 = vunpack.c.l.s4 1983009808
      %v444 = vunpack.c.0.s8 %v443
      %v445 = vlaneseq
      %v446 = vshrl.u32 %v445, 7
      %v447 = vsub.s32 %v444, %v446
      %v448 = vrot.slane %v432, %v447
      %449 = vrot.lane.b32.xlu0 %v441, 104
      %v450 = vpop.permute.xlu0 %449
      %451 = vrot.lane.b32.xlu0 %v448, 104
      %v452 = vpop.permute.xlu0 %451
      %v453 = vrot.slane %v450, 4
      %v454 = vrot.slane %v452, 4
      %v455 = vsel %vm392, %v453, %v454
      %vm456 = vcmask 850944
      %v457 = vsel %vm456, %v450, %v455
      %v458 = vsel %vm456, %v452, %v454
      %461 = vst [vmem:[#allocation3 + $0xc] sm:$0xcc] %v457
      %462 = vst [vmem:[#allocation3 + $0x14] sm:$0xc] %v458
      %v463 = vld [vmem:[%s335] sm:$0xff]
      %v465 = vcombine.high %v463, %v463
      %v467 = vunpack.c.l.s4 1983009808
      %v468 = vunpack.c.0.s8 %v467
      %v469 = vlaneseq
      %v470 = vshrl.u32 %v469, 7
      %v471 = vsub.s32 %v468, %v470
      %v472 = vrot.slane %v463, %v471
      %v474 = vunpack.c.l.s4 1983009808
      %v475 = vunpack.c.0.s8 %v474
      %v476 = vlaneseq
      %v477 = vshrl.u32 %v476, 7
      %v478 = vsub.s32 %v475, %v477
      %v479 = vrot.slane %v465, %v478
      %480 = vrot.lane.b32.xlu0 %v472, 103
      %v481 = vpop.permute.xlu0 %480
      %482 = vrot.lane.b32.xlu0 %v479, 103
      %v483 = vpop.permute.xlu0 %482
      %v484 = vrot.slane %v481, 4
      %v485 = vrot.slane %v483, 4
      %v486 = vsel %vm392, %v484, %v485
      %vm487 = vcmask 842752
      %v488 = vsel %vm487, %v481, %v486
      %v489 = vsel %vm487, %v483, %v485
      %492 = vst [vmem:[#allocation3 + $0x18] sm:$0x33] %v488
      %493 = vst [vmem:[#allocation3 + $0x20] sm:$0x3] %v489
      %v494 = vld [vmem:[%s335] sm:$0xff]
      %v496 = vcombine.low %v494, %v494
      %v498 = vunpack.c.l.s4 1983009808
      %v499 = vunpack.c.0.s8 %v498
      %v500 = vlaneseq
      %v501 = vshrl.u32 %v500, 7
      %v502 = vsub.s32 %v499, %v501
      %v503 = vrot.slane %v496, %v502
      %v505 = vunpack.c.l.s4 1983009808
      %v506 = vunpack.c.0.s8 %v505
      %v507 = vlaneseq
      %v508 = vshrl.u32 %v507, 7
      %v509 = vsub.s32 %v506, %v508
      %v510 = vrot.slane %v494, %v509
      %511 = vrot.lane.b32.xlu0 %v503, 102
      %v512 = vpop.permute.xlu0 %511
      %513 = vrot.lane.b32.xlu0 %v510, 102
      %v514 = vpop.permute.xlu0 %513
      %v515 = vrot.slane %v512, 4
      %v516 = vrot.slane %v514, 4
      %v517 = vsel %vm392, %v515, %v516
      %vm518 = vcmask 834560
      %v519 = vsel %vm518, %v512, %v517
      %v520 = vsel %vm518, %v514, %v516
      %523 = vst [vmem:[#allocation3 + $0x18] sm:$0xcc] %v519
      %524 = vst [vmem:[#allocation3 + $0x20] sm:$0xc] %v520
      %v525 = vld [vmem:[%s335] sm:$0xff]
      %v527 = vcombine.high %v525, %v525
      %v529 = vunpack.c.l.s4 1983009808
      %v530 = vunpack.c.0.s8 %v529
      %v531 = vlaneseq
      %v532 = vshrl.u32 %v531, 7
      %v533 = vsub.s32 %v530, %v532
      %v534 = vrot.slane %v525, %v533
      %v536 = vunpack.c.l.s4 1983009808
      %v537 = vunpack.c.0.s8 %v536
      %v538 = vlaneseq
      %v539 = vshrl.u32 %v538, 7
      %v540 = vsub.s32 %v537, %v539
      %v541 = vrot.slane %v527, %v540
      %542 = vrot.lane.b32.xlu0 %v534, 80
      %v543 = vpop.permute.xlu0 %542
      %544 = vrot.lane.b32.xlu0 %v541, 80
      %v545 = vpop.permute.xlu0 %544
      %v546 = vrot.slane %v543, 4
      %v547 = vrot.slane %v545, 4
      %v548 = vsel %vm392, %v546, %v547
      %vm549 = vcmask 654336
      %v550 = vsel %vm549, %v543, %v548
      %v551 = vsel %vm549, %v545, %v547
      %554 = vst [vmem:[#allocation3 + $0x24] sm:$0x33] %v550
      %555 = vst [vmem:[#allocation3 + $0x2c] sm:$0x3] %v551
      %v556 = vld [vmem:[%s335] sm:$0xff]
      %v558 = vcombine.low %v556, %v556
      %v560 = vunpack.c.l.s4 1983009808
      %v561 = vunpack.c.0.s8 %v560
      %v562 = vlaneseq
      %v563 = vshrl.u32 %v562, 7
      %v564 = vsub.s32 %v561, %v563
      %v565 = vrot.slane %v558, %v564
      %v567 = vunpack.c.l.s4 1983009808
      %v568 = vunpack.c.0.s8 %v567
      %v569 = vlaneseq
      %v570 = vshrl.u32 %v569, 7
      %v571 = vsub.s32 %v568, %v570
      %v572 = vrot.slane %v556, %v571
      %573 = vrot.lane.b32.xlu0 %v565, 79
      %v574 = vpop.permute.xlu0 %573
      %575 = vrot.lane.b32.xlu0 %v572, 79
      %v576 = vpop.permute.xlu0 %575
      %v577 = vrot.slane %v574, 4
      %v578 = vrot.slane %v576, 4
      %v579 = vsel %vm392, %v577, %v578
      %vm580 = vcmask 646144
      %v581 = vsel %vm580, %v574, %v579
      %v582 = vsel %vm580, %v576, %v578
      %585 = vst [vmem:[#allocation3 + $0x24] sm:$0xcc] %v581
      %586 = vst [vmem:[#allocation3 + $0x2c] sm:$0xc] %v582
      %v587 = vld [vmem:[%s335] sm:$0xff]
      %v589 = vcombine.high %v587, %v587
      %v591 = vunpack.c.l.s4 1983009808
      %v592 = vunpack.c.0.s8 %v591
      %v593 = vlaneseq
      %v594 = vshrl.u32 %v593, 7
      %v595 = vsub.s32 %v592, %v594
      %v596 = vrot.slane %v587, %v595
      %v598 = vunpack.c.l.s4 1983009808
      %v599 = vunpack.c.0.s8 %v598
      %v600 = vlaneseq
      %v601 = vshrl.u32 %v600, 7
      %v602 = vsub.s32 %v599, %v601
      %v603 = vrot.slane %v589, %v602
      %604 = vrot.lane.b32.xlu0 %v596, 78
      %v605 = vpop.permute.xlu0 %604
      %606 = vrot.lane.b32.xlu0 %v603, 78
      %v607 = vpop.permute.xlu0 %606
      %v608 = vrot.slane %v605, 4
      %v609 = vrot.slane %v607, 4
      %v610 = vsel %vm392, %v608, %v609
      %vm611 = vcmask 637952
      %v612 = vsel %vm611, %v605, %v610
      %v613 = vsel %vm611, %v607, %v609
      %616 = vst [vmem:[#allocation3 + $0x30] sm:$0x33] %v612
      %617 = vst [vmem:[#allocation3 + $0x38] sm:$0x3] %v613
      %v618 = vld [vmem:[%s2] sm:$0xf]
      %v619 = vld [vmem:[%s2 + $0x4] sm:$0xf]
      %v620 = vld [vmem:[%s2 + $0x8] sm:$0xf]
      %v621 = vld [vmem:[%s2 + $0xc] sm:$0xf]
      %v622 = vld [vmem:[#allocation3] sm:$0xff]
      %v623 = vld [vmem:[#allocation3 + $0x8] sm:$0xf]
      %v624 = vld [vmem:[#allocation3 + $0xc] sm:$0xff]
      %v625 = vld [vmem:[#allocation3 + $0x14] sm:$0xf]
      %v626 = vld [vmem:[#allocation3 + $0x18] sm:$0xff]
      %v627 = vld [vmem:[#allocation3 + $0x20] sm:$0xf]
      %v628 = vld [vmem:[#allocation3 + $0x24] sm:$0xff]
      %v629 = vld [vmem:[#allocation3 + $0x2c] sm:$0xf]
      %v630 = vld [vmem:[#allocation3 + $0x30] sm:$0x33]
      %v631 = vld [vmem:[#allocation3 + $0x38] sm:$0x3]
      %v632 = vld [vmem:[%s3] sm:$0xff]
      %v633 = vld [vmem:[%s3 + $0x8] sm:$0xff]
      %v634 = vld [vmem:[%s3 + $0x10] sm:$0xff]
      %v635 = vld [vmem:[%s3 + $0x18] sm:$0xff]
      %637 = vset.pattern.permute.xlu0 0
      %638 = vperm.xlu0 %637, %v632
      %v639 = vpop.permute.xlu0 %638
      %642 = vset.pattern.permute.xlu0 0
      %643 = vperm.xlu0 %642, %v633
      %v644 = vpop.permute.xlu0 %643
      %647 = vset.pattern.permute.xlu0 0
      %648 = vperm.xlu0 %647, %v634
      %v649 = vpop.permute.xlu0 %648
      %652 = vset.pattern.permute.xlu0 0
      %653 = vperm.xlu0 %652, %v635
      %v654 = vpop.permute.xlu0 %653
      %v660 = vunpack.c.l.b16 %v618
      %v661 = vunpack.c.l.b16 %v619
      %v662 = vunpack.c.l.b16 %v620
      %v663 = vunpack.c.l.b16 %v621
      %v664 = vpack.c.b16 %v661, %v660
      %v665 = vpack.c.b16 %v663, %v662
      %v676 = vunpack.c.l.b16 %v622
      %v677 = vunpack.c.h.b16 %v622
      %v678 = vunpack.c.l.b16 %v623
      %v679 = vunpack.c.l.b16 %v624
      %v680 = vunpack.c.h.b16 %v624
      %v681 = vunpack.c.l.b16 %v625
      %v682 = vunpack.c.l.b16 %v626
      %v683 = vunpack.c.h.b16 %v626
      %v684 = vunpack.c.l.b16 %v627
      %v685 = vunpack.c.l.b16 %v628
      %v686 = vunpack.c.h.b16 %v628
      %v687 = vunpack.c.l.b16 %v629
      %v688 = vunpack.c.l.b16 %v630
      %v689 = vunpack.c.h.b16 %v630
      %v690 = vunpack.c.l.b16 %v631
      %v691 = vpack.c.b16 %v679, %v676
      %v692 = vpack.c.b16 %v680, %v677
      %v693 = vpack.c.b16 %v681, %v678
      %v694 = vpack.c.b16 %v685, %v682
      %v695 = vpack.c.b16 %v686, %v683
      %v696 = vpack.c.b16 %v687, %v684
      %v697 = vpack.c.b16 %v688, %v688
      %v698 = vpack.c.b16 %v689, %v689
      %v699 = vpack.c.b16 %v690, %v690
      %vm706 = vcmask 293888
      %v708 = vsel %vm706, %v664, 0
      %v711 = vsel %vm706, %v665, 0
      %vm713 = vcmask 1041408
      %v715 = vsel %vm713, %v697, 0
      %v718 = vsel %vm713, %v698, 0
      %v721 = vsel %vm713, %v699, 0
      %723 = vmatprep.subr.bf16.mxu0 %v692
      %724 = vmatpush1.bf16.msra.mxu0 %v691
      %725 = vmatprep.subr.bf16.mxu0 %v695
      %726 = vmatpush1.bf16.msra.mxu0 %v694
      %727 = vmatprep.subr.bf16.mxu0 %v718
      %728 = vmatpush1.bf16.msra.mxu0 %v715
      %729 = vmatprep.subr.bf16.mxu0 0
      %730 = vmatpush1.bf16.msra.mxu0 0
      %731 = vmatprep.subr.bf16.mxu0 0
      %732 = vmatpush1.bf16.msra.mxu0 0
      %733 = vmatprep.subr.bf16.mxu0 0
      %734 = vmatpush1.bf16.msra.mxu0 0
      %735 = vmatprep.subr.bf16.mxu0 0
      %736 = vmatpush1.bf16.msra.mxu0 0
      %737 = vmatprep.subr.bf16.mxu0 0
      %738 = vmatpush1.bf16.msra.mxu0 0
      %739 = vmatprep.subr.bf16.mxu0 0
      %740 = vmatpush1.bf16.msra.mxu0 0
      %741 = vmatprep.subr.bf16.mxu0 0
      %742 = vmatpush1.bf16.msra.mxu0 0
      %743 = vmatprep.subr.bf16.mxu0 0
      %744 = vmatpush1.bf16.msra.mxu0 0
      %745 = vmatprep.subr.bf16.mxu0 0
      %746 = vmatpush1.bf16.msra.mxu0 0
      %747 = vmatprep.subr.bf16.mxu0 0
      %748 = vmatpush1.bf16.msra.mxu0 0
      %749 = vmatprep.subr.bf16.mxu0 0
      %750 = vmatpush1.bf16.msra.mxu0 0
      %751 = vmatprep.subr.bf16.mxu0 0
      %752 = vmatpush1.bf16.msra.mxu0 0
      %753 = vmatprep.subr.bf16.mxu0 0
      %754 = vmatpush1.bf16.msra.mxu0 0
      %755 = vmatprep.mubr.bf16.mxu0 0
      %756 = vmatmul.mubr.bf16.gmra.mrb[0].mxu0 %v708
      %v757 = vpop.f32.mrb[0].mxu0
      %v758 = vadd.f32 %v639, %v757
      %v759 = vpop.f32.mrb[0].mxu0
      %v760 = vadd.f32 %v639, %v759
      %v761 = vpop.f32.mrb[0].mxu0
      %v762 = vadd.f32 %v644, %v761
      %v763 = vpop.f32.mrb[0].mxu0
      %v764 = vadd.f32 %v644, %v763
      %765 = vmatprep.mubr.bf16.mxu0 0
      %766 = vmatmul.mubr.bf16.gmra.mrb[0].mxu0 %v711
      %v767 = vpop.f32.mrb[0].mxu0
      %v768 = vadd.f32 %v649, %v767
      %v769 = vpop.f32.mrb[0].mxu0
      %v770 = vadd.f32 %v649, %v769
      %v771 = vpop.f32.mrb[0].mxu0
      %v772 = vadd.f32 %v654, %v771
      %v773 = vpop.f32.mrb[0].mxu0
      %v774 = vadd.f32 %v654, %v773
      %775 = vdwg.mxu0
      %776 = vmatprep.subr.bf16.mxu0 0
      %777 = vmatpush1.bf16.msra.mxu0 %v693
      %778 = vmatprep.subr.bf16.mxu0 0
      %779 = vmatpush1.bf16.msra.mxu0 %v696
      %780 = vmatprep.subr.bf16.mxu0 0
      %781 = vmatpush1.bf16.msra.mxu0 %v721
      %782 = vmatprep.subr.bf16.mxu0 0
      %783 = vmatpush1.bf16.msra.mxu0 0
      %784 = vmatprep.subr.bf16.mxu0 0
      %785 = vmatpush1.bf16.msra.mxu0 0
      %786 = vmatprep.subr.bf16.mxu0 0
      %787 = vmatpush1.bf16.msra.mxu0 0
      %788 = vmatprep.subr.bf16.mxu0 0
      %789 = vmatpush1.bf16.msra.mxu0 0
      %790 = vmatprep.subr.bf16.mxu0 0
      %791 = vmatpush1.bf16.msra.mxu0 0
      %792 = vmatprep.subr.bf16.mxu0 0
      %793 = vmatpush1.bf16.msra.mxu0 0
      %794 = vmatprep.subr.bf16.mxu0 0
      %795 = vmatpush1.bf16.msra.mxu0 0
      %796 = vmatprep.subr.bf16.mxu0 0
      %797 = vmatpush1.bf16.msra.mxu0 0
      %798 = vmatprep.subr.bf16.mxu0 0
      %799 = vmatpush1.bf16.msra.mxu0 0
      %800 = vmatprep.subr.bf16.mxu0 0
      %801 = vmatpush1.bf16.msra.mxu0 0
      %802 = vmatprep.subr.bf16.mxu0 0
      %803 = vmatpush1.bf16.msra.mxu0 0
      %804 = vmatprep.subr.bf16.mxu0 0
      %805 = vmatpush1.bf16.msra.mxu0 0
      %806 = vmatprep.subr.bf16.mxu0 0
      %807 = vmatpush1.bf16.msra.mxu0 0
      %808 = vmatprep.mubr.bf16.mxu0 0
      %809 = vmatmul.mubr.bf16.gmra.mrb[0].mxu0 %v708
      %v810 = vpop.f32.mrb[0].mxu0
      %v811 = vadd.f32 %v639, %v810
      %v812 = vpop.f32.mrb[0].mxu0
      %v813 = vpop.f32.mrb[0].mxu0
      %v814 = vadd.f32 %v644, %v813
      %v815 = vpop.f32.mrb[0].mxu0
      %816 = vmatprep.mubr.bf16.mxu0 0
      %817 = vmatmul.mubr.bf16.gmra.mrb[0].mxu0 %v711
      %v818 = vpop.f32.mrb[0].mxu0
      %v819 = vadd.f32 %v649, %v818
      %v820 = vpop.f32.mrb[0].mxu0
      %v821 = vpop.f32.mrb[0].mxu0
      %v822 = vadd.f32 %v654, %v821
      %v823 = vpop.f32.mrb[0].mxu0
      %824 = vdwg.mxu0
      %v825 = vmax.f32 %v758, 0.0
      %v826 = vmax.f32 %v760, 0.0
      %v827 = vmax.f32 %v811, 0.0
      %v828 = vmax.f32 %v762, 0.0
      %v829 = vmax.f32 %v764, 0.0
      %v830 = vmax.f32 %v814, 0.0
      %v831 = vmax.f32 %v768, 0.0
      %v832 = vmax.f32 %v770, 0.0
      %v833 = vmax.f32 %v819, 0.0
      %v834 = vmax.f32 %v772, 0.0
      %v835 = vmax.f32 %v774, 0.0
      %v836 = vmax.f32 %v822, 0.0
      %v838 = vlaneseq
      %v839 = vshrl.u32 %v838, 7
      %v840 = vsub.s32 0, %v839
      %v841 = vrot.slane %v347, %v840
      %v842 = vlaneseq
      %v843 = vshrl.u32 %v842, 7
      %v844 = vsub.s32 1, %v843
      %v845 = vrot.slane %v347, %v844
      %v846 = vlaneseq
      %v847 = vshrl.u32 %v846, 7
      %v848 = vsub.s32 2, %v847
      %v849 = vrot.slane %v347, %v848
      %v850 = vlaneseq
      %v851 = vshrl.u32 %v850, 7
      %v852 = vsub.s32 3, %v851
      %v853 = vrot.slane %v347, %v852
      %854 = vrot.lane.b32.xlu0 %v841, 103
      %v855 = vpop.permute.xlu0 %854
      %856 = vrot.lane.b32.xlu0 %v845, 103
      %v857 = vpop.permute.xlu0 %856
      %858 = vrot.lane.b32.xlu0 %v849, 103
      %v859 = vpop.permute.xlu0 %858
      %860 = vrot.lane.b32.xlu0 %v853, 103
      %v861 = vpop.permute.xlu0 %860
      %vm862 = vcmask 842752
      %v863 = vsel %vm862, %v855, %v857
      %v864 = vsel %vm862, %v857, %v859
      %v865 = vsel %vm862, %v859, %v861
      %v869 = vmul.f32 %v825, %v863
      %v870 = vmul.f32 %v826, %v864
      %v871 = vmul.f32 %v827, %v865
      %v872 = vmul.f32 %v828, %v863
      %v873 = vmul.f32 %v829, %v864
      %v874 = vmul.f32 %v830, %v865
      %v875 = vmul.f32 %v831, %v863
      %v876 = vmul.f32 %v832, %v864
      %v877 = vmul.f32 %v833, %v865
      %v878 = vmul.f32 %v834, %v863
      %v879 = vmul.f32 %v835, %v864
      %v880 = vmul.f32 %v836, %v865
      %881 = vst [vmem:[#allocation2] sm:$0xff] 0
      %882 = vst [vmem:[#allocation2 + $0x28] sm:$0xff] 0
      %883 = vst [vmem:[#allocation2 + $0x20] sm:$0xff] 0
      %884 = vst [vmem:[#allocation2 + $0x48] sm:$0xff] 0
      %v885 = vpack.c.bf16 %v872, %v869
      %v886 = vpack.c.bf16 %v873, %v870
      %v887 = vpack.c.bf16 %v874, %v871
      %v888 = vpack.c.bf16 %v878, %v875
      %v889 = vpack.c.bf16 %v879, %v876
      %v890 = vpack.c.bf16 %v880, %v877
      %891 = vst [vmem:[#allocation2 + $0x8] sm:$0xff] %v885
      %892 = vst [vmem:[#allocation2 + $0x10] sm:$0xff] %v886
      %893 = vst [vmem:[#allocation2 + $0x18] sm:$0xff] %v887
      %894 = vst [vmem:[#allocation2 + $0x30] sm:$0xff] %v888
      %895 = vst [vmem:[#allocation2 + $0x38] sm:$0xff] %v889
      %896 = vst [vmem:[#allocation2 + $0x40] sm:$0xff] %v890
      %v897 = vld [vmem:[#allocation2] sm:$0xff]
      %v898 = vld [vmem:[#allocation2 + $0x8] sm:$0xff]
      %v899 = vld [vmem:[#allocation2 + $0x10] sm:$0xff]
      %v900 = vld [vmem:[#allocation2 + $0x18] sm:$0xff]
      %v901 = vld [vmem:[#allocation2 + $0x28] sm:$0xff]
      %v902 = vld [vmem:[#allocation2 + $0x30] sm:$0xff]
      %v903 = vld [vmem:[#allocation2 + $0x38] sm:$0xff]
      %v904 = vld [vmem:[#allocation2 + $0x40] sm:$0xff]
      %913 = vrot.lane.b32.xlu0 %v897, 25
      %v914 = vpop.permute.xlu0 %913
      %915 = vrot.lane.b32.xlu0 %v898, 25
      %v916 = vpop.permute.xlu0 %915
      %917 = vrot.lane.b32.xlu0 %v899, 25
      %v918 = vpop.permute.xlu0 %917
      %919 = vrot.lane.b32.xlu0 %v900, 25
      %v920 = vpop.permute.xlu0 %919
      %921 = vrot.lane.b32.xlu0 %v901, 25
      %v922 = vpop.permute.xlu0 %921
      %923 = vrot.lane.b32.xlu0 %v902, 25
      %v924 = vpop.permute.xlu0 %923
      %925 = vrot.lane.b32.xlu0 %v903, 25
      %v926 = vpop.permute.xlu0 %925
      %927 = vrot.lane.b32.xlu0 %v904, 25
      %v928 = vpop.permute.xlu0 %927
      %vm929 = vcmask 203776
      %v930 = vsel %vm929, %v914, %v916
      %v931 = vsel %vm929, %v916, %v918
      %v932 = vsel %vm929, %v918, %v920
      %v933 = vsel %vm929, %v922, %v924
      %v934 = vsel %vm929, %v924, %v926
      %v935 = vsel %vm929, %v926, %v928
      %942 = vst [vmem:[#allocation4] sm:$0xff] %v930
      %943 = vst [vmem:[#allocation4 + $0x8] sm:$0xff] %v931
      %944 = vst [vmem:[#allocation4 + $0x10] sm:$0xff] %v932
      %945 = vst [vmem:[#allocation4 + $0x18] sm:$0xff] %v933
      %946 = vst [vmem:[#allocation4 + $0x20] sm:$0xff] %v934
      %947 = vst [vmem:[#allocation4 + $0x28] sm:$0xff] %v935
      %v948 = vld [vmem:[#allocation2] sm:$0xff]
      %v949 = vld [vmem:[#allocation2 + $0x8] sm:$0xff]
      %v950 = vld [vmem:[#allocation2 + $0x10] sm:$0xff]
      %v951 = vld [vmem:[#allocation2 + $0x18] sm:$0xff]
      %v952 = vld [vmem:[#allocation2 + $0x28] sm:$0xff]
      %v953 = vld [vmem:[#allocation2 + $0x30] sm:$0xff]
      %v954 = vld [vmem:[#allocation2 + $0x38] sm:$0xff]
      %v955 = vld [vmem:[#allocation2 + $0x40] sm:$0xff]
      %964 = vrot.lane.b32.xlu0 %v948, 24
      %v965 = vpop.permute.xlu0 %964
      %966 = vrot.lane.b32.xlu0 %v949, 24
      %v967 = vpop.permute.xlu0 %966
      %968 = vrot.lane.b32.xlu0 %v950, 24
      %v969 = vpop.permute.xlu0 %968
      %970 = vrot.lane.b32.xlu0 %v951, 24
      %v971 = vpop.permute.xlu0 %970
      %972 = vrot.lane.b32.xlu0 %v952, 24
      %v973 = vpop.permute.xlu0 %972
      %974 = vrot.lane.b32.xlu0 %v953, 24
      %v975 = vpop.permute.xlu0 %974
      %976 = vrot.lane.b32.xlu0 %v954, 24
      %v977 = vpop.permute.xlu0 %976
      %978 = vrot.lane.b32.xlu0 %v955, 24
      %v979 = vpop.permute.xlu0 %978
      %vm980 = vcmask 195584
      %v981 = vsel %vm980, %v965, %v967
      %v982 = vsel %vm980, %v967, %v969
      %v983 = vsel %vm980, %v969, %v971
      %v984 = vsel %vm980, %v973, %v975
      %v985 = vsel %vm980, %v975, %v977
      %v986 = vsel %vm980, %v977, %v979
      %993 = vst [vmem:[#allocation4 + $0x30] sm:$0xff] %v981
      %994 = vst [vmem:[#allocation4 + $0x38] sm:$0xff] %v982
      %995 = vst [vmem:[#allocation4 + $0x40] sm:$0xff] %v983
      %996 = vst [vmem:[#allocation4 + $0x48] sm:$0xff] %v984
      %997 = vst [vmem:[#allocation4 + $0x50] sm:$0xff] %v985
      %998 = vst [vmem:[#allocation4 + $0x58] sm:$0xff] %v986
      %v999 = vld [vmem:[#allocation2] sm:$0xff]
      %v1000 = vld [vmem:[#allocation2 + $0x8] sm:$0xff]
      %v1001 = vld [vmem:[#allocation2 + $0x10] sm:$0xff]
      %v1002 = vld [vmem:[#allocation2 + $0x18] sm:$0xff]
      %v1003 = vld [vmem:[#allocation2 + $0x28] sm:$0xff]
      %v1004 = vld [vmem:[#allocation2 + $0x30] sm:$0xff]
      %v1005 = vld [vmem:[#allocation2 + $0x38] sm:$0xff]
      %v1006 = vld [vmem:[#allocation2 + $0x40] sm:$0xff]
      %1015 = vrot.lane.b32.xlu0 %v999, 23
      %v1016 = vpop.permute.xlu0 %1015
      %1017 = vrot.lane.b32.xlu0 %v1000, 23
      %v1018 = vpop.permute.xlu0 %1017
      %1019 = vrot.lane.b32.xlu0 %v1001, 23
      %v1020 = vpop.permute.xlu0 %1019
      %1021 = vrot.lane.b32.xlu0 %v1002, 23
      %v1022 = vpop.permute.xlu0 %1021
      %1023 = vrot.lane.b32.xlu0 %v1003, 23
      %v1024 = vpop.permute.xlu0 %1023
      %1025 = vrot.lane.b32.xlu0 %v1004, 23
      %v1026 = vpop.permute.xlu0 %1025
      %1027 = vrot.lane.b32.xlu0 %v1005, 23
      %v1028 = vpop.permute.xlu0 %1027
      %1029 = vrot.lane.b32.xlu0 %v1006, 23
      %v1030 = vpop.permute.xlu0 %1029
      %vm1031 = vcmask 187392
      %v1032 = vsel %vm1031, %v1016, %v1018
      %v1033 = vsel %vm1031, %v1018, %v1020
      %v1034 = vsel %vm1031, %v1020, %v1022
      %v1035 = vsel %vm1031, %v1024, %v1026
      %v1036 = vsel %vm1031, %v1026, %v1028
      %v1037 = vsel %vm1031, %v1028, %v1030
      %1044 = vst [vmem:[#allocation4 + $0x60] sm:$0xff] %v1032
      %1045 = vst [vmem:[#allocation4 + $0x68] sm:$0xff] %v1033
      %1046 = vst [vmem:[#allocation4 + $0x70] sm:$0xff] %v1034
      %1047 = vst [vmem:[#allocation4 + $0x78] sm:$0xff] %v1035
      %1048 = vst [vmem:[#allocation4 + $0x80] sm:$0xff] %v1036
      %1049 = vst [vmem:[#allocation4 + $0x88] sm:$0xff] %v1037
      %v1050 = vld [vmem:[#allocation2] sm:$0xff]
      %v1051 = vld [vmem:[#allocation2 + $0x8] sm:$0xff]
      %v1052 = vld [vmem:[#allocation2 + $0x10] sm:$0xff]
      %v1053 = vld [vmem:[#allocation2 + $0x18] sm:$0xff]
      %v1054 = vld [vmem:[#allocation2 + $0x28] sm:$0xff]
      %v1055 = vld [vmem:[#allocation2 + $0x30] sm:$0xff]
      %v1056 = vld [vmem:[#allocation2 + $0x38] sm:$0xff]
      %v1057 = vld [vmem:[#allocation2 + $0x40] sm:$0xff]
      %1066 = vrot.lane.b32.xlu0 %v1050, 1
      %v1067 = vpop.permute.xlu0 %1066
      %1068 = vrot.lane.b32.xlu0 %v1051, 1
      %v1069 = vpop.permute.xlu0 %1068
      %1070 = vrot.lane.b32.xlu0 %v1052, 1
      %v1071 = vpop.permute.xlu0 %1070
      %1072 = vrot.lane.b32.xlu0 %v1053, 1
      %v1073 = vpop.permute.xlu0 %1072
      %1074 = vrot.lane.b32.xlu0 %v1054, 1
      %v1075 = vpop.permute.xlu0 %1074
      %1076 = vrot.lane.b32.xlu0 %v1055, 1
      %v1077 = vpop.permute.xlu0 %1076
      %1078 = vrot.lane.b32.xlu0 %v1056, 1
      %v1079 = vpop.permute.xlu0 %1078
      %1080 = vrot.lane.b32.xlu0 %v1057, 1
      %v1081 = vpop.permute.xlu0 %1080
      %vm1082 = vcmask 7168
      %v1083 = vsel %vm1082, %v1067, %v1069
      %v1084 = vsel %vm1082, %v1069, %v1071
      %v1085 = vsel %vm1082, %v1071, %v1073
      %v1086 = vsel %vm1082, %v1075, %v1077
      %v1087 = vsel %vm1082, %v1077, %v1079
      %v1088 = vsel %vm1082, %v1079, %v1081
      %1095 = vst [vmem:[#allocation4 + $0x90] sm:$0xff] %v1083
      %1096 = vst [vmem:[#allocation4 + $0x98] sm:$0xff] %v1084
      %1097 = vst [vmem:[#allocation4 + $0xa0] sm:$0xff] %v1085
      %1098 = vst [vmem:[#allocation4 + $0xa8] sm:$0xff] %v1086
      %1099 = vst [vmem:[#allocation4 + $0xb0] sm:$0xff] %v1087
      %1100 = vst [vmem:[#allocation4 + $0xb8] sm:$0xff] %v1088
      %v1101 = vld [vmem:[#allocation2 + $0x8] sm:$0xff]
      %v1102 = vld [vmem:[#allocation2 + $0x10] sm:$0xff]
      %v1103 = vld [vmem:[#allocation2 + $0x18] sm:$0xff]
      %v1104 = vld [vmem:[#allocation2 + $0x30] sm:$0xff]
      %v1105 = vld [vmem:[#allocation2 + $0x38] sm:$0xff]
      %v1106 = vld [vmem:[#allocation2 + $0x40] sm:$0xff]
      %1107 = vst [vmem:[#allocation4 + $0xc0] sm:$0xff] %v1101
      %1108 = vst [vmem:[#allocation4 + $0xc8] sm:$0xff] %v1102
      %1109 = vst [vmem:[#allocation4 + $0xd0] sm:$0xff] %v1103
      %1110 = vst [vmem:[#allocation4 + $0xd8] sm:$0xff] %v1104
      %1111 = vst [vmem:[#allocation4 + $0xe0] sm:$0xff] %v1105
      %1112 = vst [vmem:[#allocation4 + $0xe8] sm:$0xff] %v1106
      %v1113 = vld [vmem:[#allocation2 + $0x8] sm:$0xff]
      %v1114 = vld [vmem:[#allocation2 + $0x10] sm:$0xff]
      %v1115 = vld [vmem:[#allocation2 + $0x18] sm:$0xff]
      %v1116 = vld [vmem:[#allocation2 + $0x20] sm:$0xff]
      %v1117 = vld [vmem:[#allocation2 + $0x30] sm:$0xff]
      %v1118 = vld [vmem:[#allocation2 + $0x38] sm:$0xff]
      %v1119 = vld [vmem:[#allocation2 + $0x40] sm:$0xff]
      %v1120 = vld [vmem:[#allocation2 + $0x48] sm:$0xff]
      %1129 = vrot.lane.b32.xlu0 %v1113, 127
      %v1130 = vpop.permute.xlu0 %1129
      %1131 = vrot.lane.b32.xlu0 %v1114, 127
      %v1132 = vpop.permute.xlu0 %1131
      %1133 = vrot.lane.b32.xlu0 %v1115, 127
      %v1134 = vpop.permute.xlu0 %1133
      %1135 = vrot.lane.b32.xlu0 %v1116, 127
      %v1136 = vpop.permute.xlu0 %1135
      %1137 = vrot.lane.b32.xlu0 %v1117, 127
      %v1138 = vpop.permute.xlu0 %1137
      %1139 = vrot.lane.b32.xlu0 %v1118, 127
      %v1140 = vpop.permute.xlu0 %1139
      %1141 = vrot.lane.b32.xlu0 %v1119, 127
      %v1142 = vpop.permute.xlu0 %1141
      %1143 = vrot.lane.b32.xlu0 %v1120, 127
      %v1144 = vpop.permute.xlu0 %1143
      %v1145 = vsel %vm394, %v1130, %v1132
      %v1146 = vsel %vm394, %v1132, %v1134
      %v1147 = vsel %vm394, %v1134, %v1136
      %v1148 = vsel %vm394, %v1138, %v1140
      %v1149 = vsel %vm394, %v1140, %v1142
      %v1150 = vsel %vm394, %v1142, %v1144
      %1157 = vst [vmem:[#allocation4 + $0xf0] sm:$0xff] %v1145
      %1158 = vst [vmem:[#allocation4 + $0xf8] sm:$0xff] %v1146
      %1159 = vst [vmem:[#allocation4 + $0x100] sm:$0xff] %v1147
      %1160 = vst [vmem:[#allocation4 + $0x108] sm:$0xff] %v1148
      %1161 = vst [vmem:[#allocation4 + $0x110] sm:$0xff] %v1149
      %1162 = vst [vmem:[#allocation4 + $0x118] sm:$0xff] %v1150
      %v1163 = vld [vmem:[#allocation2 + $0x8] sm:$0xff]
      %v1164 = vld [vmem:[#allocation2 + $0x10] sm:$0xff]
      %v1165 = vld [vmem:[#allocation2 + $0x18] sm:$0xff]
      %v1166 = vld [vmem:[#allocation2 + $0x20] sm:$0xff]
      %v1167 = vld [vmem:[#allocation2 + $0x30] sm:$0xff]
      %v1168 = vld [vmem:[#allocation2 + $0x38] sm:$0xff]
      %v1169 = vld [vmem:[#allocation2 + $0x40] sm:$0xff]
      %v1170 = vld [vmem:[#allocation2 + $0x48] sm:$0xff]
      %1179 = vrot.lane.b32.xlu0 %v1163, 105
      %v1180 = vpop.permute.xlu0 %1179
      %1181 = vrot.lane.b32.xlu0 %v1164, 105
      %v1182 = vpop.permute.xlu0 %1181
      %1183 = vrot.lane.b32.xlu0 %v1165, 105
      %v1184 = vpop.permute.xlu0 %1183
      %1185 = vrot.lane.b32.xlu0 %v1166, 105
      %v1186 = vpop.permute.xlu0 %1185
      %1187 = vrot.lane.b32.xlu0 %v1167, 105
      %v1188 = vpop.permute.xlu0 %1187
      %1189 = vrot.lane.b32.xlu0 %v1168, 105
      %v1190 = vpop.permute.xlu0 %1189
      %1191 = vrot.lane.b32.xlu0 %v1169, 105
      %v1192 = vpop.permute.xlu0 %1191
      %1193 = vrot.lane.b32.xlu0 %v1170, 105
      %v1194 = vpop.permute.xlu0 %1193
      %vm1195 = vcmask 859136
      %v1196 = vsel %vm1195, %v1180, %v1182
      %v1197 = vsel %vm1195, %v1182, %v1184
      %v1198 = vsel %vm1195, %v1184, %v1186
      %v1199 = vsel %vm1195, %v1188, %v1190
      %v1200 = vsel %vm1195, %v1190, %v1192
      %v1201 = vsel %vm1195, %v1192, %v1194
      %1208 = vst [vmem:[#allocation4 + $0x120] sm:$0xff] %v1196
      %1209 = vst [vmem:[#allocation4 + $0x128] sm:$0xff] %v1197
      %1210 = vst [vmem:[#allocation4 + $0x130] sm:$0xff] %v1198
      %1211 = vst [vmem:[#allocation4 + $0x138] sm:$0xff] %v1199
      %1212 = vst [vmem:[#allocation4 + $0x140] sm:$0xff] %v1200
      %1213 = vst [vmem:[#allocation4 + $0x148] sm:$0xff] %v1201
      %v1214 = vld [vmem:[#allocation2 + $0x8] sm:$0xff]
      %v1215 = vld [vmem:[#allocation2 + $0x10] sm:$0xff]
      %v1216 = vld [vmem:[#allocation2 + $0x18] sm:$0xff]
      %v1217 = vld [vmem:[#allocation2 + $0x20] sm:$0xff]
      %v1218 = vld [vmem:[#allocation2 + $0x30] sm:$0xff]
      %v1219 = vld [vmem:[#allocation2 + $0x38] sm:$0xff]
      %v1220 = vld [vmem:[#allocation2 + $0x40] sm:$0xff]
      %v1221 = vld [vmem:[#allocation2 + $0x48] sm:$0xff]
      %1230 = vrot.lane.b32.xlu0 %v1214, 104
      %v1231 = vpop.permute.xlu0 %1230
      %1232 = vrot.lane.b32.xlu0 %v1215, 104
      %v1233 = vpop.permute.xlu0 %1232
      %1234 = vrot.lane.b32.xlu0 %v1216, 104
      %v1235 = vpop.permute.xlu0 %1234
      %1236 = vrot.lane.b32.xlu0 %v1217, 104
      %v1237 = vpop.permute.xlu0 %1236
      %1238 = vrot.lane.b32.xlu0 %v1218, 104
      %v1239 = vpop.permute.xlu0 %1238
      %1240 = vrot.lane.b32.xlu0 %v1219, 104
      %v1241 = vpop.permute.xlu0 %1240
      %1242 = vrot.lane.b32.xlu0 %v1220, 104
      %v1243 = vpop.permute.xlu0 %1242
      %1244 = vrot.lane.b32.xlu0 %v1221, 104
      %v1245 = vpop.permute.xlu0 %1244
      %v1246 = vsel %vm456, %v1231, %v1233
      %v1247 = vsel %vm456, %v1233, %v1235
      %v1248 = vsel %vm456, %v1235, %v1237
      %v1249 = vsel %vm456, %v1239, %v1241
      %v1250 = vsel %vm456, %v1241, %v1243
      %v1251 = vsel %vm456, %v1243, %v1245
      %1258 = vst [vmem:[#allocation4 + $0x150] sm:$0xff] %v1246
      %1259 = vst [vmem:[#allocation4 + $0x158] sm:$0xff] %v1247
      %1260 = vst [vmem:[#allocation4 + $0x160] sm:$0xff] %v1248
      %1261 = vst [vmem:[#allocation4 + $0x168] sm:$0xff] %v1249
      %1262 = vst [vmem:[#allocation4 + $0x170] sm:$0xff] %v1250
      %1263 = vst [vmem:[#allocation4 + $0x178] sm:$0xff] %v1251
      %v1264 = vld [vmem:[#allocation2 + $0x8] sm:$0xff]
      %v1265 = vld [vmem:[#allocation2 + $0x10] sm:$0xff]
      %v1266 = vld [vmem:[#allocation2 + $0x18] sm:$0xff]
      %v1267 = vld [vmem:[#allocation2 + $0x20] sm:$0xff]
      %v1268 = vld [vmem:[#allocation2 + $0x30] sm:$0xff]
      %v1269 = vld [vmem:[#allocation2 + $0x38] sm:$0xff]
      %v1270 = vld [vmem:[#allocation2 + $0x40] sm:$0xff]
      %v1271 = vld [vmem:[#allocation2 + $0x48] sm:$0xff]
      %1280 = vrot.lane.b32.xlu0 %v1264, 103
      %v1281 = vpop.permute.xlu0 %1280
      %1282 = vrot.lane.b32.xlu0 %v1265, 103
      %v1283 = vpop.permute.xlu0 %1282
      %1284 = vrot.lane.b32.xlu0 %v1266, 103
      %v1285 = vpop.permute.xlu0 %1284
      %1286 = vrot.lane.b32.xlu0 %v1267, 103
      %v1287 = vpop.permute.xlu0 %1286
      %1288 = vrot.lane.b32.xlu0 %v1268, 103
      %v1289 = vpop.permute.xlu0 %1288
      %1290 = vrot.lane.b32.xlu0 %v1269, 103
      %v1291 = vpop.permute.xlu0 %1290
      %1292 = vrot.lane.b32.xlu0 %v1270, 103
      %v1293 = vpop.permute.xlu0 %1292
      %1294 = vrot.lane.b32.xlu0 %v1271, 103
      %v1295 = vpop.permute.xlu0 %1294
      %v1296 = vsel %vm487, %v1281, %v1283
      %v1297 = vsel %vm487, %v1283, %v1285
      %v1298 = vsel %vm487, %v1285, %v1287
      %v1299 = vsel %vm487, %v1289, %v1291
      %v1300 = vsel %vm487, %v1291, %v1293
      %v1301 = vsel %vm487, %v1293, %v1295
      %1308 = vst [vmem:[#allocation4 + $0x180] sm:$0xff] %v1296
      %1309 = vst [vmem:[#allocation4 + $0x188] sm:$0xff] %v1297
      %1310 = vst [vmem:[#allocation4 + $0x190] sm:$0xff] %v1298
      %1311 = vst [vmem:[#allocation4 + $0x198] sm:$0xff] %v1299
      %1312 = vst [vmem:[#allocation4 + $0x1a0] sm:$0xff] %v1300
      %1313 = vst [vmem:[#allocation4 + $0x1a8] sm:$0xff] %v1301
      %v1314 = vld [vmem:[%s4] sm:$0xff]
      %v1315 = vld [vmem:[%s4 + $0x8] sm:$0xf]
      %v1316 = vld [vmem:[%s4 + $0xc] sm:$0xff]
      %v1317 = vld [vmem:[%s4 + $0x14] sm:$0xf]
      %v1318 = vld [vmem:[%s4 + $0x18] sm:$0xff]
      %v1319 = vld [vmem:[%s4 + $0x20] sm:$0xf]
      %v1320 = vld [vmem:[%s4 + $0x24] sm:$0xff]
      %v1321 = vld [vmem:[%s4 + $0x2c] sm:$0xf]
      %v1322 = vld [vmem:[%s4 + $0x30] sm:$0xff]
      %v1323 = vld [vmem:[%s4 + $0x38] sm:$0xf]
      %v1324 = vld [vmem:[%s4 + $0x3c] sm:$0xff]
      %v1325 = vld [vmem:[%s4 + $0x44] sm:$0xf]
      %v1326 = vld [vmem:[%s4 + $0x48] sm:$0xff]
      %v1327 = vld [vmem:[%s4 + $0x50] sm:$0xf]
      %v1328 = vld [vmem:[%s4 + $0x54] sm:$0xff]
      %v1329 = vld [vmem:[%s4 + $0x5c] sm:$0xf]
      %v1330 = vld [vmem:[#allocation4] sm:$0xff]
      %v1331 = vld [vmem:[#allocation4 + $0x8] sm:$0xff]
      %v1332 = vld [vmem:[#allocation4 + $0x10] sm:$0xff]
      %v1333 = vld [vmem:[#allocation4 + $0x18] sm:$0xff]
      %v1334 = vld [vmem:[#allocation4 + $0x20] sm:$0xff]
      %v1335 = vld [vmem:[#allocation4 + $0x28] sm:$0xff]
      %v1336 = vld [vmem:[#allocation4 + $0x30] sm:$0xff]
      %v1337 = vld [vmem:[#allocation4 + $0x38] sm:$0xff]
      %v1338 = vld [vmem:[#allocation4 + $0x40] sm:$0xff]
      %v1339 = vld [vmem:[#allocation4 + $0x48] sm:$0xff]
      %v1340 = vld [vmem:[#allocation4 + $0x50] sm:$0xff]
      %v1341 = vld [vmem:[#allocation4 + $0x58] sm:$0xff]
      %v1342 = vld [vmem:[#allocation4 + $0x60] sm:$0xff]
      %v1343 = vld [vmem:[#allocation4 + $0x68] sm:$0xff]
      %v1344 = vld [vmem:[#allocation4 + $0x70] sm:$0xff]
      %v1345 = vld [vmem:[#allocation4 + $0x78] sm:$0xff]
      %v1346 = vld [vmem:[#allocation4 + $0x80] sm:$0xff]
      %v1347 = vld [vmem:[#allocation4 + $0x88] sm:$0xff]
      %v1348 = vld [vmem:[#allocation4 + $0x90] sm:$0xff]
      %v1349 = vld [vmem:[#allocation4 + $0x98] sm:$0xff]
      %v1350 = vld [vmem:[#allocation4 + $0xa0] sm:$0xff]
      %v1351 = vld [vmem:[#allocation4 + $0xa8] sm:$0xff]
      %v1352 = vld [vmem:[#allocation4 + $0xb0] sm:$0xff]
      %v1353 = vld [vmem:[#allocation4 + $0xb8] sm:$0xff]
      %v1354 = vld [vmem:[#allocation4 + $0xc0] sm:$0xff]
      %v1355 = vld [vmem:[#allocation4 + $0xc8] sm:$0xff]
      %v1356 = vld [vmem:[#allocation4 + $0xd0] sm:$0xff]
      %v1357 = vld [vmem:[#allocation4 + $0xd8] sm:$0xff]
      %v1358 = vld [vmem:[#allocation4 + $0xe0] sm:$0xff]
      %v1359 = vld [vmem:[#allocation4 + $0xe8] sm:$0xff]
      %v1360 = vld [vmem:[#allocation4 + $0xf0] sm:$0xff]
      %v1361 = vld [vmem:[#allocation4 + $0xf8] sm:$0xff]
      %v1362 = vld [vmem:[#allocation4 + $0x100] sm:$0xff]
      %v1363 = vld [vmem:[#allocation4 + $0x108] sm:$0xff]
      %v1364 = vld [vmem:[#allocation4 + $0x110] sm:$0xff]
      %v1365 = vld [vmem:[#allocation4 + $0x118] sm:$0xff]
      %v1366 = vld [vmem:[#allocation4 + $0x120] sm:$0xff]
      %v1367 = vld [vmem:[#allocation4 + $0x128] sm:$0xff]
      %v1368 = vld [vmem:[#allocation4 + $0x130] sm:$0xff]
      %v1369 = vld [vmem:[#allocation4 + $0x138] sm:$0xff]
      %v1370 = vld [vmem:[#allocation4 + $0x140] sm:$0xff]
      %v1371 = vld [vmem:[#allocation4 + $0x148] sm:$0xff]
      %v1372 = vld [vmem:[#allocation4 + $0x150] sm:$0xff]
      %v1373 = vld [vmem:[#allocation4 + $0x158] sm:$0xff]
      %v1374 = vld [vmem:[#allocation4 + $0x160] sm:$0xff]
      %v1375 = vld [vmem:[#allocation4 + $0x168] sm:$0xff]
      %v1376 = vld [vmem:[#allocation4 + $0x170] sm:$0xff]
      %v1377 = vld [vmem:[#allocation4 + $0x178] sm:$0xff]
      %v1378 = vld [vmem:[#allocation4 + $0x180] sm:$0xff]
      %v1379 = vld [vmem:[#allocation4 + $0x188] sm:$0xff]
      %v1380 = vld [vmem:[#allocation4 + $0x190] sm:$0xff]
      %v1381 = vld [vmem:[#allocation4 + $0x198] sm:$0xff]
      %v1382 = vld [vmem:[#allocation4 + $0x1a0] sm:$0xff]
      %v1383 = vld [vmem:[#allocation4 + $0x1a8] sm:$0xff]
      %v1384 = vld [vmem:[%s5] sm:$0xff]
      %v1385 = vld [vmem:[%s5 + $0x8] sm:$0xff]
      %v1386 = vld [vmem:[%s5 + $0x10] sm:$0xff]
      %v1387 = vld [vmem:[%s5 + $0x18] sm:$0xff]
      %v1388 = vld [vmem:[%s5 + $0x20] sm:$0xff]
      %v1389 = vld [vmem:[%s5 + $0x28] sm:$0xff]
      %v1390 = vld [vmem:[%s5 + $0x30] sm:$0xff]
      %v1391 = vld [vmem:[%s5 + $0x38] sm:$0xff]
      %1393 = vset.pattern.permute.xlu0 0
      %1394 = vperm.xlu0 %1393, %v1384
      %v1395 = vpop.permute.xlu0 %1394
      %1398 = vset.pattern.permute.xlu0 0
      %1399 = vperm.xlu0 %1398, %v1385
      %v1400 = vpop.permute.xlu0 %1399
      %1403 = vset.pattern.permute.xlu0 0
      %1404 = vperm.xlu0 %1403, %v1386
      %v1405 = vpop.permute.xlu0 %1404
      %1408 = vset.pattern.permute.xlu0 0
      %1409 = vperm.xlu0 %1408, %v1387
      %v1410 = vpop.permute.xlu0 %1409
      %1413 = vset.pattern.permute.xlu0 0
      %1414 = vperm.xlu0 %1413, %v1388
      %v1415 = vpop.permute.xlu0 %1414
      %1418 = vset.pattern.permute.xlu0 0
      %1419 = vperm.xlu0 %1418, %v1389
      %v1420 = vpop.permute.xlu0 %1419
      %1423 = vset.pattern.permute.xlu0 0
      %1424 = vperm.xlu0 %1423, %v1390
      %v1425 = vpop.permute.xlu0 %1424
      %1428 = vset.pattern.permute.xlu0 0
      %1429 = vperm.xlu0 %1428, %v1391
      %v1430 = vpop.permute.xlu0 %1429
      %v1448 = vunpack.c.l.b16 %v1314
      %v1449 = vunpack.c.h.b16 %v1314
      %v1450 = vunpack.c.l.b16 %v1315
      %v1451 = vunpack.c.l.b16 %v1316
      %v1452 = vunpack.c.h.b16 %v1316
      %v1453 = vunpack.c.l.b16 %v1317
      %v1454 = vunpack.c.l.b16 %v1318
      %v1455 = vunpack.c.h.b16 %v1318
      %v1456 = vunpack.c.l.b16 %v1319
      %v1457 = vunpack.c.l.b16 %v1320
      %v1458 = vunpack.c.h.b16 %v1320
      %v1459 = vunpack.c.l.b16 %v1321
      %v1460 = vunpack.c.l.b16 %v1322
      %v1461 = vunpack.c.h.b16 %v1322
      %v1462 = vunpack.c.l.b16 %v1323
      %v1463 = vunpack.c.l.b16 %v1324
      %v1464 = vunpack.c.h.b16 %v1324
      %v1465 = vunpack.c.l.b16 %v1325
      %v1466 = vunpack.c.l.b16 %v1326
      %v1467 = vunpack.c.h.b16 %v1326
      %v1468 = vunpack.c.l.b16 %v1327
      %v1469 = vunpack.c.l.b16 %v1328
      %v1470 = vunpack.c.h.b16 %v1328
      %v1471 = vunpack.c.l.b16 %v1329
      %v1472 = vpack.c.b16 %v1451, %v1448
      %v1473 = vpack.c.b16 %v1452, %v1449
      %v1474 = vpack.c.b16 %v1453, %v1450
      %v1475 = vpack.c.b16 %v1457, %v1454
      %v1476 = vpack.c.b16 %v1458, %v1455
      %v1477 = vpack.c.b16 %v1459, %v1456
      %v1478 = vpack.c.b16 %v1463, %v1460
      %v1479 = vpack.c.b16 %v1464, %v1461
      %v1480 = vpack.c.b16 %v1465, %v1462
      %v1481 = vpack.c.b16 %v1469, %v1466
      %v1482 = vpack.c.b16 %v1470, %v1467
      %v1483 = vpack.c.b16 %v1471, %v1468
      %vm1492 = vcmask 261120
      %v1494 = vsel %vm1492, %v1474, 0
      %v1497 = vsel %vm1492, %v1477, 0
      %v1500 = vsel %vm1492, %v1480, 0
      %v1503 = vsel %vm1492, %v1483, 0
      %1505 = vmatprep.subr.bf16.mxu0 %v1331
      %1506 = vmatpush1.bf16.msra.mxu0 %v1330
      %1507 = vmatprep.subr.bf16.mxu0 %v1334
      %1508 = vmatpush1.bf16.msra.mxu0 %v1333
      %1509 = vmatprep.subr.bf16.mxu0 %v1337
      %1510 = vmatpush1.bf16.msra.mxu0 %v1336
      %1511 = vmatprep.subr.bf16.mxu0 %v1340
      %1512 = vmatpush1.bf16.msra.mxu0 %v1339
      %1513 = vmatprep.subr.bf16.mxu0 %v1343
      %1514 = vmatpush1.bf16.msra.mxu0 %v1342
      %1515 = vmatprep.subr.bf16.mxu0 %v1346
      %1516 = vmatpush1.bf16.msra.mxu0 %v1345
      %1517 = vmatprep.subr.bf16.mxu0 %v1349
      %1518 = vmatpush1.bf16.msra.mxu0 %v1348
      %1519 = vmatprep.subr.bf16.mxu0 %v1352
      %1520 = vmatpush1.bf16.msra.mxu0 %v1351
      %1521 = vmatprep.subr.bf16.mxu0 %v1355
      %1522 = vmatpush1.bf16.msra.mxu0 %v1354
      %1523 = vmatprep.subr.bf16.mxu0 %v1358
      %1524 = vmatpush1.bf16.msra.mxu0 %v1357
      %1525 = vmatprep.subr.bf16.mxu0 %v1361
      %1526 = vmatpush1.bf16.msra.mxu0 %v1360
      %1527 = vmatprep.subr.bf16.mxu0 %v1364
      %1528 = vmatpush1.bf16.msra.mxu0 %v1363
      %1529 = vmatprep.subr.bf16.mxu0 %v1367
      %1530 = vmatpush1.bf16.msra.mxu0 %v1366
      %1531 = vmatprep.subr.bf16.mxu0 %v1370
      %1532 = vmatpush1.bf16.msra.mxu0 %v1369
      %1533 = vmatprep.subr.bf16.mxu0 %v1373
      %1534 = vmatpush1.bf16.msra.mxu0 %v1372
      %1535 = vmatprep.subr.bf16.mxu0 %v1376
      %1536 = vmatpush1.bf16.msra.mxu0 %v1375
      %1537 = vmatprep.mubr.bf16.mxu0 %v1473
      %1538 = vmatmul.mubr.bf16.gmra.mrb[0].mxu0 %v1472
      %v1539 = vpop.f32.mrb[0].mxu0
      %v1540 = vadd.f32 %v1395, %v1539
      %v1541 = vpop.f32.mrb[0].mxu0
      %v1542 = vadd.f32 %v1395, %v1541
      %v1543 = vpop.f32.mrb[0].mxu0
      %v1544 = vadd.f32 %v1400, %v1543
      %v1545 = vpop.f32.mrb[0].mxu0
      %v1546 = vadd.f32 %v1400, %v1545
      %1547 = vmatprep.mubr.bf16.mxu0 %v1476
      %1548 = vmatmul.mubr.bf16.gmra.mrb[0].mxu0 %v1475
      %v1549 = vpop.f32.mrb[0].mxu0
      %v1550 = vadd.f32 %v1405, %v1549
      %v1551 = vpop.f32.mrb[0].mxu0
      %v1552 = vadd.f32 %v1405, %v1551
      %v1553 = vpop.f32.mrb[0].mxu0
      %v1554 = vadd.f32 %v1410, %v1553
      %v1555 = vpop.f32.mrb[0].mxu0
      %v1556 = vadd.f32 %v1410, %v1555
      %1557 = vmatprep.mubr.bf16.mxu0 %v1479
      %1558 = vmatmul.mubr.bf16.gmra.mrb[0].mxu0 %v1478
      %v1559 = vpop.f32.mrb[0].mxu0
      %v1560 = vadd.f32 %v1415, %v1559
      %v1561 = vpop.f32.mrb[0].mxu0
      %v1562 = vadd.f32 %v1415, %v1561
      %v1563 = vpop.f32.mrb[0].mxu0
      %v1564 = vadd.f32 %v1420, %v1563
      %v1565 = vpop.f32.mrb[0].mxu0
      %v1566 = vadd.f32 %v1420, %v1565
      %1567 = vmatprep.mubr.bf16.mxu0 %v1482
      %1568 = vmatmul.mubr.bf16.gmra.mrb[0].mxu0 %v1481
      %v1569 = vpop.f32.mrb[0].mxu0
      %v1570 = vadd.f32 %v1425, %v1569
      %v1571 = vpop.f32.mrb[0].mxu0
      %v1572 = vadd.f32 %v1425, %v1571
      %v1573 = vpop.f32.mrb[0].mxu0
      %v1574 = vadd.f32 %v1430, %v1573
      %v1575 = vpop.f32.mrb[0].mxu0
      %v1576 = vadd.f32 %v1430, %v1575
      %1577 = vdwg.mxu0
      %1578 = vmatprep.subr.bf16.mxu0 %v1379
      %1579 = vmatpush1.bf16.msra.mxu0 %v1378
      %1580 = vmatprep.subr.bf16.mxu0 %v1382
      %1581 = vmatpush1.bf16.msra.mxu0 %v1381
      %1582 = vmatprep.subr.bf16.mxu0 0
      %1583 = vmatpush1.bf16.msra.mxu0 0
      %1584 = vmatprep.subr.bf16.mxu0 0
      %1585 = vmatpush1.bf16.msra.mxu0 0
      %1586 = vmatprep.subr.bf16.mxu0 0
      %1587 = vmatpush1.bf16.msra.mxu0 0
      %1588 = vmatprep.subr.bf16.mxu0 0
      %1589 = vmatpush1.bf16.msra.mxu0 0
      %1590 = vmatprep.subr.bf16.mxu0 0
      %1591 = vmatpush1.bf16.msra.mxu0 0
      %1592 = vmatprep.subr.bf16.mxu0 0
      %1593 = vmatpush1.bf16.msra.mxu0 0
      %1594 = vmatprep.subr.bf16.mxu0 0
      %1595 = vmatpush1.bf16.msra.mxu0 0
      %1596 = vmatprep.subr.bf16.mxu0 0
      %1597 = vmatpush1.bf16.msra.mxu0 0
      %1598 = vmatprep.subr.bf16.mxu0 0
      %1599 = vmatpush1.bf16.msra.mxu0 0
      %1600 = vmatprep.subr.bf16.mxu0 0
      %1601 = vmatpush1.bf16.msra.mxu0 0
      %1602 = vmatprep.subr.bf16.mxu0 0
      %1603 = vmatpush1.bf16.msra.mxu0 0
      %1604 = vmatprep.subr.bf16.mxu0 0
      %1605 = vmatpush1.bf16.msra.mxu0 0
      %1606 = vmatprep.subr.bf16.mxu0 0
      %1607 = vmatpush1.bf16.msra.mxu0 0
      %1608 = vmatprep.subr.bf16.mxu0 0
      %1609 = vmatpush1.bf16.msra.mxu0 0
      %1610 = vmatprep.mubr.bf16.mxu0 0
      %1611 = vmatmul.mubr.bf16.gmra.mrb[0].mxu0 %v1494
      %v1612 = vpop.f32.mrb[0].mxu0
      %v1613 = vadd.f32 %v1540, %v1612
      %v1614 = vpop.f32.mrb[0].mxu0
      %v1615 = vadd.f32 %v1542, %v1614
      %v1616 = vpop.f32.mrb[0].mxu0
      %v1617 = vadd.f32 %v1544, %v1616
      %v1618 = vpop.f32.mrb[0].mxu0
      %v1619 = vadd.f32 %v1546, %v1618
      %1620 = vmatprep.mubr.bf16.mxu0 0
      %1621 = vmatmul.mubr.bf16.gmra.mrb[0].mxu0 %v1497
      %v1622 = vpop.f32.mrb[0].mxu0
      %v1623 = vadd.f32 %v1550, %v1622
      %v1624 = vpop.f32.mrb[0].mxu0
      %v1625 = vadd.f32 %v1552, %v1624
      %v1626 = vpop.f32.mrb[0].mxu0
      %v1627 = vadd.f32 %v1554, %v1626
      %v1628 = vpop.f32.mrb[0].mxu0
      %v1629 = vadd.f32 %v1556, %v1628
      %1630 = vmatprep.mubr.bf16.mxu0 0
      %1631 = vmatmul.mubr.bf16.gmra.mrb[0].mxu0 %v1500
      %v1632 = vpop.f32.mrb[0].mxu0
      %v1633 = vadd.f32 %v1560, %v1632
      %v1634 = vpop.f32.mrb[0].mxu0
      %v1635 = vadd.f32 %v1562, %v1634
      %v1636 = vpop.f32.mrb[0].mxu0
      %v1637 = vadd.f32 %v1564, %v1636
      %v1638 = vpop.f32.mrb[0].mxu0
      %v1639 = vadd.f32 %v1566, %v1638
      %1640 = vmatprep.mubr.bf16.mxu0 0
      %1641 = vmatmul.mubr.bf16.gmra.mrb[0].mxu0 %v1503
      %v1642 = vpop.f32.mrb[0].mxu0
      %v1643 = vadd.f32 %v1570, %v1642
      %v1644 = vpop.f32.mrb[0].mxu0
      %v1645 = vadd.f32 %v1572, %v1644
      %v1646 = vpop.f32.mrb[0].mxu0
      %v1647 = vadd.f32 %v1574, %v1646
      %v1648 = vpop.f32.mrb[0].mxu0
      %v1649 = vadd.f32 %v1576, %v1648
      %1650 = vdwg.mxu0
      %1651 = vmatprep.subr.bf16.mxu0 0
      %1652 = vmatpush1.bf16.msra.mxu0 %v1332
      %1653 = vmatprep.subr.bf16.mxu0 0
      %1654 = vmatpush1.bf16.msra.mxu0 %v1335
      %1655 = vmatprep.subr.bf16.mxu0 0
      %1656 = vmatpush1.bf16.msra.mxu0 %v1338
      %1657 = vmatprep.subr.bf16.mxu0 0
      %1658 = vmatpush1.bf16.msra.mxu0 %v1341
      %1659 = vmatprep.subr.bf16.mxu0 0
      %1660 = vmatpush1.bf16.msra.mxu0 %v1344
      %1661 = vmatprep.subr.bf16.mxu0 0
      %1662 = vmatpush1.bf16.msra.mxu0 %v1347
      %1663 = vmatprep.subr.bf16.mxu0 0
      %1664 = vmatpush1.bf16.msra.mxu0 %v1350
      %1665 = vmatprep.subr.bf16.mxu0 0
      %1666 = vmatpush1.bf16.msra.mxu0 %v1353
      %1667 = vmatprep.subr.bf16.mxu0 0
      %1668 = vmatpush1.bf16.msra.mxu0 %v1356
      %1669 = vmatprep.subr.bf16.mxu0 0
      %1670 = vmatpush1.bf16.msra.mxu0 %v1359
      %1671 = vmatprep.subr.bf16.mxu0 0
      %1672 = vmatpush1.bf16.msra.mxu0 %v1362
      %1673 = vmatprep.subr.bf16.mxu0 0
      %1674 = vmatpush1.bf16.msra.mxu0 %v1365
      %1675 = vmatprep.subr.bf16.mxu0 0
      %1676 = vmatpush1.bf16.msra.mxu0 %v1368
      %1677 = vmatprep.subr.bf16.mxu0 0
      %1678 = vmatpush1.bf16.msra.mxu0 %v1371
      %1679 = vmatprep.subr.bf16.mxu0 0
      %1680 = vmatpush1.bf16.msra.mxu0 %v1374
      %1681 = vmatprep.subr.bf16.mxu0 0
      %1682 = vmatpush1.bf16.msra.mxu0 %v1377
      %1683 = vmatprep.mubr.bf16.mxu0 %v1473
      %1684 = vmatmul.mubr.bf16.gmra.mrb[0].mxu0 %v1472
      %v1685 = vpop.f32.mrb[0].mxu0
      %v1686 = vadd.f32 %v1395, %v1685
      %v1687 = vpop.f32.mrb[0].mxu0
      %v1688 = vpop.f32.mrb[0].mxu0
      %v1689 = vadd.f32 %v1400, %v1688
      %v1690 = vpop.f32.mrb[0].mxu0
      %1691 = vmatprep.mubr.bf16.mxu0 %v1476
      %1692 = vmatmul.mubr.bf16.gmra.mrb[0].mxu0 %v1475
      %v1693 = vpop.f32.mrb[0].mxu0
      %v1694 = vadd.f32 %v1405, %v1693
      %v1695 = vpop.f32.mrb[0].mxu0
      %v1696 = vpop.f32.mrb[0].mxu0
      %v1697 = vadd.f32 %v1410, %v1696
      %v1698 = vpop.f32.mrb[0].mxu0
      %1699 = vmatprep.mubr.bf16.mxu0 %v1479
      %1700 = vmatmul.mubr.bf16.gmra.mrb[0].mxu0 %v1478
      %v1701 = vpop.f32.mrb[0].mxu0
      %v1702 = vadd.f32 %v1415, %v1701
      %v1703 = vpop.f32.mrb[0].mxu0
      %v1704 = vpop.f32.mrb[0].mxu0
      %v1705 = vadd.f32 %v1420, %v1704
      %v1706 = vpop.f32.mrb[0].mxu0
      %1707 = vmatprep.mubr.bf16.mxu0 %v1482
      %1708 = vmatmul.mubr.bf16.gmra.mrb[0].mxu0 %v1481
      %v1709 = vpop.f32.mrb[0].mxu0
      %v1710 = vadd.f32 %v1425, %v1709
      %v1711 = vpop.f32.mrb[0].mxu0
      %v1712 = vpop.f32.mrb[0].mxu0
      %v1713 = vadd.f32 %v1430, %v1712
      %v1714 = vpop.f32.mrb[0].mxu0
      %1715 = vdwg.mxu0
      %1716 = vmatprep.subr.bf16.mxu0 0
      %1717 = vmatpush1.bf16.msra.mxu0 %v1380
      %1718 = vmatprep.subr.bf16.mxu0 0
      %1719 = vmatpush1.bf16.msra.mxu0 %v1383
      %1720 = vmatprep.subr.bf16.mxu0 0
      %1721 = vmatpush1.bf16.msra.mxu0 0
      %1722 = vmatprep.subr.bf16.mxu0 0
      %1723 = vmatpush1.bf16.msra.mxu0 0
      %1724 = vmatprep.subr.bf16.mxu0 0
      %1725 = vmatpush1.bf16.msra.mxu0 0
      %1726 = vmatprep.subr.bf16.mxu0 0
      %1727 = vmatpush1.bf16.msra.mxu0 0
      %1728 = vmatprep.subr.bf16.mxu0 0
      %1729 = vmatpush1.bf16.msra.mxu0 0
      %1730 = vmatprep.subr.bf16.mxu0 0
      %1731 = vmatpush1.bf16.msra.mxu0 0
      %1732 = vmatprep.subr.bf16.mxu0 0
      %1733 = vmatpush1.bf16.msra.mxu0 0
      %1734 = vmatprep.subr.bf16.mxu0 0
      %1735 = vmatpush1.bf16.msra.mxu0 0
      %1736 = vmatprep.subr.bf16.mxu0 0
      %1737 = vmatpush1.bf16.msra.mxu0 0
      %1738 = vmatprep.subr.bf16.mxu0 0
      %1739 = vmatpush1.bf16.msra.mxu0 0
      %1740 = vmatprep.subr.bf16.mxu0 0
      %1741 = vmatpush1.bf16.msra.mxu0 0
      %1742 = vmatprep.subr.bf16.mxu0 0
      %1743 = vmatpush1.bf16.msra.mxu0 0
      %1744 = vmatprep.subr.bf16.mxu0 0
      %1745 = vmatpush1.bf16.msra.mxu0 0
      %1746 = vmatprep.subr.bf16.mxu0 0
      %1747 = vmatpush1.bf16.msra.mxu0 0
      %1748 = vmatprep.mubr.bf16.mxu0 0
      %1749 = vmatmul.mubr.bf16.gmra.mrb[0].mxu0 %v1494
      %v1750 = vpop.f32.mrb[0].mxu0
      %v1751 = vadd.f32 %v1686, %v1750
      %v1752 = vpop.f32.mrb[0].mxu0
      %v1753 = vpop.f32.mrb[0].mxu0
      %v1754 = vadd.f32 %v1689, %v1753
      %v1755 = vpop.f32.mrb[0].mxu0
      %1756 = vmatprep.mubr.bf16.mxu0 0
      %1757 = vmatmul.mubr.bf16.gmra.mrb[0].mxu0 %v1497
      %v1758 = vpop.f32.mrb[0].mxu0
      %v1759 = vadd.f32 %v1694, %v1758
      %v1760 = vpop.f32.mrb[0].mxu0
      %v1761 = vpop.f32.mrb[0].mxu0
      %v1762 = vadd.f32 %v1697, %v1761
      %v1763 = vpop.f32.mrb[0].mxu0
      %1764 = vmatprep.mubr.bf16.mxu0 0
      %1765 = vmatmul.mubr.bf16.gmra.mrb[0].mxu0 %v1500
      %v1766 = vpop.f32.mrb[0].mxu0
      %v1767 = vadd.f32 %v1702, %v1766
      %v1768 = vpop.f32.mrb[0].mxu0
      %v1769 = vpop.f32.mrb[0].mxu0
      %v1770 = vadd.f32 %v1705, %v1769
      %v1771 = vpop.f32.mrb[0].mxu0
      %1772 = vmatprep.mubr.bf16.mxu0 0
      %1773 = vmatmul.mubr.bf16.gmra.mrb[0].mxu0 %v1503
      %v1774 = vpop.f32.mrb[0].mxu0
      %v1775 = vadd.f32 %v1710, %v1774
      %v1776 = vpop.f32.mrb[0].mxu0
      %v1777 = vpop.f32.mrb[0].mxu0
      %v1778 = vadd.f32 %v1713, %v1777
      %v1779 = vpop.f32.mrb[0].mxu0
      %1780 = vdwg.mxu0
      %v1781 = vmax.f32 %v1613, 0.0
      %v1782 = vmax.f32 %v1615, 0.0
      %v1783 = vmax.f32 %v1751, 0.0
      %v1784 = vmax.f32 %v1617, 0.0
      %v1785 = vmax.f32 %v1619, 0.0
      %v1786 = vmax.f32 %v1754, 0.0
      %v1787 = vmax.f32 %v1623, 0.0
      %v1788 = vmax.f32 %v1625, 0.0
      %v1789 = vmax.f32 %v1759, 0.0
      %v1790 = vmax.f32 %v1627, 0.0
      %v1791 = vmax.f32 %v1629, 0.0
      %v1792 = vmax.f32 %v1762, 0.0
      %v1793 = vmax.f32 %v1633, 0.0
      %v1794 = vmax.f32 %v1635, 0.0
      %v1795 = vmax.f32 %v1767, 0.0
      %v1796 = vmax.f32 %v1637, 0.0
      %v1797 = vmax.f32 %v1639, 0.0
      %v1798 = vmax.f32 %v1770, 0.0
      %v1799 = vmax.f32 %v1643, 0.0
      %v1800 = vmax.f32 %v1645, 0.0
      %v1801 = vmax.f32 %v1775, 0.0
      %v1802 = vmax.f32 %v1647, 0.0
      %v1803 = vmax.f32 %v1649, 0.0
      %v1804 = vmax.f32 %v1778, 0.0
      %v1805 = vmul.f32 %v1781, %v863
      %v1806 = vmul.f32 %v1782, %v864
      %v1807 = vmul.f32 %v1783, %v865
      %v1808 = vmul.f32 %v1784, %v863
      %v1809 = vmul.f32 %v1785, %v864
      %v1810 = vmul.f32 %v1786, %v865
      %v1811 = vmul.f32 %v1787, %v863
      %v1812 = vmul.f32 %v1788, %v864
      %v1813 = vmul.f32 %v1789, %v865
      %v1814 = vmul.f32 %v1790, %v863
      %v1815 = vmul.f32 %v1791, %v864
      %v1816 = vmul.f32 %v1792, %v865
      %v1817 = vmul.f32 %v1793, %v863
      %v1818 = vmul.f32 %v1794, %v864
      %v1819 = vmul.f32 %v1795, %v865
      %v1820 = vmul.f32 %v1796, %v863
      %v1821 = vmul.f32 %v1797, %v864
      %v1822 = vmul.f32 %v1798, %v865
      %v1823 = vmul.f32 %v1799, %v863
      %v1824 = vmul.f32 %v1800, %v864
      %v1825 = vmul.f32 %v1801, %v865
      %v1826 = vmul.f32 %v1802, %v863
      %v1827 = vmul.f32 %v1803, %v864
      %v1828 = vmul.f32 %v1804, %v865
      %v1829 = vpack.c.bf16 %v1808, %v1805
      %v1830 = vpack.c.bf16 %v1809, %v1806
      %v1831 = vpack.c.bf16 %v1810, %v1807
      %v1832 = vpack.c.bf16 %v1814, %v1811
      %v1833 = vpack.c.bf16 %v1815, %v1812
      %v1834 = vpack.c.bf16 %v1816, %v1813
      %v1835 = vpack.c.bf16 %v1820, %v1817
      %v1836 = vpack.c.bf16 %v1821, %v1818
      %v1837 = vpack.c.bf16 %v1822, %v1819
      %v1838 = vpack.c.bf16 %v1826, %v1823
      %v1839 = vpack.c.bf16 %v1827, %v1824
      %v1840 = vpack.c.bf16 %v1828, %v1825
      %v1853 = vunpack.c.l.b16 %v1829
      %v1854 = vunpack.c.l.b16 %v1830
      %v1855 = vunpack.c.l.b16 %v1831
      %v1856 = vunpack.c.h.b16 %v1829
      %v1857 = vunpack.c.h.b16 %v1830
      %v1858 = vunpack.c.h.b16 %v1831
      %v1859 = vunpack.c.l.b16 %v1832
      %v1860 = vunpack.c.l.b16 %v1833
      %v1861 = vunpack.c.l.b16 %v1834
      %v1862 = vunpack.c.h.b16 %v1832
      %v1863 = vunpack.c.h.b16 %v1833
      %v1864 = vunpack.c.h.b16 %v1834
      %v1865 = vunpack.c.l.b16 %v1835
      %v1866 = vunpack.c.l.b16 %v1836
      %v1867 = vunpack.c.l.b16 %v1837
      %v1868 = vunpack.c.h.b16 %v1835
      %v1869 = vunpack.c.h.b16 %v1836
      %v1870 = vunpack.c.h.b16 %v1837
      %v1871 = vunpack.c.l.b16 %v1838
      %v1872 = vunpack.c.l.b16 %v1839
      %v1873 = vunpack.c.l.b16 %v1840
      %v1874 = vunpack.c.h.b16 %v1838
      %v1875 = vunpack.c.h.b16 %v1839
      %v1876 = vunpack.c.h.b16 %v1840
      %v1877 = vpack.c.b16 %v1854, %v1853
      %v1878 = vpack.c.b16 %v1855, %v1855
      %v1879 = vpack.c.b16 %v1857, %v1856
      %v1880 = vpack.c.b16 %v1858, %v1858
      %v1881 = vpack.c.b16 %v1860, %v1859
      %v1882 = vpack.c.b16 %v1861, %v1861
      %v1883 = vpack.c.b16 %v1863, %v1862
      %v1884 = vpack.c.b16 %v1864, %v1864
      %v1885 = vpack.c.b16 %v1866, %v1865
      %v1886 = vpack.c.b16 %v1867, %v1867
      %v1887 = vpack.c.b16 %v1869, %v1868
      %v1888 = vpack.c.b16 %v1870, %v1870
      %v1889 = vpack.c.b16 %v1872, %v1871
      %v1890 = vpack.c.b16 %v1873, %v1873
      %v1891 = vpack.c.b16 %v1875, %v1874
      %v1892 = vpack.c.b16 %v1876, %v1876
      %1909 = vst [vmem:[%s340] sm:$0xff] %v1877
      %1910 = vst [vmem:[%s340 + $0x8] sm:$0xf] %v1878
      %1911 = vst [vmem:[%s340 + $0xc] sm:$0xff] %v1879
      %1912 = vst [vmem:[%s340 + $0x14] sm:$0xf] %v1880
      %1913 = vst [vmem:[%s340 + $0x18] sm:$0xff] %v1881
      %1914 = vst [vmem:[%s340 + $0x20] sm:$0xf] %v1882
      %1915 = vst [vmem:[%s340 + $0x24] sm:$0xff] %v1883
      %1916 = vst [vmem:[%s340 + $0x2c] sm:$0xf] %v1884
      %1917 = vst [vmem:[%s340 + $0x30] sm:$0xff] %v1885
      %1918 = vst [vmem:[%s340 + $0x38] sm:$0xf] %v1886
      %1919 = vst [vmem:[%s340 + $0x3c] sm:$0xff] %v1887
      %1920 = vst [vmem:[%s340 + $0x44] sm:$0xf] %v1888
      %1921 = vst [vmem:[%s340 + $0x48] sm:$0xff] %v1889
      %1922 = vst [vmem:[%s340 + $0x50] sm:$0xf] %v1890
      %1923 = vst [vmem:[%s340 + $0x54] sm:$0xff] %v1891
      %1924 = vst [vmem:[%s340 + $0x5c] sm:$0xf] %v1892
      %v1925 = vadd.f32 %v1805, %v1806
      %v1926 = vadd.f32 %v1925, %v1807
      %1927 = vadd.xlane.f32.xlu0 %v1926
      %v1928 = vpop.xlane.xlu0 %1927
      %v1929 = vadd.f32 %v1808, %v1809
      %v1930 = vadd.f32 %v1929, %v1810
      %1931 = vadd.xlane.f32.xlu0 %v1930
      %v1932 = vpop.xlane.xlu0 %1931
      %v1933 = vadd.f32 %v1811, %v1812
      %v1934 = vadd.f32 %v1933, %v1813
      %1935 = vadd.xlane.f32.xlu0 %v1934
      %v1936 = vpop.xlane.xlu0 %1935
      %v1937 = vadd.f32 %v1814, %v1815
      %v1938 = vadd.f32 %v1937, %v1816
      %1939 = vadd.xlane.f32.xlu0 %v1938
      %v1940 = vpop.xlane.xlu0 %1939
      %v1941 = vadd.f32 %v1817, %v1818
      %v1942 = vadd.f32 %v1941, %v1819
      %1943 = vadd.xlane.f32.xlu0 %v1942
      %v1944 = vpop.xlane.xlu0 %1943
      %v1945 = vadd.f32 %v1820, %v1821
      %v1946 = vadd.f32 %v1945, %v1822
      %1947 = vadd.xlane.f32.xlu0 %v1946
      %v1948 = vpop.xlane.xlu0 %1947
      %v1949 = vadd.f32 %v1823, %v1824
      %v1950 = vadd.f32 %v1949, %v1825
      %1951 = vadd.xlane.f32.xlu0 %v1950
      %v1952 = vpop.xlane.xlu0 %1951
      %v1953 = vadd.f32 %v1826, %v1827
      %v1954 = vadd.f32 %v1953, %v1828
      %1955 = vadd.xlane.f32.xlu0 %v1954
      %v1956 = vpop.xlane.xlu0 %1955
      %v1957 = vmul.f32 %v1928, 0.00390625
      %v1958 = vmul.f32 %v1932, 0.00390625
      %v1959 = vmul.f32 %v1936, 0.00390625
      %v1960 = vmul.f32 %v1940, 0.00390625
      %v1961 = vmul.f32 %v1944, 0.00390625
      %v1962 = vmul.f32 %v1948, 0.00390625
      %v1963 = vmul.f32 %v1952, 0.00390625
      %v1964 = vmul.f32 %v1956, 0.00390625
      %v1965 = vld [vmem:[%s6] sm:$0xf]
      %v1966 = vld [vmem:[%s6 + $0x4] sm:$0xf]
      %v1967 = vld [vmem:[%s6 + $0x8] sm:$0xf]
      %v1968 = vld [vmem:[%s6 + $0xc] sm:$0xf]
      %v1969 = vld [vmem:[%s6 + $0x10] sm:$0xf]
      %v1970 = vld [vmem:[%s6 + $0x14] sm:$0xf]
      %v1971 = vld [vmem:[%s6 + $0x18] sm:$0xf]
      %v1972 = vld [vmem:[%s6 + $0x1c] sm:$0xf]
      %v1973 = vpack.c.bf16 %v1958, %v1957
      %v1974 = vpack.c.bf16 %v1960, %v1959
      %v1975 = vpack.c.bf16 %v1962, %v1961
      %v1976 = vpack.c.bf16 %v1964, %v1963
      %v1977 = vld [vmem:[%s7] sm:$0xff]
      %v1978 = vld [vmem:[%s7 + $0x8] sm:$0xff]
      %v1979 = vld [vmem:[%s7 + $0x10] sm:$0xff]
      %v1980 = vld [vmem:[%s7 + $0x18] sm:$0xff]
      %v1981 = vld [vmem:[%s7 + $0x20] sm:$0xff]
      %v1982 = vld [vmem:[%s7 + $0x28] sm:$0xff]
      %v1983 = vld [vmem:[%s7 + $0x30] sm:$0xff]
      %v1984 = vld [vmem:[%s7 + $0x38] sm:$0xff]
      %v1993 = vunpack.c.l.b16 %v1965
      %v1994 = vunpack.c.l.b16 %v1966
      %v1995 = vunpack.c.l.b16 %v1967
      %v1996 = vunpack.c.l.b16 %v1968
      %v1997 = vunpack.c.l.b16 %v1969
      %v1998 = vunpack.c.l.b16 %v1970
      %v1999 = vunpack.c.l.b16 %v1971
      %v2000 = vunpack.c.l.b16 %v1972
      %v2001 = vpack.c.b16 %v1994, %v1993
      %v2002 = vpack.c.b16 %v1996, %v1995
      %v2003 = vpack.c.b16 %v1998, %v1997
      %v2004 = vpack.c.b16 %v2000, %v1999
      %vm2005 = vcmask 523264
      %v2007 = vsel %vm2005, %v2001, 0
      %v2010 = vsel %vm2005, %v2002, 0
      %v2013 = vsel %vm2005, %v2003, 0
      %v2016 = vsel %vm2005, %v2004, 0
      %2018 = vmatprep.subr.bf16.mxu0 0
      %2019 = vmatpush1.bf16.msra.mxu0 %v1973
      %2020 = vmatprep.subr.bf16.mxu0 0
      %2021 = vmatpush1.bf16.msra.mxu0 %v1974
      %2022 = vmatprep.subr.bf16.mxu0 0
      %2023 = vmatpush1.bf16.msra.mxu0 %v1975
      %2024 = vmatprep.subr.bf16.mxu0 0
      %2025 = vmatpush1.bf16.msra.mxu0 %v1976
      %2026 = vmatprep.subr.bf16.mxu0 0
      %2027 = vmatpush1.bf16.msra.mxu0 0
      %2028 = vmatprep.subr.bf16.mxu0 0
      %2029 = vmatpush1.bf16.msra.mxu0 0
      %2030 = vmatprep.subr.bf16.mxu0 0
      %2031 = vmatpush1.bf16.msra.mxu0 0
      %2032 = vmatprep.subr.bf16.mxu0 0
      %2033 = vmatpush1.bf16.msra.mxu0 0
      %2034 = vmatprep.subr.bf16.mxu0 0
      %2035 = vmatpush1.bf16.msra.mxu0 0
      %2036 = vmatprep.subr.bf16.mxu0 0
      %2037 = vmatpush1.bf16.msra.mxu0 0
      %2038 = vmatprep.subr.bf16.mxu0 0
      %2039 = vmatpush1.bf16.msra.mxu0 0
      %2040 = vmatprep.subr.bf16.mxu0 0
      %2041 = vmatpush1.bf16.msra.mxu0 0
      %2042 = vmatprep.subr.bf16.mxu0 0
      %2043 = vmatpush1.bf16.msra.mxu0 0
      %2044 = vmatprep.subr.bf16.mxu0 0
      %2045 = vmatpush1.bf16.msra.mxu0 0
      %2046 = vmatprep.subr.bf16.mxu0 0
      %2047 = vmatpush1.bf16.msra.mxu0 0
      %2048 = vmatprep.subr.bf16.mxu0 0
      %2049 = vmatpush1.bf16.msra.mxu0 0
      %2050 = vmatprep.mubr.bf16.mxu0 0
      %2051 = vmatmul.mubr.bf16.gmra.mrb[0].mxu0 %v2007
      %v2052 = vpop.f32.mrb[0].mxu0
      %v2053 = vadd.f32 %v1977, %v2052
      %v2054 = vpop.f32.mrb[0].mxu0
      %v2055 = vpop.f32.mrb[0].mxu0
      %v2056 = vadd.f32 %v1978, %v2055
      %v2057 = vpop.f32.mrb[0].mxu0
      %2058 = vmatprep.mubr.bf16.mxu0 0
      %2059 = vmatmul.mubr.bf16.gmra.mrb[0].mxu0 %v2010
      %v2060 = vpop.f32.mrb[0].mxu0
      %v2061 = vadd.f32 %v1979, %v2060
      %v2062 = vpop.f32.mrb[0].mxu0
      %v2063 = vpop.f32.mrb[0].mxu0
      %v2064 = vadd.f32 %v1980, %v2063
      %v2065 = vpop.f32.mrb[0].mxu0
      %2066 = vmatprep.mubr.bf16.mxu0 0
      %2067 = vmatmul.mubr.bf16.gmra.mrb[0].mxu0 %v2013
      %v2068 = vpop.f32.mrb[0].mxu0
      %v2069 = vadd.f32 %v1981, %v2068
      %v2070 = vpop.f32.mrb[0].mxu0
      %v2071 = vpop.f32.mrb[0].mxu0
      %v2072 = vadd.f32 %v1982, %v2071
      %v2073 = vpop.f32.mrb[0].mxu0
      %2074 = vmatprep.mubr.bf16.mxu0 0
      %2075 = vmatmul.mubr.bf16.gmra.mrb[0].mxu0 %v2016
      %v2076 = vpop.f32.mrb[0].mxu0
      %v2077 = vadd.f32 %v1983, %v2076
      %v2078 = vpop.f32.mrb[0].mxu0
      %v2079 = vpop.f32.mrb[0].mxu0
      %v2080 = vadd.f32 %v1984, %v2079
      %v2081 = vpop.f32.mrb[0].mxu0
      %2082 = vdwg.mxu0
      %vm2083 = vcmask 7168
      %2084 = vst.msk [vmem:[%s345] sm:$0xff] %vm2083, %v2053
      %2085 = vst.msk [vmem:[%s345 + $0x8] sm:$0xff] %vm2083, %v2056
      %2086 = vst.msk [vmem:[%s345 + $0x10] sm:$0xff] %vm2083, %v2061
      %2087 = vst.msk [vmem:[%s345 + $0x18] sm:$0xff] %vm2083, %v2064
      %2088 = vst.msk [vmem:[%s345 + $0x20] sm:$0xff] %vm2083, %v2069
      %2089 = vst.msk [vmem:[%s345 + $0x28] sm:$0xff] %vm2083, %v2072
      %2090 = vst.msk [vmem:[%s345 + $0x30] sm:$0xff] %vm2083, %v2077
      %2091 = vst.msk [vmem:[%s345 + $0x38] sm:$0xff] %vm2083, %v2080
      %p2092 = scmp.lt.s32.totalorder %s21, 1
      %s2093 = scalar_select %p2092, %s21, 1
      %s2094 = smul.addr %s2093, 24
      %s2095 = smul.addr %s2094, 4
      %s2096 = scalar_lea.vmem %s8, %s2095
      %p2097 = scmp.lt.s32.totalorder %s21, 1
      %s2098 = scalar_select %p2097, %s21, 1
      %s2099 = smul.addr %s2098, 8
      %s2100 = smul.addr %s2099, 8
      %s2101 = scalar_lea.vmem %s9, %s2100
      // Predicated region
      $region53: #{occupancy_network_forward.2} parent=51 // pred_check
        %p2102 = pneg %p212
      $region54: #{occupancy_network_forward.2} parent=51 // pred_check_branch
        %2104 = sbr.rel (%p2102) target = $region56
      $region55: #{occupancy_network_forward.2} parent=51 // pred_region
        _
      $region56: #{occupancy_network_forward.2} parent=51 // pred_fallthru
        _
      // Predicated region
      $region57: #{occupancy_network_forward.2} parent=51 // pred_check
        %p2105 = pneg %p238
      $region58: #{occupancy_network_forward.2} parent=51 // pred_check_branch
        %2107 = sbr.rel (%p2105) target = $region60
      $region59: #{occupancy_network_forward.2} parent=51 // pred_region
        _
      $region60: #{occupancy_network_forward.2} parent=51 // pred_fallthru
        _
    $region52: #{occupancy_network_forward.2} parent=5 // pred_fallthru
      _
    %p2108 = scmp.le.s32.totalorder 2, %s16
    // Predicated region
    $region61: #{occupancy_network_forward.2} parent=5 // pred_check
      %p2109 = pneg %p2108
    $region62: #{occupancy_network_forward.2} parent=5 // pred_check_branch
      %2111 = sbr.rel (%p2109) target = $region64
    $region63: #{occupancy_network_forward.2} parent=5 // pred_region
      %s2112 = ssub.s32 %s16, 2
      // Predicated region
      $region65: #{occupancy_network_forward.2} parent=63 // pred_check
        %p2113 = pneg %p218
      $region66: #{occupancy_network_forward.2} parent=63 // pred_check_branch
        %2115 = sbr.rel (%p2113) target = $region68
      $region67: #{occupancy_network_forward.2} parent=63 // pred_region
        %p2116 = scmp.lt.s32.totalorder %s22, 1
        %s2117 = scalar_select %p2116, %s22, 1
        %s2118 = smul.addr %s2117, 24
        %s2119 = smul.addr %s2118, 4
        %s2120 = scalar_lea.vmem %s8, %s2119
      $region68: #{occupancy_network_forward.2} parent=63 // pred_fallthru
        _
      // Predicated region
      $region69: #{occupancy_network_forward.2} parent=63 // pred_check
        %p2121 = pneg %p244
      $region70: #{occupancy_network_forward.2} parent=63 // pred_check_branch
        %2123 = sbr.rel (%p2121) target = $region72
      $region71: #{occupancy_network_forward.2} parent=63 // pred_region
        %p2124 = scmp.lt.s32.totalorder %s22, 1
        %s2125 = scalar_select %p2124, %s22, 1
        %s2126 = smul.addr %s2125, 8
        %s2127 = smul.addr %s2126, 8
        %s2128 = scalar_lea.vmem %s9, %s2127
      $region72: #{occupancy_network_forward.2} parent=63 // pred_fallthru
        _
    $region64: #{occupancy_network_forward.2} parent=5 // pred_fallthru
      _
  $region6: #{occupancy_network_forward.2} parent=0 // loop_footer
    %s20 = sadd.s32 1, %s16
  $region7: #{occupancy_network_forward.2} parent=0 // loop_footer_branch
    %15 = sbr.rel target = $region3
  $region8: #{occupancy_network_forward.2} parent=0 // loop_exit
    _

</llo_original>
